<compile_context>
chip_gen: v7x
topology: tpu7x:2x2x1
jax: 0.10.0
libtpu: 0.0.40
codegen_flags: <defaults>
</compile_context>

<pallas_src>
import functools

import jax
import jax.numpy as jnp
from jax.experimental import pallas as pl
from jax.experimental.pallas import tpu as pltpu


# --------------------------------------------------------------------------- helpers
def _round_up(x, m):
    return (x + m - 1) // m * m


# --------------------------------------------------------------------------- kernels
def conv_act_kernel(p_ref, w_ref, b_ref, o_ref, *, act, neg_slope=0.2):
    """One (TM, K) x (K, Cpad) full-reduction matmul tile with fused bias + activation.
    bf16 MXU inputs, f32 accumulation; weight block is resident across M tiles."""
    y = jnp.dot(p_ref[...], w_ref[...], preferred_element_type=jnp.float32)
    y = y + b_ref[...]                                   # (1, Cpad) broadcast
    if act == "leaky":
        y = jnp.where(y >= 0.0, y, neg_slope * y)
    elif act == "sigmoid":
        y = jax.nn.sigmoid(y)                            # EUP transcendentals
    o_ref[...] = y.astype(o_ref.dtype)


def conv_bn_lrelu_kernel(p_ref, w_ref, b_ref, g_ref, beta_ref, o_ref, *,
                         m_real, eps=1e-5, neg_slope=0.2):
    """Fused conv (full-K matmul) + training-mode BatchNorm2d + LeakyReLU for one
    Cout block of 128 lanes.  The whole M axis (N*OH*OW rows) is resident, so the
    batch statistics are computed in-kernel; the two-pass (subtract-mean) variance
    avoids the E[x^2] - mean^2 cancellation issue."""
    y = jnp.dot(p_ref[...], w_ref[...], preferred_element_type=jnp.float32)
    y = y + b_ref[...]

    m_pad = y.shape[0]
    need_mask = (m_pad != m_real)                        # static: mask padded rows
    if need_mask:
        mask = jax.lax.broadcasted_iota(jnp.int32, y.shape, 0) < m_real

    inv_m = 1.0 / m_real
    ym = jnp.where(mask, y, 0.0) if need_mask else y
    mean = jnp.sum(ym, axis=0, keepdims=True) * inv_m
    centered = y - mean
    cm = jnp.where(mask, centered, 0.0) if need_mask else centered
    var = jnp.sum(cm * cm, axis=0, keepdims=True) * inv_m

    scale = g_ref[...] * jax.lax.rsqrt(var + eps)
    z = centered * scale + beta_ref[...]
    z = jnp.where(z >= 0.0, z, neg_slope * z)
    o_ref[...] = z.astype(o_ref.dtype)


# --------------------------------------------------------------------- pallas wrappers
def conv_act(patches, w_pad, bias_pad, *, act, out_dtype=jnp.bfloat16):
    """patches (M, K) bf16 -> (M_pad, Cpad) out_dtype.  Grid over M tiles only;
    weight stays VMEM-resident (constant index_map)."""
    m_real, k_real = patches.shape
    k_pad, c_pad = w_pad.shape

    tm = min(256, _round_up(m_real, 8))
    m_pad = _round_up(m_real, tm)
    p = patches
    if m_pad != m_real or k_pad != k_real:
        p = jnp.pad(p, ((0, m_pad - m_real), (0, k_pad - k_real)))

    kernel = functools.partial(conv_act_kernel, act=act)
    return pl.pallas_call(
        kernel,
        out_shape=jax.ShapeDtypeStruct((m_pad, c_pad), out_dtype),
        grid_spec=pltpu.PrefetchScalarGridSpec(
            num_scalar_prefetch=0,
            grid=(m_pad // tm,),
            in_specs=[
                pl.BlockSpec((tm, k_pad), lambda i: (i, 0)),
                pl.BlockSpec((k_pad, c_pad), lambda i: (0, 0)),   # resident weight
                pl.BlockSpec((1, c_pad), lambda i: (0, 0)),       # resident bias
            ],
            out_specs=pl.BlockSpec((tm, c_pad), lambda i: (i, 0)),
        ),
        compiler_params=pltpu.CompilerParams(
            dimension_semantics=("parallel",)),
    )(p, w_pad, bias_pad)


def conv_bn_lrelu(patches, w_pad, bias_pad, gamma_pad, beta_pad,
                  out_dtype=jnp.bfloat16):
    """Fused conv + BN + LeakyReLU.  Whole M resident; grid over Cout blocks of 128
    (parallel -> both v7x TensorCores busy on the Cpad=256 layer)."""
    m_real, k_real = patches.shape
    k_pad, c_pad = w_pad.shape

    m_pad = _round_up(m_real, 8)
    p = patches
    if m_pad != m_real or k_pad != k_real:
        p = jnp.pad(p, ((0, m_pad - m_real), (0, k_pad - k_real)))

    tn = min(c_pad, 128)
    kernel = functools.partial(conv_bn_lrelu_kernel, m_real=m_real)
    return pl.pallas_call(
        kernel,
        out_shape=jax.ShapeDtypeStruct((m_pad, c_pad), out_dtype),
        grid_spec=pltpu.PrefetchScalarGridSpec(
            num_scalar_prefetch=0,
            grid=(c_pad // tn,),
            in_specs=[
                pl.BlockSpec((m_pad, k_pad), lambda j: (0, 0)),   # resident patches
                pl.BlockSpec((k_pad, tn), lambda j: (0, j)),
                pl.BlockSpec((1, tn), lambda j: (0, j)),
                pl.BlockSpec((1, tn), lambda j: (0, j)),
                pl.BlockSpec((1, tn), lambda j: (0, j)),
            ],
            out_specs=pl.BlockSpec((m_pad, tn), lambda j: (0, j)),
        ),
        compiler_params=pltpu.CompilerParams(
            dimension_semantics=("parallel",)),
    )(p, w_pad, bias_pad, gamma_pad, beta_pad)


# --------------------------------------------------------------------------------- glue
def im2col_nhwc(x, kh, kw, stride, pad):
    """x: (N, H, W, C) -> patches (N*OH*OW, KH*KW*C), feature order (KH, KW, C)."""
    n, h, w, c = x.shape
    xp = jnp.pad(x, ((0, 0), (pad, pad), (pad, pad), (0, 0)))
    hp, wp = h + 2 * pad, w + 2 * pad
    oh = (hp - kh) // stride + 1
    ow = (wp - kw) // stride + 1
    cols = []
    for i in range(kh):
        for j in range(kw):
            cols.append(xp[:, i:i + stride * (oh - 1) + 1:stride,
                           j:j + stride * (ow - 1) + 1:stride, :])  # (N, OH, OW, C)
    stacked = jnp.stack(cols, axis=3)                               # (N, OH, OW, KH*KW, C)
    return stacked.reshape(n * oh * ow, kh * kw * c), oh, ow


def prep_conv(w, b):
    """PyTorch (Cout, Cin, KH, KW) -> padded bf16 (K_pad, Cpad) + f32 bias (1, Cpad)."""
    cout, cin, kh, kw = w.shape
    k = cin * kh * kw
    k_pad = _round_up(k, 128)
    c_pad = _round_up(cout, 128)
    w2d = jnp.transpose(w, (2, 3, 1, 0)).reshape(k, cout)           # (KH,KW,Cin) x Cout
    w2d = jnp.pad(w2d, ((0, k_pad - k), (0, c_pad - cout))).astype(jnp.bfloat16)
    bp = jnp.pad(b, (0, c_pad - cout)).reshape(1, c_pad).astype(jnp.float32)
    return w2d, bp


def prep_conv_final(w, b):
    """Final Conv(256 -> 1): plain (K, 1) f32 matvec weight, no padding."""
    cout, cin, kh, kw = w.shape
    w2d = jnp.transpose(w, (2, 3, 1, 0)).reshape(cin * kh * kw, cout)
    return w2d.astype(jnp.float32), b.astype(jnp.float32)


def prep_bn(gamma, beta):
    c = gamma.shape[0]
    c_pad = _round_up(c, 128)
    g = jnp.pad(gamma, (0, c_pad - c)).reshape(1, c_pad).astype(jnp.float32)
    b = jnp.pad(beta, (0, c_pad - c)).reshape(1, c_pad).astype(jnp.float32)
    return g, b


def prepare_params(p):
    out = {}
    out["w1"], out["b1"] = prep_conv(p["w1"], p["b1"])
    out["w2"], out["b2"] = prep_conv(p["w2"], p["b2"])
    out["w3"], out["b3"] = prep_conv(p["w3"], p["b3"])
    out["w4"], out["b4"] = prep_conv_final(p["w4"], p["b4"])
    out["g2"], out["be2"] = prep_bn(p["g2"], p["be2"])
    out["g3"], out["be3"] = prep_bn(p["g3"], p["be3"])
    return out


def init_params(img_channels=3, seed=0):
    key = jax.random.PRNGKey(seed)
    ks = jax.random.split(key, 8)

    def conv(kw_, kb_, cout, cin):
        w = jax.random.normal(kw_, (cout, cin, 4, 4), jnp.float32) * 0.05
        b = jax.random.normal(kb_, (cout,), jnp.float32) * 0.05
        return w, b

    p = {}
    p["w1"], p["b1"] = conv(ks[0], ks[1], 64, img_channels * 2)
    p["w2"], p["b2"] = conv(ks[2], ks[3], 128, 64)
    p["w3"], p["b3"] = conv(ks[4], ks[5], 256, 128)
    p["w4"], p["b4"] = conv(ks[6], ks[7], 1, 256)
    # BatchNorm2d default init: gamma = 1, beta = 0 (training-mode batch stats used).
    p["g2"], p["be2"] = jnp.ones((128,), jnp.float32), jnp.zeros((128,), jnp.float32)
    p["g3"], p["be3"] = jnp.ones((256,), jnp.float32), jnp.zeros((256,), jnp.float32)
    return p


# --------------------------------------------------------------------------- forward
def conditional_discriminator(generated_image, original_input_image, params):
    # torch.cat((gen, orig), dim=1); go NHWC + bf16 once for the whole network.
    x = jnp.concatenate([generated_image, original_input_image], axis=1)
    x = jnp.transpose(x, (0, 2, 3, 1)).astype(jnp.bfloat16)         # NCHW -> NHWC
    n = x.shape[0]

    # Conv(6 -> 64, k4 s2 p1) + LeakyReLU(0.2)
    patches, oh, ow = im2col_nhwc(x, 4, 4, 2, 1)
    m = patches.shape[0]
    y = conv_act(patches, params["w1"], params["b1"], act="leaky")
    x = y[:m, :64].reshape(n, oh, ow, 64)

    # Conv(64 -> 128, k4 s2 p1) + BatchNorm2d + LeakyReLU(0.2)  -- one fused kernel
    patches, oh, ow = im2col_nhwc(x, 4, 4, 2, 1)
    m = patches.shape[0]
    y = conv_bn_lrelu(patches, params["w2"], params["b2"], params["g2"], params["be2"])
    x = y[:m, :128].reshape(n, oh, ow, 128)

    # Conv(128 -> 256, k4 s2 p1) + BatchNorm2d + LeakyReLU(0.2)  -- one fused kernel
    patches, oh, ow = im2col_nhwc(x, 4, 4, 2, 1)
    m = patches.shape[0]
    y = conv_bn_lrelu(patches, params["w3"], params["b3"], params["g3"], params["be3"])
    x = y[:m, :256].reshape(n, oh, ow, 256)

    # Conv(256 -> 1, k4 s1 p0) + Sigmoid: a tiny (M x 4096) . (4096 x 1) matvec —
    # plain XLA dot per review instead of a 128-lane-padded Pallas launch.
    patches, oh, ow = im2col_nhwc(x, 4, 4, 1, 0)
    logits = jnp.dot(patches.astype(jnp.float32), params["w4"],
                     preferred_element_type=jnp.float32) + params["b4"]
    validity = jax.nn.sigmoid(logits)                               # (N*OH*OW, 1)

    # validity.view(-1, 1).squeeze(1)   (Cout == 1 -> NHWC flatten == NCHW flatten)
    return validity.reshape(-1)


if __name__ == "__main__":
    N, C, H, W = 2, 3, 32, 32                                       # 32 -> 16 -> 8 -> 4 -> 1
    raw_params = init_params(img_channels=C, seed=0)
    params = prepare_params(raw_params)                             # pad/transpose/bf16 once

    key = jax.random.PRNGKey(0)
    k1, k2 = jax.random.split(key)
    generated_image = jax.random.normal(k1, (N, C, H, W), jnp.float32)
    original_input_image = jax.random.normal(k2, (N, C, H, W), jnp.float32)

    forward = jax.jit(conditional_discriminator)
    out = jax.block_until_ready(forward(generated_image, original_input_image, params))

    assert out.shape == (N,), out.shape
    assert bool(jnp.all(jnp.isfinite(out)))
    assert bool(jnp.all((out >= 0.0) & (out <= 1.0)))
    print("KERNEL_OK")
</pallas_src>

<mosaic_0001>
module attributes {stable_mosaic.version = 11 : i64} {
  func.func @conv_act_kernel(%arg0: i32, %arg1: memref<256x128xbf16, #tpu.memory_space<vmem>>, %arg2: memref<128x128xbf16, #tpu.memory_space<vmem>>, %arg3: memref<1x128xf32, #tpu.memory_space<vmem>>, %arg4: memref<256x128xbf16, #tpu.memory_space<vmem>>) attributes {dimension_semantics = [#tpu.dimension_semantics<parallel>], iteration_bounds = array<i64: 2>, scalar_prefetch = 0 : i64, scratch_operands = 0 : i64, tpu.core_type = #tpu.core_type<tc>, window_params = [{transform_indices = @transform_0, window_bounds = array<i64: 256, 128>}, {pipeline_mode = #tpu.pipeline_mode<synchronous>, transform_indices = @transform_1, window_bounds = array<i64: 128, 128>}, {pipeline_mode = #tpu.pipeline_mode<synchronous>, transform_indices = @transform_2, window_bounds = array<i64: 1, 128>}, {transform_indices = @transform_3, window_bounds = array<i64: 256, 128>}]} {
    %c0 = arith.constant 0 : index
    %c0_0 = arith.constant 0 : index
    %0 = vector.load %arg1[%c0, %c0_0] : memref<256x128xbf16, #tpu.memory_space<vmem>>, vector<256x128xbf16>
    %c0_1 = arith.constant 0 : index
    %c0_2 = arith.constant 0 : index
    %1 = vector.load %arg2[%c0_1, %c0_2] : memref<128x128xbf16, #tpu.memory_space<vmem>>, vector<128x128xbf16>
    %cst = arith.constant dense<0.000000e+00> : vector<256x128xf32>
    %2 = tpu.matmul %0, %1, %cst {dimension_numbers = #tpu.dot_dimension_numbers<[1], [0], [0], [1], [0, 0, 1, 1], [], []>} : vector<256x128xbf16>, vector<128x128xbf16>, vector<256x128xf32> -> vector<256x128xf32>
    %c0_3 = arith.constant 0 : index
    %c0_4 = arith.constant 0 : index
    %3 = vector.load %arg3[%c0_3, %c0_4] : memref<1x128xf32, #tpu.memory_space<vmem>>, vector<1x128xf32>
    %4 = vector.broadcast %3 : vector<1x128xf32> to vector<256x128xf32>
    %5 = arith.addf %2, %4 : vector<256x128xf32>
    %cst_5 = arith.constant 0.000000e+00 : f32
    %6 = vector.broadcast %cst_5 : f32 to vector<256x128xf32>
    %7 = arith.cmpf oge, %5, %6 : vector<256x128xf32>
    %cst_6 = arith.constant 2.000000e-01 : f32
    %8 = vector.broadcast %cst_6 : f32 to vector<256x128xf32>
    %9 = arith.mulf %8, %5 : vector<256x128xf32>
    %10 = arith.select %7, %5, %9 : vector<256x128xi1>, vector<256x128xf32>
    %11 = arith.truncf %10 : vector<256x128xf32> to vector<256x128xbf16>
    %c0_7 = arith.constant 0 : index
    %c0_8 = arith.constant 0 : index
    %12 = vector.load %arg4[%c0_7, %c0_8] : memref<256x128xbf16, #tpu.memory_space<vmem>>, vector<256x128xbf16>
    tpu.vector_store %arg4[%c0_7, %c0_8], %11 {strides = array<i32>} : memref<256x128xbf16, #tpu.memory_space<vmem>>, vector<256x128xbf16>,
    return
  }
  func.func @transform_0(%arg0: i32) -> (i32, i32) {
    %c0_i32 = arith.constant 0 : i32
    %c0_i32_0 = arith.constant 0 : i32
    return %arg0, %c0_i32 : i32, i32
  }
  func.func @transform_1(%arg0: i32) -> (i32, i32) {
    %c0_i32 = arith.constant 0 : i32
    %c0_i32_0 = arith.constant 0 : i32
    %c0_i32_1 = arith.constant 0 : i32
    return %c0_i32, %c0_i32_0 : i32, i32
  }
  func.func @transform_2(%arg0: i32) -> (i32, i32) {
    %c0_i32 = arith.constant 0 : i32
    %c0_i32_0 = arith.constant 0 : i32
    %c0_i32_1 = arith.constant 0 : i32
    return %c0_i32, %c0_i32_0 : i32, i32
  }
  func.func @transform_3(%arg0: i32) -> (i32, i32) {
    %c0_i32 = arith.constant 0 : i32
    %c0_i32_0 = arith.constant 0 : i32
    return %arg0, %c0_i32 : i32, i32
  }
}

module attributes {stable_mosaic.version = 11 : i64} {
  func.func @conv_bn_lrelu_kernel(%arg0: i32, %arg1: memref<128x1024xbf16, #tpu.memory_space<vmem>>, %arg2: memref<1024x128xbf16, #tpu.memory_space<vmem>>, %arg3: memref<1x128xf32, #tpu.memory_space<vmem>>, %arg4: memref<1x128xf32, #tpu.memory_space<vmem>>, %arg5: memref<1x128xf32, #tpu.memory_space<vmem>>, %arg6: memref<128x128xbf16, #tpu.memory_space<vmem>>) attributes {dimension_semantics = [#tpu.dimension_semantics<parallel>], iteration_bounds = array<i64: 1>, scalar_prefetch = 0 : i64, scratch_operands = 0 : i64, tpu.core_type = #tpu.core_type<tc>, window_params = [{pipeline_mode = #tpu.pipeline_mode<synchronous>, transform_indices = @transform_0, window_bounds = array<i64: 128, 1024>}, {transform_indices = @transform_1, window_bounds = array<i64: 1024, 128>}, {transform_indices = @transform_2, window_bounds = array<i64: 1, 128>}, {transform_indices = @transform_3, window_bounds = array<i64: 1, 128>}, {transform_indices = @transform_4, window_bounds = array<i64: 1, 128>}, {transform_indices = @transform_5, window_bounds = array<i64: 128, 128>}]} {
    %c0 = arith.constant 0 : index
    %c0_0 = arith.constant 0 : index
    %0 = vector.load %arg1[%c0, %c0_0] : memref<128x1024xbf16, #tpu.memory_space<vmem>>, vector<128x1024xbf16>
    %c0_1 = arith.constant 0 : index
    %c0_2 = arith.constant 0 : index
    %1 = vector.load %arg2[%c0_1, %c0_2] : memref<1024x128xbf16, #tpu.memory_space<vmem>>, vector<1024x128xbf16>
    %cst = arith.constant dense<0.000000e+00> : vector<128x128xf32>
    %2 = tpu.matmul %0, %1, %cst {dimension_numbers = #tpu.dot_dimension_numbers<[1], [0], [0], [1], [0, 0, 1, 1], [], []>} : vector<128x1024xbf16>, vector<1024x128xbf16>, vector<128x128xf32> -> vector<128x128xf32>
    %c0_3 = arith.constant 0 : index
    %c0_4 = arith.constant 0 : index
    %3 = vector.load %arg3[%c0_3, %c0_4] : memref<1x128xf32, #tpu.memory_space<vmem>>, vector<1x128xf32>
    %4 = vector.broadcast %3 : vector<1x128xf32> to vector<128x128xf32>
    %5 = arith.addf %2, %4 : vector<128x128xf32>
    %cst_5 = arith.constant dense<0.000000e+00> : vector<128xf32>
    %6 = vector.multi_reduction <add>, %5, %cst_5 [0] : vector<128x128xf32> to vector<128xf32>
    %7 = vector.shape_cast %6 : vector<128xf32> to vector<1x128xf32>
    %cst_6 = arith.constant 7.812500e-03 : f32
    %8 = vector.broadcast %cst_6 : f32 to vector<1x128xf32>
    %9 = arith.mulf %7, %8 : vector<1x128xf32>
    %10 = vector.broadcast %9 : vector<1x128xf32> to vector<128x128xf32>
    %11 = arith.subf %5, %10 : vector<128x128xf32>
    %12 = arith.mulf %11, %11 : vector<128x128xf32>
    %cst_7 = arith.constant dense<0.000000e+00> : vector<128xf32>
    %13 = vector.multi_reduction <add>, %12, %cst_7 [0] : vector<128x128xf32> to vector<128xf32>
    %14 = vector.shape_cast %13 : vector<128xf32> to vector<1x128xf32>
    %cst_8 = arith.constant 7.812500e-03 : f32
    %15 = vector.broadcast %cst_8 : f32 to vector<1x128xf32>
    %16 = arith.mulf %14, %15 : vector<1x128xf32>
    %c0_9 = arith.constant 0 : index
    %c0_10 = arith.constant 0 : index
    %17 = vector.load %arg4[%c0_9, %c0_10] : memref<1x128xf32, #tpu.memory_space<vmem>>, vector<1x128xf32>
    %cst_11 = arith.constant 9.99999974E-6 : f32
    %18 = vector.broadcast %cst_11 : f32 to vector<1x128xf32>
    %19 = arith.addf %16, %18 : vector<1x128xf32>
    %20 = math.rsqrt %19 : vector<1x128xf32>
    %21 = arith.mulf %17, %20 : vector<1x128xf32>
    %22 = vector.broadcast %21 : vector<1x128xf32> to vector<128x128xf32>
    %23 = arith.mulf %11, %22 : vector<128x128xf32>
    %c0_12 = arith.constant 0 : index
    %c0_13 = arith.constant 0 : index
    %24 = vector.load %arg5[%c0_12, %c0_13] : memref<1x128xf32, #tpu.memory_space<vmem>>, vector<1x128xf32>
    %25 = vector.broadcast %24 : vector<1x128xf32> to vector<128x128xf32>
    %26 = arith.addf %23, %25 : vector<128x128xf32>
    %cst_14 = arith.constant 0.000000e+00 : f32
    %27 = vector.broadcast %cst_14 : f32 to vector<128x128xf32>
    %28 = arith.cmpf oge, %26, %27 : vector<128x128xf32>
    %cst_15 = arith.constant 2.000000e-01 : f32
    %29 = vector.broadcast %cst_15 : f32 to vector<128x128xf32>
    %30 = arith.mulf %29, %26 : vector<128x128xf32>
    %31 = arith.select %28, %26, %30 : vector<128x128xi1>, vector<128x128xf32>
    %32 = arith.truncf %31 : vector<128x128xf32> to vector<128x128xbf16>
    %c0_16 = arith.constant 0 : index
    %c0_17 = arith.constant 0 : index
    %33 = vector.load %arg6[%c0_16, %c0_17] : memref<128x128xbf16, #tpu.memory_space<vmem>>, vector<128x128xbf16>
    tpu.vector_store %arg6[%c0_16, %c0_17], %32 {strides = array<i32>} : memref<128x128xbf16, #tpu.memory_space<vmem>>, vector<128x128xbf16>,
    return
  }
  func.func @transform_0(%arg0: i32) -> (i32, i32) {
    %c0_i32 = arith.constant 0 : i32
    %c0_i32_0 = arith.constant 0 : i32
    %c0_i32_1 = arith.constant 0 : i32
    return %c0_i32, %c0_i32_0 : i32, i32
  }
  func.func @transform_1(%arg0: i32) -> (i32, i32) {
    %c0_i32 = arith.constant 0 : i32
    %c0_i32_0 = arith.constant 0 : i32
    return %c0_i32, %arg0 : i32, i32
  }
  func.func @transform_2(%arg0: i32) -> (i32, i32) {
    %c0_i32 = arith.constant 0 : i32
    %c0_i32_0 = arith.constant 0 : i32
    return %c0_i32, %arg0 : i32, i32
  }
  func.func @transform_3(%arg0: i32) -> (i32, i32) {
    %c0_i32 = arith.constant 0 : i32
    %c0_i32_0 = arith.constant 0 : i32
    return %c0_i32, %arg0 : i32, i32
  }
  func.func @transform_4(%arg0: i32) -> (i32, i32) {
    %c0_i32 = arith.constant 0 : i32
    %c0_i32_0 = arith.constant 0 : i32
    return %c0_i32, %arg0 : i32, i32
  }
  func.func @transform_5(%arg0: i32) -> (i32, i32) {
    %c0_i32 = arith.constant 0 : i32
    %c0_i32_0 = arith.constant 0 : i32
    return %c0_i32, %arg0 : i32, i32
  }
}

module attributes {stable_mosaic.version = 11 : i64} {
  func.func @conv_bn_lrelu_kernel(%arg0: i32, %arg1: memref<32x2048xbf16, #tpu.memory_space<vmem>>, %arg2: memref<2048x128xbf16, #tpu.memory_space<vmem>>, %arg3: memref<1x128xf32, #tpu.memory_space<vmem>>, %arg4: memref<1x128xf32, #tpu.memory_space<vmem>>, %arg5: memref<1x128xf32, #tpu.memory_space<vmem>>, %arg6: memref<32x128xbf16, #tpu.memory_space<vmem>>) attributes {dimension_semantics = [#tpu.dimension_semantics<parallel>], iteration_bounds = array<i64: 2>, scalar_prefetch = 0 : i64, scratch_operands = 0 : i64, tpu.core_type = #tpu.core_type<tc>, window_params = [{pipeline_mode = #tpu.pipeline_mode<synchronous>, transform_indices = @transform_0, window_bounds = array<i64: 32, 2048>}, {transform_indices = @transform_1, window_bounds = array<i64: 2048, 128>}, {transform_indices = @transform_2, window_bounds = array<i64: 1, 128>}, {transform_indices = @transform_3, window_bounds = array<i64: 1, 128>}, {transform_indices = @transform_4, window_bounds = array<i64: 1, 128>}, {transform_indices = @transform_5, window_bounds = array<i64: 32, 128>}]} {
    %c0 = arith.constant 0 : index
    %c0_0 = arith.constant 0 : index
    %0 = vector.load %arg1[%c0, %c0_0] : memref<32x2048xbf16, #tpu.memory_space<vmem>>, vector<32x2048xbf16>
    %c0_1 = arith.constant 0 : index
    %c0_2 = arith.constant 0 : index
    %1 = vector.load %arg2[%c0_1, %c0_2] : memref<2048x128xbf16, #tpu.memory_space<vmem>>, vector<2048x128xbf16>
    %cst = arith.constant dense<0.000000e+00> : vector<32x128xf32>
    %2 = tpu.matmul %0, %1, %cst {dimension_numbers = #tpu.dot_dimension_numbers<[1], [0], [0], [1], [0, 0, 1, 1], [], []>} : vector<32x2048xbf16>, vector<2048x128xbf16>, vector<32x128xf32> -> vector<32x128xf32>
    %c0_3 = arith.constant 0 : index
    %c0_4 = arith.constant 0 : index
    %3 = vector.load %arg3[%c0_3, %c0_4] : memref<1x128xf32, #tpu.memory_space<vmem>>, vector<1x128xf32>
    %4 = vector.broadcast %3 : vector<1x128xf32> to vector<32x128xf32>
    %5 = arith.addf %2, %4 : vector<32x128xf32>
    %cst_5 = arith.constant dense<0.000000e+00> : vector<128xf32>
    %6 = vector.multi_reduction <add>, %5, %cst_5 [0] : vector<32x128xf32> to vector<128xf32>
    %7 = vector.shape_cast %6 : vector<128xf32> to vector<1x128xf32>
    %cst_6 = arith.constant 3.125000e-02 : f32
    %8 = vector.broadcast %cst_6 : f32 to vector<1x128xf32>
    %9 = arith.mulf %7, %8 : vector<1x128xf32>
    %10 = vector.broadcast %9 : vector<1x128xf32> to vector<32x128xf32>
    %11 = arith.subf %5, %10 : vector<32x128xf32>
    %12 = arith.mulf %11, %11 : vector<32x128xf32>
    %cst_7 = arith.constant dense<0.000000e+00> : vector<128xf32>
    %13 = vector.multi_reduction <add>, %12, %cst_7 [0] : vector<32x128xf32> to vector<128xf32>
    %14 = vector.shape_cast %13 : vector<128xf32> to vector<1x128xf32>
    %cst_8 = arith.constant 3.125000e-02 : f32
    %15 = vector.broadcast %cst_8 : f32 to vector<1x128xf32>
    %16 = arith.mulf %14, %15 : vector<1x128xf32>
    %c0_9 = arith.constant 0 : index
    %c0_10 = arith.constant 0 : index
    %17 = vector.load %arg4[%c0_9, %c0_10] : memref<1x128xf32, #tpu.memory_space<vmem>>, vector<1x128xf32>
    %cst_11 = arith.constant 9.99999974E-6 : f32
    %18 = vector.broadcast %cst_11 : f32 to vector<1x128xf32>
    %19 = arith.addf %16, %18 : vector<1x128xf32>
    %20 = math.rsqrt %19 : vector<1x128xf32>
    %21 = arith.mulf %17, %20 : vector<1x128xf32>
    %22 = vector.broadcast %21 : vector<1x128xf32> to vector<32x128xf32>
    %23 = arith.mulf %11, %22 : vector<32x128xf32>
    %c0_12 = arith.constant 0 : index
    %c0_13 = arith.constant 0 : index
    %24 = vector.load %arg5[%c0_12, %c0_13] : memref<1x128xf32, #tpu.memory_space<vmem>>, vector<1x128xf32>
    %25 = vector.broadcast %24 : vector<1x128xf32> to vector<32x128xf32>
    %26 = arith.addf %23, %25 : vector<32x128xf32>
    %cst_14 = arith.constant 0.000000e+00 : f32
    %27 = vector.broadcast %cst_14 : f32 to vector<32x128xf32>
    %28 = arith.cmpf oge, %26, %27 : vector<32x128xf32>
    %cst_15 = arith.constant 2.000000e-01 : f32
    %29 = vector.broadcast %cst_15 : f32 to vector<32x128xf32>
    %30 = arith.mulf %29, %26 : vector<32x128xf32>
    %31 = arith.select %28, %26, %30 : vector<32x128xi1>, vector<32x128xf32>
    %32 = arith.truncf %31 : vector<32x128xf32> to vector<32x128xbf16>
    %c0_16 = arith.constant 0 : index
    %c0_17 = arith.constant 0 : index
    %33 = vector.load %arg6[%c0_16, %c0_17] : memref<32x128xbf16, #tpu.memory_space<vmem>>, vector<32x128xbf16>
    tpu.vector_store %arg6[%c0_16, %c0_17], %32 {strides = array<i32>} : memref<32x128xbf16, #tpu.memory_space<vmem>>, vector<32x128xbf16>,
    return
  }
  func.func @transform_0(%arg0: i32) -> (i32, i32) {
    %c0_i32 = arith.constant 0 : i32
    %c0_i32_0 = arith.constant 0 : i32
    %c0_i32_1 = arith.constant 0 : i32
    return %c0_i32, %c0_i32_0 : i32, i32
  }
  func.func @transform_1(%arg0: i32) -> (i32, i32) {
    %c0_i32 = arith.constant 0 : i32
    %c0_i32_0 = arith.constant 0 : i32
    return %c0_i32, %arg0 : i32, i32
  }
  func.func @transform_2(%arg0: i32) -> (i32, i32) {
    %c0_i32 = arith.constant 0 : i32
    %c0_i32_0 = arith.constant 0 : i32
    return %c0_i32, %arg0 : i32, i32
  }
  func.func @transform_3(%arg0: i32) -> (i32, i32) {
    %c0_i32 = arith.constant 0 : i32
    %c0_i32_0 = arith.constant 0 : i32
    return %c0_i32, %arg0 : i32, i32
  }
  func.func @transform_4(%arg0: i32) -> (i32, i32) {
    %c0_i32 = arith.constant 0 : i32
    %c0_i32_0 = arith.constant 0 : i32
    return %c0_i32, %arg0 : i32, i32
  }
  func.func @transform_5(%arg0: i32) -> (i32, i32) {
    %c0_i32 = arith.constant 0 : i32
    %c0_i32_0 = arith.constant 0 : i32
    return %c0_i32, %arg0 : i32, i32
  }
}

</mosaic_0001>

<llo_original>
// kernel: conditional_discriminator.3
$region0: #{conditional_discriminator.3}
  #allocation0 [shape = 'u32[]', space=smem, size = 0x4, offset = 0x4, fixed_abs, tag = 'smem constant byte address 0x4 - core index']
  #allocation1 [shape = 'u32[144,128]{1,0:T(1,128)}', space=vmem, size = 0x12000, scoped, tag = 'internal scratch']
  %s0 = inlined_call_operand.vmem [shape: bf16[512,128], index: 0, kind: input, shape index: {}]
  %s1 = inlined_call_operand.vmem [shape: bf16[128,128], index: 1, kind: input, shape index: {}]
  %s2 = inlined_call_operand.vmem [shape: f32[1,128], index: 2, kind: input, shape index: {}]
  %s3 = inlined_call_operand.vmem [shape: bf16[512,128], index: 3, kind: output, shape index: {}]
  %s4 = sld [smem:[#allocation0]]
  $region45: #{conditional_discriminator.3} parent=0
    _
  %s6 = ssub.s32 1, %s4
  %s7 = scalar_select 0, %s6, %s4
  loop: start=0, step=1, limit=4
  $region2: #{conditional_discriminator.3} parent=0 // loop_pre_header
    _
  $region3: #{conditional_discriminator.3} parent=0 // loop_header
    %s9 = sphi 0, %s13
    %p10 = scmp.ge.s32.totalorder %s9, 4
    %s19 = sphi 0, %s21
    %s22 = sphi 0, %s19
    %s23 = sphi 0, %s22
    %s39 = sphi 0, %s23
    %s43 = sphi 0, %s43
    %s45 = sphi 0, %s43
    %s46 = sphi 0, %s45
    %s60 = sphi 0, %s46
    %s64 = sphi 0, %s64
    %s66 = sphi 0, %s64
    %s67 = sphi 0, %s66
    %s81 = sphi 0, %s67
    %s87 = sphi 0, %s89
    %s90 = sphi 0, %s87
    %s91 = sphi 0, %s90
    %s107 = sphi 0, %s91
  $region4: #{conditional_discriminator.3} parent=0 // loop_header_branch
    %12 = sbr.rel (%p10) target = $region8
  $region5: #{conditional_discriminator.3} parent=0 // loop_body
    %s14 = ssub.s32 %s9, 1
    %s15 = ssub.s32 %s9, 2
    %s16 = sadd.s32 %s9, 1
    %s17 = ssub.s32 %s9, %s16
    %p18 = scmp.eq.s32.totalorder %s17, 0
    %s20 = sadd.s32 %s19, 1
    %s21 = scalar_select %p18, %s19, %s20
    %p24 = pneg %p18
    %p25 = scmp.eq.s32.totalorder %s9, 1
    %p26 = por %p24, %p25
    %p27 = scmp.ne.s32.totalorder %s19, %s22
    %p28 = scmp.eq.s32.totalorder %s9, 0
    %p29 = por %p27, %p28
    %p30 = scmp.ne.s32.totalorder %s19, %s22
    %p31 = scmp.eq.s32.totalorder %s14, 1
    %p32 = por %p30, %p31
    %p33 = scmp.ne.s32.totalorder %s22, %s23
    %p34 = scmp.eq.s32.totalorder %s14, 0
    %p35 = por %p33, %p34
    %p36 = scmp.ne.s32.totalorder %s22, %s23
    %p37 = scmp.eq.s32.totalorder %s15, 1
    %p38 = por %p36, %p37
    %p40 = scmp.ne.s32.totalorder %s23, %s39
    %p41 = scmp.eq.s32.totalorder %s15, 0
    %p42 = por %p40, %p41
    %s44 = sadd.s32 %s43, 1
    %p47 = scmp.eq.s32.totalorder %s9, 1
    %p48 = scmp.ne.s32.totalorder %s43, %s45
    %p49 = scmp.eq.s32.totalorder %s9, 0
    %p50 = por %p48, %p49
    %p51 = scmp.ne.s32.totalorder %s43, %s45
    %p52 = scmp.eq.s32.totalorder %s14, 1
    %p53 = por %p51, %p52
    %p54 = scmp.ne.s32.totalorder %s45, %s46
    %p55 = scmp.eq.s32.totalorder %s14, 0
    %p56 = por %p54, %p55
    %p57 = scmp.ne.s32.totalorder %s45, %s46
    %p58 = scmp.eq.s32.totalorder %s15, 1
    %p59 = por %p57, %p58
    %p61 = scmp.ne.s32.totalorder %s46, %s60
    %p62 = scmp.eq.s32.totalorder %s15, 0
    %p63 = por %p61, %p62
    %s65 = sadd.s32 %s64, 1
    %p68 = scmp.eq.s32.totalorder %s9, 1
    %p69 = scmp.ne.s32.totalorder %s64, %s66
    %p70 = scmp.eq.s32.totalorder %s9, 0
    %p71 = por %p69, %p70
    %p72 = scmp.ne.s32.totalorder %s64, %s66
    %p73 = scmp.eq.s32.totalorder %s14, 1
    %p74 = por %p72, %p73
    %p75 = scmp.ne.s32.totalorder %s66, %s67
    %p76 = scmp.eq.s32.totalorder %s14, 0
    %p77 = por %p75, %p76
    %p78 = scmp.ne.s32.totalorder %s66, %s67
    %p79 = scmp.eq.s32.totalorder %s15, 1
    %p80 = por %p78, %p79
    %p82 = scmp.ne.s32.totalorder %s67, %s81
    %p83 = scmp.eq.s32.totalorder %s15, 0
    %p84 = por %p82, %p83
    %s85 = ssub.s32 %s9, %s16
    %p86 = scmp.eq.s32.totalorder %s85, 0
    %s88 = sadd.s32 %s87, 1
    %s89 = scalar_select %p86, %s87, %s88
    %p92 = pneg %p86
    %p93 = scmp.eq.s32.totalorder %s9, 1
    %p94 = por %p92, %p93
    %p95 = scmp.ne.s32.totalorder %s87, %s90
    %p96 = scmp.eq.s32.totalorder %s9, 0
    %p97 = por %p95, %p96
    %p98 = scmp.ne.s32.totalorder %s87, %s90
    %p99 = scmp.eq.s32.totalorder %s14, 1
    %p100 = por %p98, %p99
    %p101 = scmp.ne.s32.totalorder %s90, %s91
    %p102 = scmp.eq.s32.totalorder %s14, 0
    %p103 = por %p101, %p102
    %p104 = scmp.ne.s32.totalorder %s90, %s91
    %p105 = scmp.eq.s32.totalorder %s15, 1
    %p106 = por %p104, %p105
    %p108 = scmp.ne.s32.totalorder %s91, %s107
    %p109 = scmp.eq.s32.totalorder %s15, 0
    %p110 = por %p108, %p109
    %p111 = scmp.le.s32.totalorder 1, %s9
    %p112 = scmp.lt.s32.totalorder %s9, 3
    %p113 = pnand %p111, %p112
    %p114 = pneg %p113
    // Predicated region
    $region9: #{conditional_discriminator.3} parent=5 // pred_check
      _
    $region10: #{conditional_discriminator.3} parent=5 // pred_check_branch
      %116 = sbr.rel (%p113) target = $region12
    $region11: #{conditional_discriminator.3} parent=5 // pred_region
      %s117 = ssub.s32 %s9, 1
      // Predicated region
      $region13: #{conditional_discriminator.3} parent=11 // pred_check
        %p118 = pneg %p56
      $region14: #{conditional_discriminator.3} parent=11 // pred_check_branch
        %120 = sbr.rel (%p118) target = $region16
      $region15: #{conditional_discriminator.3} parent=11 // pred_region
        _
      $region16: #{conditional_discriminator.3} parent=11 // pred_fallthru
        _
      // Predicated region
      $region17: #{conditional_discriminator.3} parent=11 // pred_check
        %p121 = pneg %p77
      $region18: #{conditional_discriminator.3} parent=11 // pred_check_branch
        %123 = sbr.rel (%p121) target = $region20
      $region19: #{conditional_discriminator.3} parent=11 // pred_region
        _
      $region20: #{conditional_discriminator.3} parent=11 // pred_fallthru
        _
    $region12: #{conditional_discriminator.3} parent=5 // pred_fallthru
      _
    %p124 = scmp.lt.s32.totalorder %s9, 2
    // Predicated region
    $region21: #{conditional_discriminator.3} parent=5 // pred_check
      %p125 = pneg %p124
    $region22: #{conditional_discriminator.3} parent=5 // pred_check_branch
      %127 = sbr.rel (%p125) target = $region24
    $region23: #{conditional_discriminator.3} parent=5 // pred_region
      // Predicated region
      $region25: #{conditional_discriminator.3} parent=23 // pred_check
        %p128 = pneg %p29
      $region26: #{conditional_discriminator.3} parent=23 // pred_check_branch
        %130 = sbr.rel (%p128) target = $region28
      $region27: #{conditional_discriminator.3} parent=23 // pred_region
        %s131 = smul.u32 32, %s9
        %p132 = scmp.lt.s32.totalorder %s131, 63
        %s133 = scalar_select %p132, %s131, 63
        %s134 = smul.addr %s133, 4
        %s135 = scalar_lea.vmem %s0, %s134
        %s136 = smul.u32 32, %s9
      $region28: #{conditional_discriminator.3} parent=23 // pred_fallthru
        _
    $region24: #{conditional_discriminator.3} parent=5 // pred_fallthru
      _
    %p137 = scmp.le.s32.totalorder 1, %s9
    %p138 = scmp.lt.s32.totalorder %s9, 3
    %p139 = pnand %p137, %p138
    %p140 = pneg %p139
    // Predicated region
    $region29: #{conditional_discriminator.3} parent=5 // pred_check
      _
    $region30: #{conditional_discriminator.3} parent=5 // pred_check_branch
      %142 = sbr.rel (%p139) target = $region32
    $region31: #{conditional_discriminator.3} parent=5 // pred_region
      %s143 = ssub.s32 %s9, 1
      %s144 = smul.u32 32, %s14
      %p145 = scmp.lt.s32.totalorder %s144, 63
      %s146 = scalar_select %p145, %s144, 63
      %s147 = smul.addr %s146, 4
      %s148 = scalar_lea.vmem %s0, %s147
      %p149 = pneg %p35
      %p150 = pneg %p32
      %p151 = pneg %p56
      %p152 = pneg %p53
      %p153 = pneg %p77
      %p154 = pneg %p74
      %p155 = pneg %p103
      %p156 = pneg %p100
      %s157 = smul.u32 32, %s14
      %p158 = scmp.lt.s32.totalorder %s157, 63
      %s159 = scalar_select %p158, %s157, 63
      %s160 = smul.addr %s159, 4
      %s161 = scalar_lea.vmem %s3, %s160
      %s162 = smul.u32 32, %s14
      %p163 = scmp.lt.s32.totalorder %s162, 63
      %s164 = scalar_select %p163, %s162, 63
      %s165 = smul.addr %s164, 4
      %s166 = scalar_lea.vmem %s0, %s165
      %s167 = smul.u32 32, %s14
      %s168 = smul.u32 32, %s14
      %p169 = scmp.lt.s32.totalorder %s168, 63
      %s170 = scalar_select %p169, %s168, 63
      %s171 = smul.addr %s170, 4
      %s172 = scalar_lea.vmem %s3, %s171
      %s173 = smul.u32 32, %s14
      %v175 = vld [vmem:[%s166] sm:$0xf]
      %v176 = vld [vmem:[%s166 + $0x4] sm:$0xf]
      %v177 = vld [vmem:[%s166 + $0x8] sm:$0xf]
      %v178 = vld [vmem:[%s166 + $0xc] sm:$0xf]
      %v179 = vld [vmem:[%s166 + $0x10] sm:$0xf]
      %v180 = vld [vmem:[%s166 + $0x14] sm:$0xf]
      %v181 = vld [vmem:[%s166 + $0x18] sm:$0xf]
      %v182 = vld [vmem:[%s166 + $0x1c] sm:$0xf]
      %v183 = vld [vmem:[%s166 + $0x20] sm:$0xf]
      %v184 = vld [vmem:[%s166 + $0x24] sm:$0xf]
      %v185 = vld [vmem:[%s166 + $0x28] sm:$0xf]
      %v186 = vld [vmem:[%s166 + $0x2c] sm:$0xf]
      %v187 = vld [vmem:[%s166 + $0x30] sm:$0xf]
      %v188 = vld [vmem:[%s166 + $0x34] sm:$0xf]
      %v189 = vld [vmem:[%s166 + $0x38] sm:$0xf]
      %v190 = vld [vmem:[%s166 + $0x3c] sm:$0xf]
      %v191 = vld [vmem:[%s166 + $0x40] sm:$0xf]
      %v192 = vld [vmem:[%s166 + $0x44] sm:$0xf]
      %v193 = vld [vmem:[%s166 + $0x48] sm:$0xf]
      %v194 = vld [vmem:[%s166 + $0x4c] sm:$0xf]
      %v195 = vld [vmem:[%s166 + $0x50] sm:$0xf]
      %v196 = vld [vmem:[%s166 + $0x54] sm:$0xf]
      %v197 = vld [vmem:[%s166 + $0x58] sm:$0xf]
      %v198 = vld [vmem:[%s166 + $0x5c] sm:$0xf]
      %v199 = vld [vmem:[%s166 + $0x60] sm:$0xf]
      %v200 = vld [vmem:[%s166 + $0x64] sm:$0xf]
      %v201 = vld [vmem:[%s166 + $0x68] sm:$0xf]
      %v202 = vld [vmem:[%s166 + $0x6c] sm:$0xf]
      %v203 = vld [vmem:[%s166 + $0x70] sm:$0xf]
      %v204 = vld [vmem:[%s166 + $0x74] sm:$0xf]
      %v205 = vld [vmem:[%s166 + $0x78] sm:$0xf]
      %v206 = vld [vmem:[%s166 + $0x7c] sm:$0xf]
      %v207 = vld [vmem:[%s1] sm:$0xf]
      %v208 = vld [vmem:[%s1 + $0x4] sm:$0xf]
      %v209 = vld [vmem:[%s1 + $0x8] sm:$0xf]
      %v210 = vld [vmem:[%s1 + $0xc] sm:$0xf]
      %v211 = vld [vmem:[%s1 + $0x10] sm:$0xf]
      %v212 = vld [vmem:[%s1 + $0x14] sm:$0xf]
      %v213 = vld [vmem:[%s1 + $0x18] sm:$0xf]
      %v214 = vld [vmem:[%s1 + $0x1c] sm:$0xf]
      %v215 = vld [vmem:[%s1 + $0x20] sm:$0xf]
      %v216 = vld [vmem:[%s1 + $0x24] sm:$0xf]
      %v217 = vld [vmem:[%s1 + $0x28] sm:$0xf]
      %v218 = vld [vmem:[%s1 + $0x2c] sm:$0xf]
      %v219 = vld [vmem:[%s1 + $0x30] sm:$0xf]
      %v220 = vld [vmem:[%s1 + $0x34] sm:$0xf]
      %v221 = vld [vmem:[%s1 + $0x38] sm:$0xf]
      %v222 = vld [vmem:[%s1 + $0x3c] sm:$0xf]
      %v223 = vld [vmem:[%s2] sm:$0x1]
      %v225 = vlaneseq
      %v226 = vshrl.u32 %v225, 7
      %v227 = vsub.s32 0, %v226
      %v228 = vrot.slane %v223, %v227
      %v262 = vunpack.c.l.b16 %v175
      %v263 = vunpack.c.l.b16 %v176
      %v264 = vunpack.c.l.b16 %v177
      %v265 = vunpack.c.l.b16 %v178
      %v266 = vunpack.c.l.b16 %v179
      %v267 = vunpack.c.l.b16 %v180
      %v268 = vunpack.c.l.b16 %v181
      %v269 = vunpack.c.l.b16 %v182
      %v270 = vunpack.c.l.b16 %v183
      %v271 = vunpack.c.l.b16 %v184
      %v272 = vunpack.c.l.b16 %v185
      %v273 = vunpack.c.l.b16 %v186
      %v274 = vunpack.c.l.b16 %v187
      %v275 = vunpack.c.l.b16 %v188
      %v276 = vunpack.c.l.b16 %v189
      %v277 = vunpack.c.l.b16 %v190
      %v278 = vunpack.c.l.b16 %v191
      %v279 = vunpack.c.l.b16 %v192
      %v280 = vunpack.c.l.b16 %v193
      %v281 = vunpack.c.l.b16 %v194
      %v282 = vunpack.c.l.b16 %v195
      %v283 = vunpack.c.l.b16 %v196
      %v284 = vunpack.c.l.b16 %v197
      %v285 = vunpack.c.l.b16 %v198
      %v286 = vunpack.c.l.b16 %v199
      %v287 = vunpack.c.l.b16 %v200
      %v288 = vunpack.c.l.b16 %v201
      %v289 = vunpack.c.l.b16 %v202
      %v290 = vunpack.c.l.b16 %v203
      %v291 = vunpack.c.l.b16 %v204
      %v292 = vunpack.c.l.b16 %v205
      %v293 = vunpack.c.l.b16 %v206
      %v294 = vpack.c.b16 %v263, %v262
      %v295 = vpack.c.b16 %v265, %v264
      %v296 = vpack.c.b16 %v267, %v266
      %v297 = vpack.c.b16 %v269, %v268
      %v298 = vpack.c.b16 %v271, %v270
      %v299 = vpack.c.b16 %v273, %v272
      %v300 = vpack.c.b16 %v275, %v274
      %v301 = vpack.c.b16 %v277, %v276
      %v302 = vpack.c.b16 %v279, %v278
      %v303 = vpack.c.b16 %v281, %v280
      %v304 = vpack.c.b16 %v283, %v282
      %v305 = vpack.c.b16 %v285, %v284
      %v306 = vpack.c.b16 %v287, %v286
      %v307 = vpack.c.b16 %v289, %v288
      %v308 = vpack.c.b16 %v291, %v290
      %v309 = vpack.c.b16 %v293, %v292
      %v342 = vunpack.c.l.b16 %v207
      %v343 = vunpack.c.l.b16 %v208
      %v344 = vunpack.c.l.b16 %v209
      %v345 = vunpack.c.l.b16 %v210
      %v346 = vunpack.c.l.b16 %v211
      %v347 = vunpack.c.l.b16 %v212
      %v348 = vunpack.c.l.b16 %v213
      %v349 = vunpack.c.l.b16 %v214
      %v350 = vunpack.c.l.b16 %v215
      %v351 = vunpack.c.l.b16 %v216
      %v352 = vunpack.c.l.b16 %v217
      %v353 = vunpack.c.l.b16 %v218
      %v354 = vunpack.c.l.b16 %v219
      %v355 = vunpack.c.l.b16 %v220
      %v356 = vunpack.c.l.b16 %v221
      %v357 = vunpack.c.l.b16 %v222
      %v358 = vpack.c.b16 %v343, %v342
      %v359 = vpack.c.b16 %v345, %v344
      %v360 = vpack.c.b16 %v347, %v346
      %v361 = vpack.c.b16 %v349, %v348
      %v362 = vpack.c.b16 %v351, %v350
      %v363 = vpack.c.b16 %v353, %v352
      %v364 = vpack.c.b16 %v355, %v354
      %v365 = vpack.c.b16 %v357, %v356
      %374 = vmatprep.subr.bf16.mxu0 0
      %375 = vmatpush1.bf16.msra.mxu0 %v358
      %376 = vmatprep.subr.bf16.mxu0 0
      %377 = vmatpush1.bf16.msra.mxu0 %v359
      %378 = vmatprep.subr.bf16.mxu0 0
      %379 = vmatpush1.bf16.msra.mxu0 %v360
      %380 = vmatprep.subr.bf16.mxu0 0
      %381 = vmatpush1.bf16.msra.mxu0 %v361
      %382 = vmatprep.subr.bf16.mxu0 0
      %383 = vmatpush1.bf16.msra.mxu0 %v362
      %384 = vmatprep.subr.bf16.mxu0 0
      %385 = vmatpush1.bf16.msra.mxu0 %v363
      %386 = vmatprep.subr.bf16.mxu0 0
      %387 = vmatpush1.bf16.msra.mxu0 %v364
      %388 = vmatprep.subr.bf16.mxu0 0
      %389 = vmatpush1.bf16.msra.mxu0 %v365
      %390 = vmatprep.subr.bf16.mxu0 0
      %391 = vmatpush1.bf16.msra.mxu0 0
      %392 = vmatprep.subr.bf16.mxu0 0
      %393 = vmatpush1.bf16.msra.mxu0 0
      %394 = vmatprep.subr.bf16.mxu0 0
      %395 = vmatpush1.bf16.msra.mxu0 0
      %396 = vmatprep.subr.bf16.mxu0 0
      %397 = vmatpush1.bf16.msra.mxu0 0
      %398 = vmatprep.subr.bf16.mxu0 0
      %399 = vmatpush1.bf16.msra.mxu0 0
      %400 = vmatprep.subr.bf16.mxu0 0
      %401 = vmatpush1.bf16.msra.mxu0 0
      %402 = vmatprep.subr.bf16.mxu0 0
      %403 = vmatpush1.bf16.msra.mxu0 0
      %404 = vmatprep.subr.bf16.mxu0 0
      %405 = vmatpush1.bf16.msra.mxu0 0
      %406 = vmatprep.mubr.bf16.mxu0 0
      %407 = vmatmul.mubr.bf16.gmra.mrb[0].mxu0 %v294
      %v408 = vpop.f32.mrb[0].mxu0
      %v409 = vadd.f32 %v228, %v408
      %v410 = vpop.f32.mrb[0].mxu0
      %v411 = vpop.f32.mrb[0].mxu0
      %v412 = vadd.f32 %v228, %v411
      %v413 = vpop.f32.mrb[0].mxu0
      %414 = vmatprep.mubr.bf16.mxu0 0
      %415 = vmatmul.mubr.bf16.gmra.mrb[0].mxu0 %v295
      %v416 = vpop.f32.mrb[0].mxu0
      %v417 = vadd.f32 %v228, %v416
      %v418 = vpop.f32.mrb[0].mxu0
      %v419 = vpop.f32.mrb[0].mxu0
      %v420 = vadd.f32 %v228, %v419
      %v421 = vpop.f32.mrb[0].mxu0
      %422 = vmatprep.mubr.bf16.mxu0 0
      %423 = vmatmul.mubr.bf16.gmra.mrb[0].mxu0 %v296
      %v424 = vpop.f32.mrb[0].mxu0
      %v425 = vadd.f32 %v228, %v424
      %v426 = vpop.f32.mrb[0].mxu0
      %v427 = vpop.f32.mrb[0].mxu0
      %v428 = vadd.f32 %v228, %v427
      %v429 = vpop.f32.mrb[0].mxu0
      %430 = vmatprep.mubr.bf16.mxu0 0
      %431 = vmatmul.mubr.bf16.gmra.mrb[0].mxu0 %v297
      %v432 = vpop.f32.mrb[0].mxu0
      %v433 = vadd.f32 %v228, %v432
      %v434 = vpop.f32.mrb[0].mxu0
      %v435 = vpop.f32.mrb[0].mxu0
      %v436 = vadd.f32 %v228, %v435
      %v437 = vpop.f32.mrb[0].mxu0
      %438 = vmatprep.mubr.bf16.mxu0 0
      %439 = vmatmul.mubr.bf16.gmra.mrb[0].mxu0 %v298
      %v440 = vpop.f32.mrb[0].mxu0
      %v441 = vadd.f32 %v228, %v440
      %v442 = vpop.f32.mrb[0].mxu0
      %v443 = vpop.f32.mrb[0].mxu0
      %v444 = vadd.f32 %v228, %v443
      %v445 = vpop.f32.mrb[0].mxu0
      %446 = vmatprep.mubr.bf16.mxu0 0
      %447 = vmatmul.mubr.bf16.gmra.mrb[0].mxu0 %v299
      %v448 = vpop.f32.mrb[0].mxu0
      %v449 = vadd.f32 %v228, %v448
      %v450 = vpop.f32.mrb[0].mxu0
      %v451 = vpop.f32.mrb[0].mxu0
      %v452 = vadd.f32 %v228, %v451
      %v453 = vpop.f32.mrb[0].mxu0
      %454 = vmatprep.mubr.bf16.mxu0 0
      %455 = vmatmul.mubr.bf16.gmra.mrb[0].mxu0 %v300
      %v456 = vpop.f32.mrb[0].mxu0
      %v457 = vadd.f32 %v228, %v456
      %v458 = vpop.f32.mrb[0].mxu0
      %v459 = vpop.f32.mrb[0].mxu0
      %v460 = vadd.f32 %v228, %v459
      %v461 = vpop.f32.mrb[0].mxu0
      %462 = vmatprep.mubr.bf16.mxu0 0
      %463 = vmatmul.mubr.bf16.gmra.mrb[0].mxu0 %v301
      %v464 = vpop.f32.mrb[0].mxu0
      %v465 = vadd.f32 %v228, %v464
      %v466 = vpop.f32.mrb[0].mxu0
      %v467 = vpop.f32.mrb[0].mxu0
      %v468 = vadd.f32 %v228, %v467
      %v469 = vpop.f32.mrb[0].mxu0
      %470 = vmatprep.mubr.bf16.mxu0 0
      %471 = vmatmul.mubr.bf16.gmra.mrb[0].mxu0 %v302
      %v472 = vpop.f32.mrb[0].mxu0
      %v473 = vadd.f32 %v228, %v472
      %v474 = vpop.f32.mrb[0].mxu0
      %v475 = vpop.f32.mrb[0].mxu0
      %v476 = vadd.f32 %v228, %v475
      %v477 = vpop.f32.mrb[0].mxu0
      %478 = vmatprep.mubr.bf16.mxu0 0
      %479 = vmatmul.mubr.bf16.gmra.mrb[0].mxu0 %v303
      %v480 = vpop.f32.mrb[0].mxu0
      %v481 = vadd.f32 %v228, %v480
      %v482 = vpop.f32.mrb[0].mxu0
      %v483 = vpop.f32.mrb[0].mxu0
      %v484 = vadd.f32 %v228, %v483
      %v485 = vpop.f32.mrb[0].mxu0
      %486 = vmatprep.mubr.bf16.mxu0 0
      %487 = vmatmul.mubr.bf16.gmra.mrb[0].mxu0 %v304
      %v488 = vpop.f32.mrb[0].mxu0
      %v489 = vadd.f32 %v228, %v488
      %v490 = vpop.f32.mrb[0].mxu0
      %v491 = vpop.f32.mrb[0].mxu0
      %v492 = vadd.f32 %v228, %v491
      %v493 = vpop.f32.mrb[0].mxu0
      %494 = vmatprep.mubr.bf16.mxu0 0
      %495 = vmatmul.mubr.bf16.gmra.mrb[0].mxu0 %v305
      %v496 = vpop.f32.mrb[0].mxu0
      %v497 = vadd.f32 %v228, %v496
      %v498 = vpop.f32.mrb[0].mxu0
      %v499 = vpop.f32.mrb[0].mxu0
      %v500 = vadd.f32 %v228, %v499
      %v501 = vpop.f32.mrb[0].mxu0
      %502 = vmatprep.mubr.bf16.mxu0 0
      %503 = vmatmul.mubr.bf16.gmra.mrb[0].mxu0 %v306
      %v504 = vpop.f32.mrb[0].mxu0
      %v505 = vadd.f32 %v228, %v504
      %v506 = vpop.f32.mrb[0].mxu0
      %v507 = vpop.f32.mrb[0].mxu0
      %v508 = vadd.f32 %v228, %v507
      %v509 = vpop.f32.mrb[0].mxu0
      %510 = vmatprep.mubr.bf16.mxu0 0
      %511 = vmatmul.mubr.bf16.gmra.mrb[0].mxu0 %v307
      %v512 = vpop.f32.mrb[0].mxu0
      %v513 = vadd.f32 %v228, %v512
      %v514 = vpop.f32.mrb[0].mxu0
      %v515 = vpop.f32.mrb[0].mxu0
      %v516 = vadd.f32 %v228, %v515
      %v517 = vpop.f32.mrb[0].mxu0
      %518 = vmatprep.mubr.bf16.mxu0 0
      %519 = vmatmul.mubr.bf16.gmra.mrb[0].mxu0 %v308
      %v520 = vpop.f32.mrb[0].mxu0
      %v521 = vadd.f32 %v228, %v520
      %v522 = vpop.f32.mrb[0].mxu0
      %v523 = vpop.f32.mrb[0].mxu0
      %v524 = vadd.f32 %v228, %v523
      %v525 = vpop.f32.mrb[0].mxu0
      %526 = vmatprep.mubr.bf16.mxu0 0
      %527 = vmatmul.mubr.bf16.gmra.mrb[0].mxu0 %v309
      %v528 = vpop.f32.mrb[0].mxu0
      %v529 = vadd.f32 %v228, %v528
      %v530 = vpop.f32.mrb[0].mxu0
      %v531 = vpop.f32.mrb[0].mxu0
      %v532 = vadd.f32 %v228, %v531
      %v533 = vpop.f32.mrb[0].mxu0
      %534 = vdwg.mxu0
      %vm535 = vcmp.ge.f32.partialorder %v409, 0.0
      %vm536 = vcmp.ge.f32.partialorder %v412, 0.0
      %vm537 = vcmp.ge.f32.partialorder %v417, 0.0
      %vm538 = vcmp.ge.f32.partialorder %v420, 0.0
      %vm539 = vcmp.ge.f32.partialorder %v425, 0.0
      %vm540 = vcmp.ge.f32.partialorder %v428, 0.0
      %vm541 = vcmp.ge.f32.partialorder %v433, 0.0
      %vm542 = vcmp.ge.f32.partialorder %v436, 0.0
      %vm543 = vcmp.ge.f32.partialorder %v441, 0.0
      %vm544 = vcmp.ge.f32.partialorder %v444, 0.0
      %vm545 = vcmp.ge.f32.partialorder %v449, 0.0
      %vm546 = vcmp.ge.f32.partialorder %v452, 0.0
      %vm547 = vcmp.ge.f32.partialorder %v457, 0.0
      %vm548 = vcmp.ge.f32.partialorder %v460, 0.0
      %vm549 = vcmp.ge.f32.partialorder %v465, 0.0
      %vm550 = vcmp.ge.f32.partialorder %v468, 0.0
      %vm551 = vcmp.ge.f32.partialorder %v473, 0.0
      %vm552 = vcmp.ge.f32.partialorder %v476, 0.0
      %vm553 = vcmp.ge.f32.partialorder %v481, 0.0
      %vm554 = vcmp.ge.f32.partialorder %v484, 0.0
      %vm555 = vcmp.ge.f32.partialorder %v489, 0.0
      %vm556 = vcmp.ge.f32.partialorder %v492, 0.0
      %vm557 = vcmp.ge.f32.partialorder %v497, 0.0
      %vm558 = vcmp.ge.f32.partialorder %v500, 0.0
      %vm559 = vcmp.ge.f32.partialorder %v505, 0.0
      %vm560 = vcmp.ge.f32.partialorder %v508, 0.0
      %vm561 = vcmp.ge.f32.partialorder %v513, 0.0
      %vm562 = vcmp.ge.f32.partialorder %v516, 0.0
      %vm563 = vcmp.ge.f32.partialorder %v521, 0.0
      %vm564 = vcmp.ge.f32.partialorder %v524, 0.0
      %vm565 = vcmp.ge.f32.partialorder %v529, 0.0
      %vm566 = vcmp.ge.f32.partialorder %v532, 0.0
      %v567 = vmul.f32 %v409, 0.2
      %v568 = vmul.f32 %v412, 0.2
      %v569 = vmul.f32 %v417, 0.2
      %v570 = vmul.f32 %v420, 0.2
      %v571 = vmul.f32 %v425, 0.2
      %v572 = vmul.f32 %v428, 0.2
      %v573 = vmul.f32 %v433, 0.2
      %v574 = vmul.f32 %v436, 0.2
      %v575 = vmul.f32 %v441, 0.2
      %v576 = vmul.f32 %v444, 0.2
      %v577 = vmul.f32 %v449, 0.2
      %v578 = vmul.f32 %v452, 0.2
      %v579 = vmul.f32 %v457, 0.2
      %v580 = vmul.f32 %v460, 0.2
      %v581 = vmul.f32 %v465, 0.2
      %v582 = vmul.f32 %v468, 0.2
      %v583 = vmul.f32 %v473, 0.2
      %v584 = vmul.f32 %v476, 0.2
      %v585 = vmul.f32 %v481, 0.2
      %v586 = vmul.f32 %v484, 0.2
      %v587 = vmul.f32 %v489, 0.2
      %v588 = vmul.f32 %v492, 0.2
      %v589 = vmul.f32 %v497, 0.2
      %v590 = vmul.f32 %v500, 0.2
      %v591 = vmul.f32 %v505, 0.2
      %v592 = vmul.f32 %v508, 0.2
      %v593 = vmul.f32 %v513, 0.2
      %v594 = vmul.f32 %v516, 0.2
      %v595 = vmul.f32 %v521, 0.2
      %v596 = vmul.f32 %v524, 0.2
      %v597 = vmul.f32 %v529, 0.2
      %v598 = vmul.f32 %v532, 0.2
      %v599 = vsel %vm535, %v409, %v567
      %v600 = vsel %vm536, %v412, %v568
      %v601 = vsel %vm537, %v417, %v569
      %v602 = vsel %vm538, %v420, %v570
      %v603 = vsel %vm539, %v425, %v571
      %v604 = vsel %vm540, %v428, %v572
      %v605 = vsel %vm541, %v433, %v573
      %v606 = vsel %vm542, %v436, %v574
      %v607 = vsel %vm543, %v441, %v575
      %v608 = vsel %vm544, %v444, %v576
      %v609 = vsel %vm545, %v449, %v577
      %v610 = vsel %vm546, %v452, %v578
      %v611 = vsel %vm547, %v457, %v579
      %v612 = vsel %vm548, %v460, %v580
      %v613 = vsel %vm549, %v465, %v581
      %v614 = vsel %vm550, %v468, %v582
      %v615 = vsel %vm551, %v473, %v583
      %v616 = vsel %vm552, %v476, %v584
      %v617 = vsel %vm553, %v481, %v585
      %v618 = vsel %vm554, %v484, %v586
      %v619 = vsel %vm555, %v489, %v587
      %v620 = vsel %vm556, %v492, %v588
      %v621 = vsel %vm557, %v497, %v589
      %v622 = vsel %vm558, %v500, %v590
      %v623 = vsel %vm559, %v505, %v591
      %v624 = vsel %vm560, %v508, %v592
      %v625 = vsel %vm561, %v513, %v593
      %v626 = vsel %vm562, %v516, %v594
      %v627 = vsel %vm563, %v521, %v595
      %v628 = vsel %vm564, %v524, %v596
      %v629 = vsel %vm565, %v529, %v597
      %v630 = vsel %vm566, %v532, %v598
      %v631 = vpack.c.bf16 %v600, %v599
      %v632 = vpack.c.bf16 %v602, %v601
      %v633 = vpack.c.bf16 %v604, %v603
      %v634 = vpack.c.bf16 %v606, %v605
      %v635 = vpack.c.bf16 %v608, %v607
      %v636 = vpack.c.bf16 %v610, %v609
      %v637 = vpack.c.bf16 %v612, %v611
      %v638 = vpack.c.bf16 %v614, %v613
      %v639 = vpack.c.bf16 %v616, %v615
      %v640 = vpack.c.bf16 %v618, %v617
      %v641 = vpack.c.bf16 %v620, %v619
      %v642 = vpack.c.bf16 %v622, %v621
      %v643 = vpack.c.bf16 %v624, %v623
      %v644 = vpack.c.bf16 %v626, %v625
      %v645 = vpack.c.bf16 %v628, %v627
      %v646 = vpack.c.bf16 %v630, %v629
      %v663 = vunpack.c.l.b16 %v631
      %v664 = vunpack.c.h.b16 %v631
      %v665 = vunpack.c.l.b16 %v632
      %v666 = vunpack.c.h.b16 %v632
      %v667 = vunpack.c.l.b16 %v633
      %v668 = vunpack.c.h.b16 %v633
      %v669 = vunpack.c.l.b16 %v634
      %v670 = vunpack.c.h.b16 %v634
      %v671 = vunpack.c.l.b16 %v635
      %v672 = vunpack.c.h.b16 %v635
      %v673 = vunpack.c.l.b16 %v636
      %v674 = vunpack.c.h.b16 %v636
      %v675 = vunpack.c.l.b16 %v637
      %v676 = vunpack.c.h.b16 %v637
      %v677 = vunpack.c.l.b16 %v638
      %v678 = vunpack.c.h.b16 %v638
      %v679 = vunpack.c.l.b16 %v639
      %v680 = vunpack.c.h.b16 %v639
      %v681 = vunpack.c.l.b16 %v640
      %v682 = vunpack.c.h.b16 %v640
      %v683 = vunpack.c.l.b16 %v641
      %v684 = vunpack.c.h.b16 %v641
      %v685 = vunpack.c.l.b16 %v642
      %v686 = vunpack.c.h.b16 %v642
      %v687 = vunpack.c.l.b16 %v643
      %v688 = vunpack.c.h.b16 %v643
      %v689 = vunpack.c.l.b16 %v644
      %v690 = vunpack.c.h.b16 %v644
      %v691 = vunpack.c.l.b16 %v645
      %v692 = vunpack.c.h.b16 %v645
      %v693 = vunpack.c.l.b16 %v646
      %v694 = vunpack.c.h.b16 %v646
      %v695 = vpack.c.b16 %v663, %v663
      %v696 = vpack.c.b16 %v664, %v664
      %v697 = vpack.c.b16 %v665, %v665
      %v698 = vpack.c.b16 %v666, %v666
      %v699 = vpack.c.b16 %v667, %v667
      %v700 = vpack.c.b16 %v668, %v668
      %v701 = vpack.c.b16 %v669, %v669
      %v702 = vpack.c.b16 %v670, %v670
      %v703 = vpack.c.b16 %v671, %v671
      %v704 = vpack.c.b16 %v672, %v672
      %v705 = vpack.c.b16 %v673, %v673
      %v706 = vpack.c.b16 %v674, %v674
      %v707 = vpack.c.b16 %v675, %v675
      %v708 = vpack.c.b16 %v676, %v676
      %v709 = vpack.c.b16 %v677, %v677
      %v710 = vpack.c.b16 %v678, %v678
      %v711 = vpack.c.b16 %v679, %v679
      %v712 = vpack.c.b16 %v680, %v680
      %v713 = vpack.c.b16 %v681, %v681
      %v714 = vpack.c.b16 %v682, %v682
      %v715 = vpack.c.b16 %v683, %v683
      %v716 = vpack.c.b16 %v684, %v684
      %v717 = vpack.c.b16 %v685, %v685
      %v718 = vpack.c.b16 %v686, %v686
      %v719 = vpack.c.b16 %v687, %v687
      %v720 = vpack.c.b16 %v688, %v688
      %v721 = vpack.c.b16 %v689, %v689
      %v722 = vpack.c.b16 %v690, %v690
      %v723 = vpack.c.b16 %v691, %v691
      %v724 = vpack.c.b16 %v692, %v692
      %v725 = vpack.c.b16 %v693, %v693
      %v726 = vpack.c.b16 %v694, %v694
      %759 = vst [vmem:[%s172] sm:$0xf] %v695
      %760 = vst [vmem:[%s172 + $0x4] sm:$0xf] %v696
      %761 = vst [vmem:[%s172 + $0x8] sm:$0xf] %v697
      %762 = vst [vmem:[%s172 + $0xc] sm:$0xf] %v698
      %763 = vst [vmem:[%s172 + $0x10] sm:$0xf] %v699
      %764 = vst [vmem:[%s172 + $0x14] sm:$0xf] %v700
      %765 = vst [vmem:[%s172 + $0x18] sm:$0xf] %v701
      %766 = vst [vmem:[%s172 + $0x1c] sm:$0xf] %v702
      %767 = vst [vmem:[%s172 + $0x20] sm:$0xf] %v703
      %768 = vst [vmem:[%s172 + $0x24] sm:$0xf] %v704
      %769 = vst [vmem:[%s172 + $0x28] sm:$0xf] %v705
      %770 = vst [vmem:[%s172 + $0x2c] sm:$0xf] %v706
      %771 = vst [vmem:[%s172 + $0x30] sm:$0xf] %v707
      %772 = vst [vmem:[%s172 + $0x34] sm:$0xf] %v708
      %773 = vst [vmem:[%s172 + $0x38] sm:$0xf] %v709
      %774 = vst [vmem:[%s172 + $0x3c] sm:$0xf] %v710
      %775 = vst [vmem:[%s172 + $0x40] sm:$0xf] %v711
      %776 = vst [vmem:[%s172 + $0x44] sm:$0xf] %v712
      %777 = vst [vmem:[%s172 + $0x48] sm:$0xf] %v713
      %778 = vst [vmem:[%s172 + $0x4c] sm:$0xf] %v714
      %779 = vst [vmem:[%s172 + $0x50] sm:$0xf] %v715
      %780 = vst [vmem:[%s172 + $0x54] sm:$0xf] %v716
      %781 = vst [vmem:[%s172 + $0x58] sm:$0xf] %v717
      %782 = vst [vmem:[%s172 + $0x5c] sm:$0xf] %v718
      %783 = vst [vmem:[%s172 + $0x60] sm:$0xf] %v719
      %784 = vst [vmem:[%s172 + $0x64] sm:$0xf] %v720
      %785 = vst [vmem:[%s172 + $0x68] sm:$0xf] %v721
      %786 = vst [vmem:[%s172 + $0x6c] sm:$0xf] %v722
      %787 = vst [vmem:[%s172 + $0x70] sm:$0xf] %v723
      %788 = vst [vmem:[%s172 + $0x74] sm:$0xf] %v724
      %789 = vst [vmem:[%s172 + $0x78] sm:$0xf] %v725
      %790 = vst [vmem:[%s172 + $0x7c] sm:$0xf] %v726
      %s791 = smul.u32 32, %s14
      %p792 = scmp.lt.s32.totalorder %s791, 63
      %s793 = scalar_select %p792, %s791, 63
      %s794 = smul.addr %s793, 4
      %s795 = scalar_lea.vmem %s3, %s794
      // Predicated region
      $region33: #{conditional_discriminator.3} parent=31 // pred_check
        %p796 = pneg %p100
      $region34: #{conditional_discriminator.3} parent=31 // pred_check_branch
        %798 = sbr.rel (%p796) target = $region36
      $region35: #{conditional_discriminator.3} parent=31 // pred_region
        %s799 = smul.u32 32, %s14
      $region36: #{conditional_discriminator.3} parent=31 // pred_fallthru
        _
    $region32: #{conditional_discriminator.3} parent=5 // pred_fallthru
      _
    %p800 = scmp.le.s32.totalorder 2, %s9
    // Predicated region
    $region37: #{conditional_discriminator.3} parent=5 // pred_check
      %p801 = pneg %p800
    $region38: #{conditional_discriminator.3} parent=5 // pred_check_branch
      %803 = sbr.rel (%p801) target = $region40
    $region39: #{conditional_discriminator.3} parent=5 // pred_region
      %s804 = ssub.s32 %s9, 2
      // Predicated region
      $region41: #{conditional_discriminator.3} parent=39 // pred_check
        %p805 = pneg %p106
      $region42: #{conditional_discriminator.3} parent=39 // pred_check_branch
        %807 = sbr.rel (%p805) target = $region44
      $region43: #{conditional_discriminator.3} parent=39 // pred_region
        %s808 = smul.u32 32, %s15
        %p809 = scmp.lt.s32.totalorder %s808, 63
        %s810 = scalar_select %p809, %s808, 63
        %s811 = smul.addr %s810, 4
        %s812 = scalar_lea.vmem %s3, %s811
      $region44: #{conditional_discriminator.3} parent=39 // pred_fallthru
        _
    $region40: #{conditional_discriminator.3} parent=5 // pred_fallthru
      _
  $region6: #{conditional_discriminator.3} parent=0 // loop_footer
    %s13 = sadd.s32 1, %s9
  $region7: #{conditional_discriminator.3} parent=0 // loop_footer_branch
    %8 = sbr.rel target = $region3
  $region8: #{conditional_discriminator.3} parent=0 // loop_exit
    _

// kernel: conditional_discriminator.4
$region0: #{conditional_discriminator.4}
  #allocation0 [shape = 'u32[]', space=smem, size = 0x4, offset = 0x4, fixed_abs, tag = 'smem constant byte address 0x4 - core index']
  #allocation1 [shape = 'u32[144,128]{1,0:T(1,128)}', space=vmem, size = 0x12000, scoped, tag = 'internal scratch']
  %s0 = inlined_call_operand.vmem [shape: bf16[128,1024], index: 0, kind: input, shape index: {}]
  %s1 = inlined_call_operand.vmem [shape: bf16[1024,128], index: 1, kind: input, shape index: {}]
  %s2 = inlined_call_operand.vmem [shape: f32[1,128], index: 2, kind: input, shape index: {}]
  %s3 = inlined_call_operand.vmem [shape: f32[1,128], index: 3, kind: input, shape index: {}]
  %s4 = inlined_call_operand.vmem [shape: f32[1,128], index: 4, kind: input, shape index: {}]
  %s5 = inlined_call_operand.vmem [shape: bf16[128,128], index: 5, kind: output, shape index: {}]
  %s6 = sld [smem:[#allocation0]]
  $region30: #{conditional_discriminator.4} parent=0
    _
  %s8 = ssub.s32 1, %s6
  %s9 = scalar_select 0, %s8, %s6
  // Predicated region
  $region2: #{conditional_discriminator.4} parent=0 // pred_check
    _
  $region3: #{conditional_discriminator.4} parent=0 // pred_check_branch
    %11 = sbr.rel (0) target = $region5
  $region4: #{conditional_discriminator.4} parent=0 // pred_region
    _
  $region5: #{conditional_discriminator.4} parent=0 // pred_fallthru
    _
  // Predicated region
  $region6: #{conditional_discriminator.4} parent=0 // pred_check
    _
  $region7: #{conditional_discriminator.4} parent=0 // pred_check_branch
    %13 = sbr.rel (0) target = $region9
  $region8: #{conditional_discriminator.4} parent=0 // pred_region
    _
  $region9: #{conditional_discriminator.4} parent=0 // pred_fallthru
    _
  // Predicated region
  $region10: #{conditional_discriminator.4} parent=0 // pred_check
    _
  $region11: #{conditional_discriminator.4} parent=0 // pred_check_branch
    %15 = sbr.rel (0) target = $region13
  $region12: #{conditional_discriminator.4} parent=0 // pred_region
    _
  $region13: #{conditional_discriminator.4} parent=0 // pred_fallthru
    _
  // Predicated region
  $region14: #{conditional_discriminator.4} parent=0 // pred_check
    _
  $region15: #{conditional_discriminator.4} parent=0 // pred_check_branch
    %17 = sbr.rel (0) target = $region17
  $region16: #{conditional_discriminator.4} parent=0 // pred_region
    _
  $region17: #{conditional_discriminator.4} parent=0 // pred_fallthru
    _
  // Predicated region
  $region18: #{conditional_discriminator.4} parent=0 // pred_check
    _
  $region19: #{conditional_discriminator.4} parent=0 // pred_check_branch
    %19 = sbr.rel (0) target = $region21
  $region20: #{conditional_discriminator.4} parent=0 // pred_region
    _
  $region21: #{conditional_discriminator.4} parent=0 // pred_fallthru
    _
  %v21 = vld [vmem:[%s0] sm:$0xff]
  %v22 = vld [vmem:[%s0 + $0x8] sm:$0xff]
  %v23 = vld [vmem:[%s0 + $0x10] sm:$0xff]
  %v24 = vld [vmem:[%s0 + $0x18] sm:$0xff]
  %v25 = vld [vmem:[%s0 + $0x20] sm:$0xff]
  %v26 = vld [vmem:[%s0 + $0x28] sm:$0xff]
  %v27 = vld [vmem:[%s0 + $0x30] sm:$0xff]
  %v28 = vld [vmem:[%s0 + $0x38] sm:$0xff]
  %v29 = vld [vmem:[%s0 + $0x40] sm:$0xff]
  %v30 = vld [vmem:[%s0 + $0x48] sm:$0xff]
  %v31 = vld [vmem:[%s0 + $0x50] sm:$0xff]
  %v32 = vld [vmem:[%s0 + $0x58] sm:$0xff]
  %v33 = vld [vmem:[%s0 + $0x60] sm:$0xff]
  %v34 = vld [vmem:[%s0 + $0x68] sm:$0xff]
  %v35 = vld [vmem:[%s0 + $0x70] sm:$0xff]
  %v36 = vld [vmem:[%s0 + $0x78] sm:$0xff]
  %v37 = vld [vmem:[%s0 + $0x80] sm:$0xff]
  %v38 = vld [vmem:[%s0 + $0x88] sm:$0xff]
  %v39 = vld [vmem:[%s0 + $0x90] sm:$0xff]
  %v40 = vld [vmem:[%s0 + $0x98] sm:$0xff]
  %v41 = vld [vmem:[%s0 + $0xa0] sm:$0xff]
  %v42 = vld [vmem:[%s0 + $0xa8] sm:$0xff]
  %v43 = vld [vmem:[%s0 + $0xb0] sm:$0xff]
  %v44 = vld [vmem:[%s0 + $0xb8] sm:$0xff]
  %v45 = vld [vmem:[%s0 + $0xc0] sm:$0xff]
  %v46 = vld [vmem:[%s0 + $0xc8] sm:$0xff]
  %v47 = vld [vmem:[%s0 + $0xd0] sm:$0xff]
  %v48 = vld [vmem:[%s0 + $0xd8] sm:$0xff]
  %v49 = vld [vmem:[%s0 + $0xe0] sm:$0xff]
  %v50 = vld [vmem:[%s0 + $0xe8] sm:$0xff]
  %v51 = vld [vmem:[%s0 + $0xf0] sm:$0xff]
  %v52 = vld [vmem:[%s0 + $0xf8] sm:$0xff]
  %v53 = vld [vmem:[%s0 + $0x100] sm:$0xff]
  %v54 = vld [vmem:[%s0 + $0x108] sm:$0xff]
  %v55 = vld [vmem:[%s0 + $0x110] sm:$0xff]
  %v56 = vld [vmem:[%s0 + $0x118] sm:$0xff]
  %v57 = vld [vmem:[%s0 + $0x120] sm:$0xff]
  %v58 = vld [vmem:[%s0 + $0x128] sm:$0xff]
  %v59 = vld [vmem:[%s0 + $0x130] sm:$0xff]
  %v60 = vld [vmem:[%s0 + $0x138] sm:$0xff]
  %v61 = vld [vmem:[%s0 + $0x140] sm:$0xff]
  %v62 = vld [vmem:[%s0 + $0x148] sm:$0xff]
  %v63 = vld [vmem:[%s0 + $0x150] sm:$0xff]
  %v64 = vld [vmem:[%s0 + $0x158] sm:$0xff]
  %v65 = vld [vmem:[%s0 + $0x160] sm:$0xff]
  %v66 = vld [vmem:[%s0 + $0x168] sm:$0xff]
  %v67 = vld [vmem:[%s0 + $0x170] sm:$0xff]
  %v68 = vld [vmem:[%s0 + $0x178] sm:$0xff]
  %v69 = vld [vmem:[%s0 + $0x180] sm:$0xff]
  %v70 = vld [vmem:[%s0 + $0x188] sm:$0xff]
  %v71 = vld [vmem:[%s0 + $0x190] sm:$0xff]
  %v72 = vld [vmem:[%s0 + $0x198] sm:$0xff]
  %v73 = vld [vmem:[%s0 + $0x1a0] sm:$0xff]
  %v74 = vld [vmem:[%s0 + $0x1a8] sm:$0xff]
  %v75 = vld [vmem:[%s0 + $0x1b0] sm:$0xff]
  %v76 = vld [vmem:[%s0 + $0x1b8] sm:$0xff]
  %v77 = vld [vmem:[%s0 + $0x1c0] sm:$0xff]
  %v78 = vld [vmem:[%s0 + $0x1c8] sm:$0xff]
  %v79 = vld [vmem:[%s0 + $0x1d0] sm:$0xff]
  %v80 = vld [vmem:[%s0 + $0x1d8] sm:$0xff]
  %v81 = vld [vmem:[%s0 + $0x1e0] sm:$0xff]
  %v82 = vld [vmem:[%s0 + $0x1e8] sm:$0xff]
  %v83 = vld [vmem:[%s0 + $0x1f0] sm:$0xff]
  %v84 = vld [vmem:[%s0 + $0x1f8] sm:$0xff]
  %v85 = vld [vmem:[%s1] sm:$0xf]
  %v86 = vld [vmem:[%s1 + $0x4] sm:$0xf]
  %v87 = vld [vmem:[%s1 + $0x8] sm:$0xf]
  %v88 = vld [vmem:[%s1 + $0xc] sm:$0xf]
  %v89 = vld [vmem:[%s1 + $0x10] sm:$0xf]
  %v90 = vld [vmem:[%s1 + $0x14] sm:$0xf]
  %v91 = vld [vmem:[%s1 + $0x18] sm:$0xf]
  %v92 = vld [vmem:[%s1 + $0x1c] sm:$0xf]
  %v93 = vld [vmem:[%s1 + $0x20] sm:$0xf]
  %v94 = vld [vmem:[%s1 + $0x24] sm:$0xf]
  %v95 = vld [vmem:[%s1 + $0x28] sm:$0xf]
  %v96 = vld [vmem:[%s1 + $0x2c] sm:$0xf]
  %v97 = vld [vmem:[%s1 + $0x30] sm:$0xf]
  %v98 = vld [vmem:[%s1 + $0x34] sm:$0xf]
  %v99 = vld [vmem:[%s1 + $0x38] sm:$0xf]
  %v100 = vld [vmem:[%s1 + $0x3c] sm:$0xf]
  %v101 = vld [vmem:[%s1 + $0x40] sm:$0xf]
  %v102 = vld [vmem:[%s1 + $0x44] sm:$0xf]
  %v103 = vld [vmem:[%s1 + $0x48] sm:$0xf]
  %v104 = vld [vmem:[%s1 + $0x4c] sm:$0xf]
  %v105 = vld [vmem:[%s1 + $0x50] sm:$0xf]
  %v106 = vld [vmem:[%s1 + $0x54] sm:$0xf]
  %v107 = vld [vmem:[%s1 + $0x58] sm:$0xf]
  %v108 = vld [vmem:[%s1 + $0x5c] sm:$0xf]
  %v109 = vld [vmem:[%s1 + $0x60] sm:$0xf]
  %v110 = vld [vmem:[%s1 + $0x64] sm:$0xf]
  %v111 = vld [vmem:[%s1 + $0x68] sm:$0xf]
  %v112 = vld [vmem:[%s1 + $0x6c] sm:$0xf]
  %v113 = vld [vmem:[%s1 + $0x70] sm:$0xf]
  %v114 = vld [vmem:[%s1 + $0x74] sm:$0xf]
  %v115 = vld [vmem:[%s1 + $0x78] sm:$0xf]
  %v116 = vld [vmem:[%s1 + $0x7c] sm:$0xf]
  %v117 = vld [vmem:[%s1 + $0x80] sm:$0xf]
  %v118 = vld [vmem:[%s1 + $0x84] sm:$0xf]
  %v119 = vld [vmem:[%s1 + $0x88] sm:$0xf]
  %v120 = vld [vmem:[%s1 + $0x8c] sm:$0xf]
  %v121 = vld [vmem:[%s1 + $0x90] sm:$0xf]
  %v122 = vld [vmem:[%s1 + $0x94] sm:$0xf]
  %v123 = vld [vmem:[%s1 + $0x98] sm:$0xf]
  %v124 = vld [vmem:[%s1 + $0x9c] sm:$0xf]
  %v125 = vld [vmem:[%s1 + $0xa0] sm:$0xf]
  %v126 = vld [vmem:[%s1 + $0xa4] sm:$0xf]
  %v127 = vld [vmem:[%s1 + $0xa8] sm:$0xf]
  %v128 = vld [vmem:[%s1 + $0xac] sm:$0xf]
  %v129 = vld [vmem:[%s1 + $0xb0] sm:$0xf]
  %v130 = vld [vmem:[%s1 + $0xb4] sm:$0xf]
  %v131 = vld [vmem:[%s1 + $0xb8] sm:$0xf]
  %v132 = vld [vmem:[%s1 + $0xbc] sm:$0xf]
  %v133 = vld [vmem:[%s1 + $0xc0] sm:$0xf]
  %v134 = vld [vmem:[%s1 + $0xc4] sm:$0xf]
  %v135 = vld [vmem:[%s1 + $0xc8] sm:$0xf]
  %v136 = vld [vmem:[%s1 + $0xcc] sm:$0xf]
  %v137 = vld [vmem:[%s1 + $0xd0] sm:$0xf]
  %v138 = vld [vmem:[%s1 + $0xd4] sm:$0xf]
  %v139 = vld [vmem:[%s1 + $0xd8] sm:$0xf]
  %v140 = vld [vmem:[%s1 + $0xdc] sm:$0xf]
  %v141 = vld [vmem:[%s1 + $0xe0] sm:$0xf]
  %v142 = vld [vmem:[%s1 + $0xe4] sm:$0xf]
  %v143 = vld [vmem:[%s1 + $0xe8] sm:$0xf]
  %v144 = vld [vmem:[%s1 + $0xec] sm:$0xf]
  %v145 = vld [vmem:[%s1 + $0xf0] sm:$0xf]
  %v146 = vld [vmem:[%s1 + $0xf4] sm:$0xf]
  %v147 = vld [vmem:[%s1 + $0xf8] sm:$0xf]
  %v148 = vld [vmem:[%s1 + $0xfc] sm:$0xf]
  %v149 = vld [vmem:[%s1 + $0x100] sm:$0xf]
  %v150 = vld [vmem:[%s1 + $0x104] sm:$0xf]
  %v151 = vld [vmem:[%s1 + $0x108] sm:$0xf]
  %v152 = vld [vmem:[%s1 + $0x10c] sm:$0xf]
  %v153 = vld [vmem:[%s1 + $0x110] sm:$0xf]
  %v154 = vld [vmem:[%s1 + $0x114] sm:$0xf]
  %v155 = vld [vmem:[%s1 + $0x118] sm:$0xf]
  %v156 = vld [vmem:[%s1 + $0x11c] sm:$0xf]
  %v157 = vld [vmem:[%s1 + $0x120] sm:$0xf]
  %v158 = vld [vmem:[%s1 + $0x124] sm:$0xf]
  %v159 = vld [vmem:[%s1 + $0x128] sm:$0xf]
  %v160 = vld [vmem:[%s1 + $0x12c] sm:$0xf]
  %v161 = vld [vmem:[%s1 + $0x130] sm:$0xf]
  %v162 = vld [vmem:[%s1 + $0x134] sm:$0xf]
  %v163 = vld [vmem:[%s1 + $0x138] sm:$0xf]
  %v164 = vld [vmem:[%s1 + $0x13c] sm:$0xf]
  %v165 = vld [vmem:[%s1 + $0x140] sm:$0xf]
  %v166 = vld [vmem:[%s1 + $0x144] sm:$0xf]
  %v167 = vld [vmem:[%s1 + $0x148] sm:$0xf]
  %v168 = vld [vmem:[%s1 + $0x14c] sm:$0xf]
  %v169 = vld [vmem:[%s1 + $0x150] sm:$0xf]
  %v170 = vld [vmem:[%s1 + $0x154] sm:$0xf]
  %v171 = vld [vmem:[%s1 + $0x158] sm:$0xf]
  %v172 = vld [vmem:[%s1 + $0x15c] sm:$0xf]
  %v173 = vld [vmem:[%s1 + $0x160] sm:$0xf]
  %v174 = vld [vmem:[%s1 + $0x164] sm:$0xf]
  %v175 = vld [vmem:[%s1 + $0x168] sm:$0xf]
  %v176 = vld [vmem:[%s1 + $0x16c] sm:$0xf]
  %v177 = vld [vmem:[%s1 + $0x170] sm:$0xf]
  %v178 = vld [vmem:[%s1 + $0x174] sm:$0xf]
  %v179 = vld [vmem:[%s1 + $0x178] sm:$0xf]
  %v180 = vld [vmem:[%s1 + $0x17c] sm:$0xf]
  %v181 = vld [vmem:[%s1 + $0x180] sm:$0xf]
  %v182 = vld [vmem:[%s1 + $0x184] sm:$0xf]
  %v183 = vld [vmem:[%s1 + $0x188] sm:$0xf]
  %v184 = vld [vmem:[%s1 + $0x18c] sm:$0xf]
  %v185 = vld [vmem:[%s1 + $0x190] sm:$0xf]
  %v186 = vld [vmem:[%s1 + $0x194] sm:$0xf]
  %v187 = vld [vmem:[%s1 + $0x198] sm:$0xf]
  %v188 = vld [vmem:[%s1 + $0x19c] sm:$0xf]
  %v189 = vld [vmem:[%s1 + $0x1a0] sm:$0xf]
  %v190 = vld [vmem:[%s1 + $0x1a4] sm:$0xf]
  %v191 = vld [vmem:[%s1 + $0x1a8] sm:$0xf]
  %v192 = vld [vmem:[%s1 + $0x1ac] sm:$0xf]
  %v193 = vld [vmem:[%s1 + $0x1b0] sm:$0xf]
  %v194 = vld [vmem:[%s1 + $0x1b4] sm:$0xf]
  %v195 = vld [vmem:[%s1 + $0x1b8] sm:$0xf]
  %v196 = vld [vmem:[%s1 + $0x1bc] sm:$0xf]
  %v197 = vld [vmem:[%s1 + $0x1c0] sm:$0xf]
  %v198 = vld [vmem:[%s1 + $0x1c4] sm:$0xf]
  %v199 = vld [vmem:[%s1 + $0x1c8] sm:$0xf]
  %v200 = vld [vmem:[%s1 + $0x1cc] sm:$0xf]
  %v201 = vld [vmem:[%s1 + $0x1d0] sm:$0xf]
  %v202 = vld [vmem:[%s1 + $0x1d4] sm:$0xf]
  %v203 = vld [vmem:[%s1 + $0x1d8] sm:$0xf]
  %v204 = vld [vmem:[%s1 + $0x1dc] sm:$0xf]
  %v205 = vld [vmem:[%s1 + $0x1e0] sm:$0xf]
  %v206 = vld [vmem:[%s1 + $0x1e4] sm:$0xf]
  %v207 = vld [vmem:[%s1 + $0x1e8] sm:$0xf]
  %v208 = vld [vmem:[%s1 + $0x1ec] sm:$0xf]
  %v209 = vld [vmem:[%s1 + $0x1f0] sm:$0xf]
  %v210 = vld [vmem:[%s1 + $0x1f4] sm:$0xf]
  %v211 = vld [vmem:[%s1 + $0x1f8] sm:$0xf]
  %v212 = vld [vmem:[%s1 + $0x1fc] sm:$0xf]
  %v213 = vld [vmem:[%s2] sm:$0x1]
  %v215 = vlaneseq
  %v216 = vshrl.u32 %v215, 7
  %v217 = vsub.s32 0, %v216
  %v218 = vrot.slane %v213, %v217
  %v284 = vunpack.c.l.b16 %v21
  %v285 = vunpack.c.h.b16 %v21
  %v286 = vunpack.c.l.b16 %v22
  %v287 = vunpack.c.h.b16 %v22
  %v288 = vunpack.c.l.b16 %v23
  %v289 = vunpack.c.h.b16 %v23
  %v290 = vunpack.c.l.b16 %v24
  %v291 = vunpack.c.h.b16 %v24
  %v292 = vunpack.c.l.b16 %v25
  %v293 = vunpack.c.h.b16 %v25
  %v294 = vunpack.c.l.b16 %v26
  %v295 = vunpack.c.h.b16 %v26
  %v296 = vunpack.c.l.b16 %v27
  %v297 = vunpack.c.h.b16 %v27
  %v298 = vunpack.c.l.b16 %v28
  %v299 = vunpack.c.h.b16 %v28
  %v300 = vunpack.c.l.b16 %v29
  %v301 = vunpack.c.h.b16 %v29
  %v302 = vunpack.c.l.b16 %v30
  %v303 = vunpack.c.h.b16 %v30
  %v304 = vunpack.c.l.b16 %v31
  %v305 = vunpack.c.h.b16 %v31
  %v306 = vunpack.c.l.b16 %v32
  %v307 = vunpack.c.h.b16 %v32
  %v308 = vunpack.c.l.b16 %v33
  %v309 = vunpack.c.h.b16 %v33
  %v310 = vunpack.c.l.b16 %v34
  %v311 = vunpack.c.h.b16 %v34
  %v312 = vunpack.c.l.b16 %v35
  %v313 = vunpack.c.h.b16 %v35
  %v314 = vunpack.c.l.b16 %v36
  %v315 = vunpack.c.h.b16 %v36
  %v316 = vunpack.c.l.b16 %v37
  %v317 = vunpack.c.h.b16 %v37
  %v318 = vunpack.c.l.b16 %v38
  %v319 = vunpack.c.h.b16 %v38
  %v320 = vunpack.c.l.b16 %v39
  %v321 = vunpack.c.h.b16 %v39
  %v322 = vunpack.c.l.b16 %v40
  %v323 = vunpack.c.h.b16 %v40
  %v324 = vunpack.c.l.b16 %v41
  %v325 = vunpack.c.h.b16 %v41
  %v326 = vunpack.c.l.b16 %v42
  %v327 = vunpack.c.h.b16 %v42
  %v328 = vunpack.c.l.b16 %v43
  %v329 = vunpack.c.h.b16 %v43
  %v330 = vunpack.c.l.b16 %v44
  %v331 = vunpack.c.h.b16 %v44
  %v332 = vunpack.c.l.b16 %v45
  %v333 = vunpack.c.h.b16 %v45
  %v334 = vunpack.c.l.b16 %v46
  %v335 = vunpack.c.h.b16 %v46
  %v336 = vunpack.c.l.b16 %v47
  %v337 = vunpack.c.h.b16 %v47
  %v338 = vunpack.c.l.b16 %v48
  %v339 = vunpack.c.h.b16 %v48
  %v340 = vunpack.c.l.b16 %v49
  %v341 = vunpack.c.h.b16 %v49
  %v342 = vunpack.c.l.b16 %v50
  %v343 = vunpack.c.h.b16 %v50
  %v344 = vunpack.c.l.b16 %v51
  %v345 = vunpack.c.h.b16 %v51
  %v346 = vunpack.c.l.b16 %v52
  %v347 = vunpack.c.h.b16 %v52
  %v348 = vunpack.c.l.b16 %v53
  %v349 = vunpack.c.h.b16 %v53
  %v350 = vunpack.c.l.b16 %v54
  %v351 = vunpack.c.h.b16 %v54
  %v352 = vunpack.c.l.b16 %v55
  %v353 = vunpack.c.h.b16 %v55
  %v354 = vunpack.c.l.b16 %v56
  %v355 = vunpack.c.h.b16 %v56
  %v356 = vunpack.c.l.b16 %v57
  %v357 = vunpack.c.h.b16 %v57
  %v358 = vunpack.c.l.b16 %v58
  %v359 = vunpack.c.h.b16 %v58
  %v360 = vunpack.c.l.b16 %v59
  %v361 = vunpack.c.h.b16 %v59
  %v362 = vunpack.c.l.b16 %v60
  %v363 = vunpack.c.h.b16 %v60
  %v364 = vunpack.c.l.b16 %v61
  %v365 = vunpack.c.h.b16 %v61
  %v366 = vunpack.c.l.b16 %v62
  %v367 = vunpack.c.h.b16 %v62
  %v368 = vunpack.c.l.b16 %v63
  %v369 = vunpack.c.h.b16 %v63
  %v370 = vunpack.c.l.b16 %v64
  %v371 = vunpack.c.h.b16 %v64
  %v372 = vunpack.c.l.b16 %v65
  %v373 = vunpack.c.h.b16 %v65
  %v374 = vunpack.c.l.b16 %v66
  %v375 = vunpack.c.h.b16 %v66
  %v376 = vunpack.c.l.b16 %v67
  %v377 = vunpack.c.h.b16 %v67
  %v378 = vunpack.c.l.b16 %v68
  %v379 = vunpack.c.h.b16 %v68
  %v380 = vunpack.c.l.b16 %v69
  %v381 = vunpack.c.h.b16 %v69
  %v382 = vunpack.c.l.b16 %v70
  %v383 = vunpack.c.h.b16 %v70
  %v384 = vunpack.c.l.b16 %v71
  %v385 = vunpack.c.h.b16 %v71
  %v386 = vunpack.c.l.b16 %v72
  %v387 = vunpack.c.h.b16 %v72
  %v388 = vunpack.c.l.b16 %v73
  %v389 = vunpack.c.h.b16 %v73
  %v390 = vunpack.c.l.b16 %v74
  %v391 = vunpack.c.h.b16 %v74
  %v392 = vunpack.c.l.b16 %v75
  %v393 = vunpack.c.h.b16 %v75
  %v394 = vunpack.c.l.b16 %v76
  %v395 = vunpack.c.h.b16 %v76
  %v396 = vunpack.c.l.b16 %v77
  %v397 = vunpack.c.h.b16 %v77
  %v398 = vunpack.c.l.b16 %v78
  %v399 = vunpack.c.h.b16 %v78
  %v400 = vunpack.c.l.b16 %v79
  %v401 = vunpack.c.h.b16 %v79
  %v402 = vunpack.c.l.b16 %v80
  %v403 = vunpack.c.h.b16 %v80
  %v404 = vunpack.c.l.b16 %v81
  %v405 = vunpack.c.h.b16 %v81
  %v406 = vunpack.c.l.b16 %v82
  %v407 = vunpack.c.h.b16 %v82
  %v408 = vunpack.c.l.b16 %v83
  %v409 = vunpack.c.h.b16 %v83
  %v410 = vunpack.c.l.b16 %v84
  %v411 = vunpack.c.h.b16 %v84
  %v412 = vpack.c.b16 %v292, %v284
  %v413 = vpack.c.b16 %v293, %v285
  %v414 = vpack.c.b16 %v294, %v286
  %v415 = vpack.c.b16 %v295, %v287
  %v416 = vpack.c.b16 %v296, %v288
  %v417 = vpack.c.b16 %v297, %v289
  %v418 = vpack.c.b16 %v298, %v290
  %v419 = vpack.c.b16 %v299, %v291
  %v420 = vpack.c.b16 %v308, %v300
  %v421 = vpack.c.b16 %v309, %v301
  %v422 = vpack.c.b16 %v310, %v302
  %v423 = vpack.c.b16 %v311, %v303
  %v424 = vpack.c.b16 %v312, %v304
  %v425 = vpack.c.b16 %v313, %v305
  %v426 = vpack.c.b16 %v314, %v306
  %v427 = vpack.c.b16 %v315, %v307
  %v428 = vpack.c.b16 %v324, %v316
  %v429 = vpack.c.b16 %v325, %v317
  %v430 = vpack.c.b16 %v326, %v318
  %v431 = vpack.c.b16 %v327, %v319
  %v432 = vpack.c.b16 %v328, %v320
  %v433 = vpack.c.b16 %v329, %v321
  %v434 = vpack.c.b16 %v330, %v322
  %v435 = vpack.c.b16 %v331, %v323
  %v436 = vpack.c.b16 %v340, %v332
  %v437 = vpack.c.b16 %v341, %v333
  %v438 = vpack.c.b16 %v342, %v334
  %v439 = vpack.c.b16 %v343, %v335
  %v440 = vpack.c.b16 %v344, %v336
  %v441 = vpack.c.b16 %v345, %v337
  %v442 = vpack.c.b16 %v346, %v338
  %v443 = vpack.c.b16 %v347, %v339
  %v444 = vpack.c.b16 %v356, %v348
  %v445 = vpack.c.b16 %v357, %v349
  %v446 = vpack.c.b16 %v358, %v350
  %v447 = vpack.c.b16 %v359, %v351
  %v448 = vpack.c.b16 %v360, %v352
  %v449 = vpack.c.b16 %v361, %v353
  %v450 = vpack.c.b16 %v362, %v354
  %v451 = vpack.c.b16 %v363, %v355
  %v452 = vpack.c.b16 %v372, %v364
  %v453 = vpack.c.b16 %v373, %v365
  %v454 = vpack.c.b16 %v374, %v366
  %v455 = vpack.c.b16 %v375, %v367
  %v456 = vpack.c.b16 %v376, %v368
  %v457 = vpack.c.b16 %v377, %v369
  %v458 = vpack.c.b16 %v378, %v370
  %v459 = vpack.c.b16 %v379, %v371
  %v460 = vpack.c.b16 %v388, %v380
  %v461 = vpack.c.b16 %v389, %v381
  %v462 = vpack.c.b16 %v390, %v382
  %v463 = vpack.c.b16 %v391, %v383
  %v464 = vpack.c.b16 %v392, %v384
  %v465 = vpack.c.b16 %v393, %v385
  %v466 = vpack.c.b16 %v394, %v386
  %v467 = vpack.c.b16 %v395, %v387
  %v468 = vpack.c.b16 %v404, %v396
  %v469 = vpack.c.b16 %v405, %v397
  %v470 = vpack.c.b16 %v406, %v398
  %v471 = vpack.c.b16 %v407, %v399
  %v472 = vpack.c.b16 %v408, %v400
  %v473 = vpack.c.b16 %v409, %v401
  %v474 = vpack.c.b16 %v410, %v402
  %v475 = vpack.c.b16 %v411, %v403
  %v668 = vunpack.c.l.b16 %v85
  %v669 = vunpack.c.l.b16 %v86
  %v670 = vunpack.c.l.b16 %v87
  %v671 = vunpack.c.l.b16 %v88
  %v672 = vunpack.c.l.b16 %v89
  %v673 = vunpack.c.l.b16 %v90
  %v674 = vunpack.c.l.b16 %v91
  %v675 = vunpack.c.l.b16 %v92
  %v676 = vunpack.c.l.b16 %v93
  %v677 = vunpack.c.l.b16 %v94
  %v678 = vunpack.c.l.b16 %v95
  %v679 = vunpack.c.l.b16 %v96
  %v680 = vunpack.c.l.b16 %v97
  %v681 = vunpack.c.l.b16 %v98
  %v682 = vunpack.c.l.b16 %v99
  %v683 = vunpack.c.l.b16 %v100
  %v684 = vunpack.c.l.b16 %v101
  %v685 = vunpack.c.l.b16 %v102
  %v686 = vunpack.c.l.b16 %v103
  %v687 = vunpack.c.l.b16 %v104
  %v688 = vunpack.c.l.b16 %v105
  %v689 = vunpack.c.l.b16 %v106
  %v690 = vunpack.c.l.b16 %v107
  %v691 = vunpack.c.l.b16 %v108
  %v692 = vunpack.c.l.b16 %v109
  %v693 = vunpack.c.l.b16 %v110
  %v694 = vunpack.c.l.b16 %v111
  %v695 = vunpack.c.l.b16 %v112
  %v696 = vunpack.c.l.b16 %v113
  %v697 = vunpack.c.l.b16 %v114
  %v698 = vunpack.c.l.b16 %v115
  %v699 = vunpack.c.l.b16 %v116
  %v700 = vunpack.c.l.b16 %v117
  %v701 = vunpack.c.l.b16 %v118
  %v702 = vunpack.c.l.b16 %v119
  %v703 = vunpack.c.l.b16 %v120
  %v704 = vunpack.c.l.b16 %v121
  %v705 = vunpack.c.l.b16 %v122
  %v706 = vunpack.c.l.b16 %v123
  %v707 = vunpack.c.l.b16 %v124
  %v708 = vunpack.c.l.b16 %v125
  %v709 = vunpack.c.l.b16 %v126
  %v710 = vunpack.c.l.b16 %v127
  %v711 = vunpack.c.l.b16 %v128
  %v712 = vunpack.c.l.b16 %v129
  %v713 = vunpack.c.l.b16 %v130
  %v714 = vunpack.c.l.b16 %v131
  %v715 = vunpack.c.l.b16 %v132
  %v716 = vunpack.c.l.b16 %v133
  %v717 = vunpack.c.l.b16 %v134
  %v718 = vunpack.c.l.b16 %v135
  %v719 = vunpack.c.l.b16 %v136
  %v720 = vunpack.c.l.b16 %v137
  %v721 = vunpack.c.l.b16 %v138
  %v722 = vunpack.c.l.b16 %v139
  %v723 = vunpack.c.l.b16 %v140
  %v724 = vunpack.c.l.b16 %v141
  %v725 = vunpack.c.l.b16 %v142
  %v726 = vunpack.c.l.b16 %v143
  %v727 = vunpack.c.l.b16 %v144
  %v728 = vunpack.c.l.b16 %v145
  %v729 = vunpack.c.l.b16 %v146
  %v730 = vunpack.c.l.b16 %v147
  %v731 = vunpack.c.l.b16 %v148
  %v732 = vunpack.c.l.b16 %v149
  %v733 = vunpack.c.l.b16 %v150
  %v734 = vunpack.c.l.b16 %v151
  %v735 = vunpack.c.l.b16 %v152
  %v736 = vunpack.c.l.b16 %v153
  %v737 = vunpack.c.l.b16 %v154
  %v738 = vunpack.c.l.b16 %v155
  %v739 = vunpack.c.l.b16 %v156
  %v740 = vunpack.c.l.b16 %v157
  %v741 = vunpack.c.l.b16 %v158
  %v742 = vunpack.c.l.b16 %v159
  %v743 = vunpack.c.l.b16 %v160
  %v744 = vunpack.c.l.b16 %v161
  %v745 = vunpack.c.l.b16 %v162
  %v746 = vunpack.c.l.b16 %v163
  %v747 = vunpack.c.l.b16 %v164
  %v748 = vunpack.c.l.b16 %v165
  %v749 = vunpack.c.l.b16 %v166
  %v750 = vunpack.c.l.b16 %v167
  %v751 = vunpack.c.l.b16 %v168
  %v752 = vunpack.c.l.b16 %v169
  %v753 = vunpack.c.l.b16 %v170
  %v754 = vunpack.c.l.b16 %v171
  %v755 = vunpack.c.l.b16 %v172
  %v756 = vunpack.c.l.b16 %v173
  %v757 = vunpack.c.l.b16 %v174
  %v758 = vunpack.c.l.b16 %v175
  %v759 = vunpack.c.l.b16 %v176
  %v760 = vunpack.c.l.b16 %v177
  %v761 = vunpack.c.l.b16 %v178
  %v762 = vunpack.c.l.b16 %v179
  %v763 = vunpack.c.l.b16 %v180
  %v764 = vunpack.c.l.b16 %v181
  %v765 = vunpack.c.l.b16 %v182
  %v766 = vunpack.c.l.b16 %v183
  %v767 = vunpack.c.l.b16 %v184
  %v768 = vunpack.c.l.b16 %v185
  %v769 = vunpack.c.l.b16 %v186
  %v770 = vunpack.c.l.b16 %v187
  %v771 = vunpack.c.l.b16 %v188
  %v772 = vunpack.c.l.b16 %v189
  %v773 = vunpack.c.l.b16 %v190
  %v774 = vunpack.c.l.b16 %v191
  %v775 = vunpack.c.l.b16 %v192
  %v776 = vunpack.c.l.b16 %v193
  %v777 = vunpack.c.l.b16 %v194
  %v778 = vunpack.c.l.b16 %v195
  %v779 = vunpack.c.l.b16 %v196
  %v780 = vunpack.c.l.b16 %v197
  %v781 = vunpack.c.l.b16 %v198
  %v782 = vunpack.c.l.b16 %v199
  %v783 = vunpack.c.l.b16 %v200
  %v784 = vunpack.c.l.b16 %v201
  %v785 = vunpack.c.l.b16 %v202
  %v786 = vunpack.c.l.b16 %v203
  %v787 = vunpack.c.l.b16 %v204
  %v788 = vunpack.c.l.b16 %v205
  %v789 = vunpack.c.l.b16 %v206
  %v790 = vunpack.c.l.b16 %v207
  %v791 = vunpack.c.l.b16 %v208
  %v792 = vunpack.c.l.b16 %v209
  %v793 = vunpack.c.l.b16 %v210
  %v794 = vunpack.c.l.b16 %v211
  %v795 = vunpack.c.l.b16 %v212
  %v796 = vpack.c.b16 %v669, %v668
  %v797 = vpack.c.b16 %v671, %v670
  %v798 = vpack.c.b16 %v673, %v672
  %v799 = vpack.c.b16 %v675, %v674
  %v800 = vpack.c.b16 %v677, %v676
  %v801 = vpack.c.b16 %v679, %v678
  %v802 = vpack.c.b16 %v681, %v680
  %v803 = vpack.c.b16 %v683, %v682
  %v804 = vpack.c.b16 %v685, %v684
  %v805 = vpack.c.b16 %v687, %v686
  %v806 = vpack.c.b16 %v689, %v688
  %v807 = vpack.c.b16 %v691, %v690
  %v808 = vpack.c.b16 %v693, %v692
  %v809 = vpack.c.b16 %v695, %v694
  %v810 = vpack.c.b16 %v697, %v696
  %v811 = vpack.c.b16 %v699, %v698
  %v812 = vpack.c.b16 %v701, %v700
  %v813 = vpack.c.b16 %v703, %v702
  %v814 = vpack.c.b16 %v705, %v704
  %v815 = vpack.c.b16 %v707, %v706
  %v816 = vpack.c.b16 %v709, %v708
  %v817 = vpack.c.b16 %v711, %v710
  %v818 = vpack.c.b16 %v713, %v712
  %v819 = vpack.c.b16 %v715, %v714
  %v820 = vpack.c.b16 %v717, %v716
  %v821 = vpack.c.b16 %v719, %v718
  %v822 = vpack.c.b16 %v721, %v720
  %v823 = vpack.c.b16 %v723, %v722
  %v824 = vpack.c.b16 %v725, %v724
  %v825 = vpack.c.b16 %v727, %v726
  %v826 = vpack.c.b16 %v729, %v728
  %v827 = vpack.c.b16 %v731, %v730
  %v828 = vpack.c.b16 %v733, %v732
  %v829 = vpack.c.b16 %v735, %v734
  %v830 = vpack.c.b16 %v737, %v736
  %v831 = vpack.c.b16 %v739, %v738
  %v832 = vpack.c.b16 %v741, %v740
  %v833 = vpack.c.b16 %v743, %v742
  %v834 = vpack.c.b16 %v745, %v744
  %v835 = vpack.c.b16 %v747, %v746
  %v836 = vpack.c.b16 %v749, %v748
  %v837 = vpack.c.b16 %v751, %v750
  %v838 = vpack.c.b16 %v753, %v752
  %v839 = vpack.c.b16 %v755, %v754
  %v840 = vpack.c.b16 %v757, %v756
  %v841 = vpack.c.b16 %v759, %v758
  %v842 = vpack.c.b16 %v761, %v760
  %v843 = vpack.c.b16 %v763, %v762
  %v844 = vpack.c.b16 %v765, %v764
  %v845 = vpack.c.b16 %v767, %v766
  %v846 = vpack.c.b16 %v769, %v768
  %v847 = vpack.c.b16 %v771, %v770
  %v848 = vpack.c.b16 %v773, %v772
  %v849 = vpack.c.b16 %v775, %v774
  %v850 = vpack.c.b16 %v777, %v776
  %v851 = vpack.c.b16 %v779, %v778
  %v852 = vpack.c.b16 %v781, %v780
  %v853 = vpack.c.b16 %v783, %v782
  %v854 = vpack.c.b16 %v785, %v784
  %v855 = vpack.c.b16 %v787, %v786
  %v856 = vpack.c.b16 %v789, %v788
  %v857 = vpack.c.b16 %v791, %v790
  %v858 = vpack.c.b16 %v793, %v792
  %v859 = vpack.c.b16 %v795, %v794
  %924 = vmatprep.subr.bf16.mxu0 0
  %925 = vmatpush1.bf16.msra.mxu0 %v796
  %926 = vmatprep.subr.bf16.mxu0 0
  %927 = vmatpush1.bf16.msra.mxu0 %v797
  %928 = vmatprep.subr.bf16.mxu0 0
  %929 = vmatpush1.bf16.msra.mxu0 %v798
  %930 = vmatprep.subr.bf16.mxu0 0
  %931 = vmatpush1.bf16.msra.mxu0 %v799
  %932 = vmatprep.subr.bf16.mxu0 0
  %933 = vmatpush1.bf16.msra.mxu0 %v800
  %934 = vmatprep.subr.bf16.mxu0 0
  %935 = vmatpush1.bf16.msra.mxu0 %v801
  %936 = vmatprep.subr.bf16.mxu0 0
  %937 = vmatpush1.bf16.msra.mxu0 %v802
  %938 = vmatprep.subr.bf16.mxu0 0
  %939 = vmatpush1.bf16.msra.mxu0 %v803
  %940 = vmatprep.subr.bf16.mxu0 0
  %941 = vmatpush1.bf16.msra.mxu0 %v804
  %942 = vmatprep.subr.bf16.mxu0 0
  %943 = vmatpush1.bf16.msra.mxu0 %v805
  %944 = vmatprep.subr.bf16.mxu0 0
  %945 = vmatpush1.bf16.msra.mxu0 %v806
  %946 = vmatprep.subr.bf16.mxu0 0
  %947 = vmatpush1.bf16.msra.mxu0 %v807
  %948 = vmatprep.subr.bf16.mxu0 0
  %949 = vmatpush1.bf16.msra.mxu0 %v808
  %950 = vmatprep.subr.bf16.mxu0 0
  %951 = vmatpush1.bf16.msra.mxu0 %v809
  %952 = vmatprep.subr.bf16.mxu0 0
  %953 = vmatpush1.bf16.msra.mxu0 %v810
  %954 = vmatprep.subr.bf16.mxu0 0
  %955 = vmatpush1.bf16.msra.mxu0 %v811
  %956 = vmatprep.mubr.bf16.mxu0 %v413
  %957 = vmatmul.mubr.bf16.gmra.mrb[0].mxu0 %v412
  %v958 = vpop.f32.mrb[0].mxu0
  %v959 = vadd.f32 %v218, %v958
  %v960 = vpop.f32.mrb[0].mxu0
  %v961 = vpop.f32.mrb[0].mxu0
  %v962 = vadd.f32 %v218, %v961
  %v963 = vpop.f32.mrb[0].mxu0
  %964 = vmatprep.mubr.bf16.mxu0 %v421
  %965 = vmatmul.mubr.bf16.gmra.mrb[0].mxu0 %v420
  %v966 = vpop.f32.mrb[0].mxu0
  %v967 = vadd.f32 %v218, %v966
  %v968 = vpop.f32.mrb[0].mxu0
  %v969 = vpop.f32.mrb[0].mxu0
  %v970 = vadd.f32 %v218, %v969
  %v971 = vpop.f32.mrb[0].mxu0
  %972 = vmatprep.mubr.bf16.mxu0 %v429
  %973 = vmatmul.mubr.bf16.gmra.mrb[0].mxu0 %v428
  %v974 = vpop.f32.mrb[0].mxu0
  %v975 = vadd.f32 %v218, %v974
  %v976 = vpop.f32.mrb[0].mxu0
  %v977 = vpop.f32.mrb[0].mxu0
  %v978 = vadd.f32 %v218, %v977
  %v979 = vpop.f32.mrb[0].mxu0
  %980 = vmatprep.mubr.bf16.mxu0 %v437
  %981 = vmatmul.mubr.bf16.gmra.mrb[0].mxu0 %v436
  %v982 = vpop.f32.mrb[0].mxu0
  %v983 = vadd.f32 %v218, %v982
  %v984 = vpop.f32.mrb[0].mxu0
  %v985 = vpop.f32.mrb[0].mxu0
  %v986 = vadd.f32 %v218, %v985
  %v987 = vpop.f32.mrb[0].mxu0
  %988 = vmatprep.mubr.bf16.mxu0 %v445
  %989 = vmatmul.mubr.bf16.gmra.mrb[0].mxu0 %v444
  %v990 = vpop.f32.mrb[0].mxu0
  %v991 = vadd.f32 %v218, %v990
  %v992 = vpop.f32.mrb[0].mxu0
  %v993 = vpop.f32.mrb[0].mxu0
  %v994 = vadd.f32 %v218, %v993
  %v995 = vpop.f32.mrb[0].mxu0
  %996 = vmatprep.mubr.bf16.mxu0 %v453
  %997 = vmatmul.mubr.bf16.gmra.mrb[0].mxu0 %v452
  %v998 = vpop.f32.mrb[0].mxu0
  %v999 = vadd.f32 %v218, %v998
  %v1000 = vpop.f32.mrb[0].mxu0
  %v1001 = vpop.f32.mrb[0].mxu0
  %v1002 = vadd.f32 %v218, %v1001
  %v1003 = vpop.f32.mrb[0].mxu0
  %1004 = vmatprep.mubr.bf16.mxu0 %v461
  %1005 = vmatmul.mubr.bf16.gmra.mrb[0].mxu0 %v460
  %v1006 = vpop.f32.mrb[0].mxu0
  %v1007 = vadd.f32 %v218, %v1006
  %v1008 = vpop.f32.mrb[0].mxu0
  %v1009 = vpop.f32.mrb[0].mxu0
  %v1010 = vadd.f32 %v218, %v1009
  %v1011 = vpop.f32.mrb[0].mxu0
  %1012 = vmatprep.mubr.bf16.mxu0 %v469
  %1013 = vmatmul.mubr.bf16.gmra.mrb[0].mxu0 %v468
  %v1014 = vpop.f32.mrb[0].mxu0
  %v1015 = vadd.f32 %v218, %v1014
  %v1016 = vpop.f32.mrb[0].mxu0
  %v1017 = vpop.f32.mrb[0].mxu0
  %v1018 = vadd.f32 %v218, %v1017
  %v1019 = vpop.f32.mrb[0].mxu0
  %1020 = vdwg.mxu0
  %1021 = vmatprep.subr.bf16.mxu0 0
  %1022 = vmatpush1.bf16.msra.mxu0 %v812
  %1023 = vmatprep.subr.bf16.mxu0 0
  %1024 = vmatpush1.bf16.msra.mxu0 %v813
  %1025 = vmatprep.subr.bf16.mxu0 0
  %1026 = vmatpush1.bf16.msra.mxu0 %v814
  %1027 = vmatprep.subr.bf16.mxu0 0
  %1028 = vmatpush1.bf16.msra.mxu0 %v815
  %1029 = vmatprep.subr.bf16.mxu0 0
  %1030 = vmatpush1.bf16.msra.mxu0 %v816
  %1031 = vmatprep.subr.bf16.mxu0 0
  %1032 = vmatpush1.bf16.msra.mxu0 %v817
  %1033 = vmatprep.subr.bf16.mxu0 0
  %1034 = vmatpush1.bf16.msra.mxu0 %v818
  %1035 = vmatprep.subr.bf16.mxu0 0
  %1036 = vmatpush1.bf16.msra.mxu0 %v819
  %1037 = vmatprep.subr.bf16.mxu0 0
  %1038 = vmatpush1.bf16.msra.mxu0 %v820
  %1039 = vmatprep.subr.bf16.mxu0 0
  %1040 = vmatpush1.bf16.msra.mxu0 %v821
  %1041 = vmatprep.subr.bf16.mxu0 0
  %1042 = vmatpush1.bf16.msra.mxu0 %v822
  %1043 = vmatprep.subr.bf16.mxu0 0
  %1044 = vmatpush1.bf16.msra.mxu0 %v823
  %1045 = vmatprep.subr.bf16.mxu0 0
  %1046 = vmatpush1.bf16.msra.mxu0 %v824
  %1047 = vmatprep.subr.bf16.mxu0 0
  %1048 = vmatpush1.bf16.msra.mxu0 %v825
  %1049 = vmatprep.subr.bf16.mxu0 0
  %1050 = vmatpush1.bf16.msra.mxu0 %v826
  %1051 = vmatprep.subr.bf16.mxu0 0
  %1052 = vmatpush1.bf16.msra.mxu0 %v827
  %1053 = vmatprep.mubr.bf16.mxu0 %v415
  %1054 = vmatmul.mubr.bf16.gmra.mrb[0].mxu0 %v414
  %v1055 = vpop.f32.mrb[0].mxu0
  %v1056 = vadd.f32 %v959, %v1055
  %v1057 = vpop.f32.mrb[0].mxu0
  %v1058 = vpop.f32.mrb[0].mxu0
  %v1059 = vadd.f32 %v962, %v1058
  %v1060 = vpop.f32.mrb[0].mxu0
  %1061 = vmatprep.mubr.bf16.mxu0 %v423
  %1062 = vmatmul.mubr.bf16.gmra.mrb[0].mxu0 %v422
  %v1063 = vpop.f32.mrb[0].mxu0
  %v1064 = vadd.f32 %v967, %v1063
  %v1065 = vpop.f32.mrb[0].mxu0
  %v1066 = vpop.f32.mrb[0].mxu0
  %v1067 = vadd.f32 %v970, %v1066
  %v1068 = vpop.f32.mrb[0].mxu0
  %1069 = vmatprep.mubr.bf16.mxu0 %v431
  %1070 = vmatmul.mubr.bf16.gmra.mrb[0].mxu0 %v430
  %v1071 = vpop.f32.mrb[0].mxu0
  %v1072 = vadd.f32 %v975, %v1071
  %v1073 = vpop.f32.mrb[0].mxu0
  %v1074 = vpop.f32.mrb[0].mxu0
  %v1075 = vadd.f32 %v978, %v1074
  %v1076 = vpop.f32.mrb[0].mxu0
  %1077 = vmatprep.mubr.bf16.mxu0 %v439
  %1078 = vmatmul.mubr.bf16.gmra.mrb[0].mxu0 %v438
  %v1079 = vpop.f32.mrb[0].mxu0
  %v1080 = vadd.f32 %v983, %v1079
  %v1081 = vpop.f32.mrb[0].mxu0
  %v1082 = vpop.f32.mrb[0].mxu0
  %v1083 = vadd.f32 %v986, %v1082
  %v1084 = vpop.f32.mrb[0].mxu0
  %1085 = vmatprep.mubr.bf16.mxu0 %v447
  %1086 = vmatmul.mubr.bf16.gmra.mrb[0].mxu0 %v446
  %v1087 = vpop.f32.mrb[0].mxu0
  %v1088 = vadd.f32 %v991, %v1087
  %v1089 = vpop.f32.mrb[0].mxu0
  %v1090 = vpop.f32.mrb[0].mxu0
  %v1091 = vadd.f32 %v994, %v1090
  %v1092 = vpop.f32.mrb[0].mxu0
  %1093 = vmatprep.mubr.bf16.mxu0 %v455
  %1094 = vmatmul.mubr.bf16.gmra.mrb[0].mxu0 %v454
  %v1095 = vpop.f32.mrb[0].mxu0
  %v1096 = vadd.f32 %v999, %v1095
  %v1097 = vpop.f32.mrb[0].mxu0
  %v1098 = vpop.f32.mrb[0].mxu0
  %v1099 = vadd.f32 %v1002, %v1098
  %v1100 = vpop.f32.mrb[0].mxu0
  %1101 = vmatprep.mubr.bf16.mxu0 %v463
  %1102 = vmatmul.mubr.bf16.gmra.mrb[0].mxu0 %v462
  %v1103 = vpop.f32.mrb[0].mxu0
  %v1104 = vadd.f32 %v1007, %v1103
  %v1105 = vpop.f32.mrb[0].mxu0
  %v1106 = vpop.f32.mrb[0].mxu0
  %v1107 = vadd.f32 %v1010, %v1106
  %v1108 = vpop.f32.mrb[0].mxu0
  %1109 = vmatprep.mubr.bf16.mxu0 %v471
  %1110 = vmatmul.mubr.bf16.gmra.mrb[0].mxu0 %v470
  %v1111 = vpop.f32.mrb[0].mxu0
  %v1112 = vadd.f32 %v1015, %v1111
  %v1113 = vpop.f32.mrb[0].mxu0
  %v1114 = vpop.f32.mrb[0].mxu0
  %v1115 = vadd.f32 %v1018, %v1114
  %v1116 = vpop.f32.mrb[0].mxu0
  %1117 = vdwg.mxu0
  %1118 = vmatprep.subr.bf16.mxu0 0
  %1119 = vmatpush1.bf16.msra.mxu0 %v828
  %1120 = vmatprep.subr.bf16.mxu0 0
  %1121 = vmatpush1.bf16.msra.mxu0 %v829
  %1122 = vmatprep.subr.bf16.mxu0 0
  %1123 = vmatpush1.bf16.msra.mxu0 %v830
  %1124 = vmatprep.subr.bf16.mxu0 0
  %1125 = vmatpush1.bf16.msra.mxu0 %v831
  %1126 = vmatprep.subr.bf16.mxu0 0
  %1127 = vmatpush1.bf16.msra.mxu0 %v832
  %1128 = vmatprep.subr.bf16.mxu0 0
  %1129 = vmatpush1.bf16.msra.mxu0 %v833
  %1130 = vmatprep.subr.bf16.mxu0 0
  %1131 = vmatpush1.bf16.msra.mxu0 %v834
  %1132 = vmatprep.subr.bf16.mxu0 0
  %1133 = vmatpush1.bf16.msra.mxu0 %v835
  %1134 = vmatprep.subr.bf16.mxu0 0
  %1135 = vmatpush1.bf16.msra.mxu0 %v836
  %1136 = vmatprep.subr.bf16.mxu0 0
  %1137 = vmatpush1.bf16.msra.mxu0 %v837
  %1138 = vmatprep.subr.bf16.mxu0 0
  %1139 = vmatpush1.bf16.msra.mxu0 %v838
  %1140 = vmatprep.subr.bf16.mxu0 0
  %1141 = vmatpush1.bf16.msra.mxu0 %v839
  %1142 = vmatprep.subr.bf16.mxu0 0
  %1143 = vmatpush1.bf16.msra.mxu0 %v840
  %1144 = vmatprep.subr.bf16.mxu0 0
  %1145 = vmatpush1.bf16.msra.mxu0 %v841
  %1146 = vmatprep.subr.bf16.mxu0 0
  %1147 = vmatpush1.bf16.msra.mxu0 %v842
  %1148 = vmatprep.subr.bf16.mxu0 0
  %1149 = vmatpush1.bf16.msra.mxu0 %v843
  %1150 = vmatprep.mubr.bf16.mxu0 %v417
  %1151 = vmatmul.mubr.bf16.gmra.mrb[0].mxu0 %v416
  %v1152 = vpop.f32.mrb[0].mxu0
  %v1153 = vadd.f32 %v1056, %v1152
  %v1154 = vpop.f32.mrb[0].mxu0
  %v1155 = vpop.f32.mrb[0].mxu0
  %v1156 = vadd.f32 %v1059, %v1155
  %v1157 = vpop.f32.mrb[0].mxu0
  %1158 = vmatprep.mubr.bf16.mxu0 %v425
  %1159 = vmatmul.mubr.bf16.gmra.mrb[0].mxu0 %v424
  %v1160 = vpop.f32.mrb[0].mxu0
  %v1161 = vadd.f32 %v1064, %v1160
  %v1162 = vpop.f32.mrb[0].mxu0
  %v1163 = vpop.f32.mrb[0].mxu0
  %v1164 = vadd.f32 %v1067, %v1163
  %v1165 = vpop.f32.mrb[0].mxu0
  %1166 = vmatprep.mubr.bf16.mxu0 %v433
  %1167 = vmatmul.mubr.bf16.gmra.mrb[0].mxu0 %v432
  %v1168 = vpop.f32.mrb[0].mxu0
  %v1169 = vadd.f32 %v1072, %v1168
  %v1170 = vpop.f32.mrb[0].mxu0
  %v1171 = vpop.f32.mrb[0].mxu0
  %v1172 = vadd.f32 %v1075, %v1171
  %v1173 = vpop.f32.mrb[0].mxu0
  %1174 = vmatprep.mubr.bf16.mxu0 %v441
  %1175 = vmatmul.mubr.bf16.gmra.mrb[0].mxu0 %v440
  %v1176 = vpop.f32.mrb[0].mxu0
  %v1177 = vadd.f32 %v1080, %v1176
  %v1178 = vpop.f32.mrb[0].mxu0
  %v1179 = vpop.f32.mrb[0].mxu0
  %v1180 = vadd.f32 %v1083, %v1179
  %v1181 = vpop.f32.mrb[0].mxu0
  %1182 = vmatprep.mubr.bf16.mxu0 %v449
  %1183 = vmatmul.mubr.bf16.gmra.mrb[0].mxu0 %v448
  %v1184 = vpop.f32.mrb[0].mxu0
  %v1185 = vadd.f32 %v1088, %v1184
  %v1186 = vpop.f32.mrb[0].mxu0
  %v1187 = vpop.f32.mrb[0].mxu0
  %v1188 = vadd.f32 %v1091, %v1187
  %v1189 = vpop.f32.mrb[0].mxu0
  %1190 = vmatprep.mubr.bf16.mxu0 %v457
  %1191 = vmatmul.mubr.bf16.gmra.mrb[0].mxu0 %v456
  %v1192 = vpop.f32.mrb[0].mxu0
  %v1193 = vadd.f32 %v1096, %v1192
  %v1194 = vpop.f32.mrb[0].mxu0
  %v1195 = vpop.f32.mrb[0].mxu0
  %v1196 = vadd.f32 %v1099, %v1195
  %v1197 = vpop.f32.mrb[0].mxu0
  %1198 = vmatprep.mubr.bf16.mxu0 %v465
  %1199 = vmatmul.mubr.bf16.gmra.mrb[0].mxu0 %v464
  %v1200 = vpop.f32.mrb[0].mxu0
  %v1201 = vadd.f32 %v1104, %v1200
  %v1202 = vpop.f32.mrb[0].mxu0
  %v1203 = vpop.f32.mrb[0].mxu0
  %v1204 = vadd.f32 %v1107, %v1203
  %v1205 = vpop.f32.mrb[0].mxu0
  %1206 = vmatprep.mubr.bf16.mxu0 %v473
  %1207 = vmatmul.mubr.bf16.gmra.mrb[0].mxu0 %v472
  %v1208 = vpop.f32.mrb[0].mxu0
  %v1209 = vadd.f32 %v1112, %v1208
  %v1210 = vpop.f32.mrb[0].mxu0
  %v1211 = vpop.f32.mrb[0].mxu0
  %v1212 = vadd.f32 %v1115, %v1211
  %v1213 = vpop.f32.mrb[0].mxu0
  %1214 = vdwg.mxu0
  %1215 = vmatprep.subr.bf16.mxu0 0
  %1216 = vmatpush1.bf16.msra.mxu0 %v844
  %1217 = vmatprep.subr.bf16.mxu0 0
  %1218 = vmatpush1.bf16.msra.mxu0 %v845
  %1219 = vmatprep.subr.bf16.mxu0 0
  %1220 = vmatpush1.bf16.msra.mxu0 %v846
  %1221 = vmatprep.subr.bf16.mxu0 0
  %1222 = vmatpush1.bf16.msra.mxu0 %v847
  %1223 = vmatprep.subr.bf16.mxu0 0
  %1224 = vmatpush1.bf16.msra.mxu0 %v848
  %1225 = vmatprep.subr.bf16.mxu0 0
  %1226 = vmatpush1.bf16.msra.mxu0 %v849
  %1227 = vmatprep.subr.bf16.mxu0 0
  %1228 = vmatpush1.bf16.msra.mxu0 %v850
  %1229 = vmatprep.subr.bf16.mxu0 0
  %1230 = vmatpush1.bf16.msra.mxu0 %v851
  %1231 = vmatprep.subr.bf16.mxu0 0
  %1232 = vmatpush1.bf16.msra.mxu0 %v852
  %1233 = vmatprep.subr.bf16.mxu0 0
  %1234 = vmatpush1.bf16.msra.mxu0 %v853
  %1235 = vmatprep.subr.bf16.mxu0 0
  %1236 = vmatpush1.bf16.msra.mxu0 %v854
  %1237 = vmatprep.subr.bf16.mxu0 0
  %1238 = vmatpush1.bf16.msra.mxu0 %v855
  %1239 = vmatprep.subr.bf16.mxu0 0
  %1240 = vmatpush1.bf16.msra.mxu0 %v856
  %1241 = vmatprep.subr.bf16.mxu0 0
  %1242 = vmatpush1.bf16.msra.mxu0 %v857
  %1243 = vmatprep.subr.bf16.mxu0 0
  %1244 = vmatpush1.bf16.msra.mxu0 %v858
  %1245 = vmatprep.subr.bf16.mxu0 0
  %1246 = vmatpush1.bf16.msra.mxu0 %v859
  %1247 = vmatprep.mubr.bf16.mxu0 %v419
  %1248 = vmatmul.mubr.bf16.gmra.mrb[0].mxu0 %v418
  %v1249 = vpop.f32.mrb[0].mxu0
  %v1250 = vadd.f32 %v1153, %v1249
  %v1251 = vpop.f32.mrb[0].mxu0
  %v1252 = vpop.f32.mrb[0].mxu0
  %v1253 = vadd.f32 %v1156, %v1252
  %v1254 = vpop.f32.mrb[0].mxu0
  %1255 = vmatprep.mubr.bf16.mxu0 %v427
  %1256 = vmatmul.mubr.bf16.gmra.mrb[0].mxu0 %v426
  %v1257 = vpop.f32.mrb[0].mxu0
  %v1258 = vadd.f32 %v1161, %v1257
  %v1259 = vpop.f32.mrb[0].mxu0
  %v1260 = vpop.f32.mrb[0].mxu0
  %v1261 = vadd.f32 %v1164, %v1260
  %v1262 = vpop.f32.mrb[0].mxu0
  %1263 = vmatprep.mubr.bf16.mxu0 %v435
  %1264 = vmatmul.mubr.bf16.gmra.mrb[0].mxu0 %v434
  %v1265 = vpop.f32.mrb[0].mxu0
  %v1266 = vadd.f32 %v1169, %v1265
  %v1267 = vpop.f32.mrb[0].mxu0
  %v1268 = vpop.f32.mrb[0].mxu0
  %v1269 = vadd.f32 %v1172, %v1268
  %v1270 = vpop.f32.mrb[0].mxu0
  %1271 = vmatprep.mubr.bf16.mxu0 %v443
  %1272 = vmatmul.mubr.bf16.gmra.mrb[0].mxu0 %v442
  %v1273 = vpop.f32.mrb[0].mxu0
  %v1274 = vadd.f32 %v1177, %v1273
  %v1275 = vpop.f32.mrb[0].mxu0
  %v1276 = vpop.f32.mrb[0].mxu0
  %v1277 = vadd.f32 %v1180, %v1276
  %v1278 = vpop.f32.mrb[0].mxu0
  %1279 = vmatprep.mubr.bf16.mxu0 %v451
  %1280 = vmatmul.mubr.bf16.gmra.mrb[0].mxu0 %v450
  %v1281 = vpop.f32.mrb[0].mxu0
  %v1282 = vadd.f32 %v1185, %v1281
  %v1283 = vpop.f32.mrb[0].mxu0
  %v1284 = vpop.f32.mrb[0].mxu0
  %v1285 = vadd.f32 %v1188, %v1284
  %v1286 = vpop.f32.mrb[0].mxu0
  %1287 = vmatprep.mubr.bf16.mxu0 %v459
  %1288 = vmatmul.mubr.bf16.gmra.mrb[0].mxu0 %v458
  %v1289 = vpop.f32.mrb[0].mxu0
  %v1290 = vadd.f32 %v1193, %v1289
  %v1291 = vpop.f32.mrb[0].mxu0
  %v1292 = vpop.f32.mrb[0].mxu0
  %v1293 = vadd.f32 %v1196, %v1292
  %v1294 = vpop.f32.mrb[0].mxu0
  %1295 = vmatprep.mubr.bf16.mxu0 %v467
  %1296 = vmatmul.mubr.bf16.gmra.mrb[0].mxu0 %v466
  %v1297 = vpop.f32.mrb[0].mxu0
  %v1298 = vadd.f32 %v1201, %v1297
  %v1299 = vpop.f32.mrb[0].mxu0
  %v1300 = vpop.f32.mrb[0].mxu0
  %v1301 = vadd.f32 %v1204, %v1300
  %v1302 = vpop.f32.mrb[0].mxu0
  %1303 = vmatprep.mubr.bf16.mxu0 %v475
  %1304 = vmatmul.mubr.bf16.gmra.mrb[0].mxu0 %v474
  %v1305 = vpop.f32.mrb[0].mxu0
  %v1306 = vadd.f32 %v1209, %v1305
  %v1307 = vpop.f32.mrb[0].mxu0
  %v1308 = vpop.f32.mrb[0].mxu0
  %v1309 = vadd.f32 %v1212, %v1308
  %v1310 = vpop.f32.mrb[0].mxu0
  %1311 = vdwg.mxu0
  %v1312 = vadd.f32 %v1250, %v1253
  %v1313 = vadd.f32 %v1312, %v1258
  %v1314 = vadd.f32 %v1313, %v1261
  %v1315 = vadd.f32 %v1314, %v1266
  %v1316 = vadd.f32 %v1315, %v1269
  %v1317 = vadd.f32 %v1316, %v1274
  %v1318 = vadd.f32 %v1317, %v1277
  %v1319 = vadd.f32 %v1318, %v1282
  %v1320 = vadd.f32 %v1319, %v1285
  %v1321 = vadd.f32 %v1320, %v1290
  %v1322 = vadd.f32 %v1321, %v1293
  %v1323 = vadd.f32 %v1322, %v1298
  %v1324 = vadd.f32 %v1323, %v1301
  %v1325 = vadd.f32 %v1324, %v1306
  %v1326 = vadd.f32 %v1325, %v1309
  %v1327 = vrot.slane %v1326, 4
  %v1328 = vadd.f32 %v1326, %v1327
  %v1329 = vrot.slane %v1328, 2
  %v1330 = vadd.f32 %v1328, %v1329
  %v1331 = vrot.slane %v1330, 1
  %v1332 = vadd.f32 %v1330, %v1331
  %v1333 = vmul.f32 %v1332, 0.0078125
  %v1334 = vsub.f32 %v1250, %v1333
  %v1335 = vsub.f32 %v1253, %v1333
  %v1336 = vsub.f32 %v1258, %v1333
  %v1337 = vsub.f32 %v1261, %v1333
  %v1338 = vsub.f32 %v1266, %v1333
  %v1339 = vsub.f32 %v1269, %v1333
  %v1340 = vsub.f32 %v1274, %v1333
  %v1341 = vsub.f32 %v1277, %v1333
  %v1342 = vsub.f32 %v1282, %v1333
  %v1343 = vsub.f32 %v1285, %v1333
  %v1344 = vsub.f32 %v1290, %v1333
  %v1345 = vsub.f32 %v1293, %v1333
  %v1346 = vsub.f32 %v1298, %v1333
  %v1347 = vsub.f32 %v1301, %v1333
  %v1348 = vsub.f32 %v1306, %v1333
  %v1349 = vsub.f32 %v1309, %v1333
  %v1350 = vmul.f32 %v1334, %v1334
  %v1351 = vmul.f32 %v1335, %v1335
  %v1352 = vmul.f32 %v1336, %v1336
  %v1353 = vmul.f32 %v1337, %v1337
  %v1354 = vmul.f32 %v1338, %v1338
  %v1355 = vmul.f32 %v1339, %v1339
  %v1356 = vmul.f32 %v1340, %v1340
  %v1357 = vmul.f32 %v1341, %v1341
  %v1358 = vmul.f32 %v1342, %v1342
  %v1359 = vmul.f32 %v1343, %v1343
  %v1360 = vmul.f32 %v1344, %v1344
  %v1361 = vmul.f32 %v1345, %v1345
  %v1362 = vmul.f32 %v1346, %v1346
  %v1363 = vmul.f32 %v1347, %v1347
  %v1364 = vmul.f32 %v1348, %v1348
  %v1365 = vmul.f32 %v1349, %v1349
  %v1366 = vadd.f32 %v1350, %v1351
  %v1367 = vadd.f32 %v1366, %v1352
  %v1368 = vadd.f32 %v1367, %v1353
  %v1369 = vadd.f32 %v1368, %v1354
  %v1370 = vadd.f32 %v1369, %v1355
  %v1371 = vadd.f32 %v1370, %v1356
  %v1372 = vadd.f32 %v1371, %v1357
  %v1373 = vadd.f32 %v1372, %v1358
  %v1374 = vadd.f32 %v1373, %v1359
  %v1375 = vadd.f32 %v1374, %v1360
  %v1376 = vadd.f32 %v1375, %v1361
  %v1377 = vadd.f32 %v1376, %v1362
  %v1378 = vadd.f32 %v1377, %v1363
  %v1379 = vadd.f32 %v1378, %v1364
  %v1380 = vadd.f32 %v1379, %v1365
  %v1381 = vrot.slane %v1380, 4
  %v1382 = vadd.f32 %v1380, %v1381
  %v1383 = vrot.slane %v1382, 2
  %v1384 = vadd.f32 %v1382, %v1383
  %v1385 = vrot.slane %v1384, 1
  %v1386 = vadd.f32 %v1384, %v1385
  %v1387 = vmul.f32 %v1386, 0.0078125
  %v1388 = vld [vmem:[%s3] sm:$0x1]
  %v1389 = vadd.f32 %v1387, 1e-05
  %v1390 = vrsqrt.pop %v1389
  %v1391 = vmul.f32 %v1388, %v1390
  %v1393 = vlaneseq
  %v1394 = vshrl.u32 %v1393, 7
  %v1395 = vsub.s32 0, %v1394
  %v1396 = vrot.slane %v1391, %v1395
  %v1398 = vmul.f32 %v1334, %v1396
  %v1399 = vmul.f32 %v1335, %v1396
  %v1400 = vmul.f32 %v1336, %v1396
  %v1401 = vmul.f32 %v1337, %v1396
  %v1402 = vmul.f32 %v1338, %v1396
  %v1403 = vmul.f32 %v1339, %v1396
  %v1404 = vmul.f32 %v1340, %v1396
  %v1405 = vmul.f32 %v1341, %v1396
  %v1406 = vmul.f32 %v1342, %v1396
  %v1407 = vmul.f32 %v1343, %v1396
  %v1408 = vmul.f32 %v1344, %v1396
  %v1409 = vmul.f32 %v1345, %v1396
  %v1410 = vmul.f32 %v1346, %v1396
  %v1411 = vmul.f32 %v1347, %v1396
  %v1412 = vmul.f32 %v1348, %v1396
  %v1413 = vmul.f32 %v1349, %v1396
  %v1414 = vld [vmem:[%s4] sm:$0x1]
  %v1416 = vlaneseq
  %v1417 = vshrl.u32 %v1416, 7
  %v1418 = vsub.s32 0, %v1417
  %v1419 = vrot.slane %v1414, %v1418
  %v1421 = vadd.f32 %v1398, %v1419
  %v1422 = vadd.f32 %v1399, %v1419
  %v1423 = vadd.f32 %v1400, %v1419
  %v1424 = vadd.f32 %v1401, %v1419
  %v1425 = vadd.f32 %v1402, %v1419
  %v1426 = vadd.f32 %v1403, %v1419
  %v1427 = vadd.f32 %v1404, %v1419
  %v1428 = vadd.f32 %v1405, %v1419
  %v1429 = vadd.f32 %v1406, %v1419
  %v1430 = vadd.f32 %v1407, %v1419
  %v1431 = vadd.f32 %v1408, %v1419
  %v1432 = vadd.f32 %v1409, %v1419
  %v1433 = vadd.f32 %v1410, %v1419
  %v1434 = vadd.f32 %v1411, %v1419
  %v1435 = vadd.f32 %v1412, %v1419
  %v1436 = vadd.f32 %v1413, %v1419
  %vm1437 = vcmp.ge.f32.partialorder %v1421, 0.0
  %vm1438 = vcmp.ge.f32.partialorder %v1422, 0.0
  %vm1439 = vcmp.ge.f32.partialorder %v1423, 0.0
  %vm1440 = vcmp.ge.f32.partialorder %v1424, 0.0
  %vm1441 = vcmp.ge.f32.partialorder %v1425, 0.0
  %vm1442 = vcmp.ge.f32.partialorder %v1426, 0.0
  %vm1443 = vcmp.ge.f32.partialorder %v1427, 0.0
  %vm1444 = vcmp.ge.f32.partialorder %v1428, 0.0
  %vm1445 = vcmp.ge.f32.partialorder %v1429, 0.0
  %vm1446 = vcmp.ge.f32.partialorder %v1430, 0.0
  %vm1447 = vcmp.ge.f32.partialorder %v1431, 0.0
  %vm1448 = vcmp.ge.f32.partialorder %v1432, 0.0
  %vm1449 = vcmp.ge.f32.partialorder %v1433, 0.0
  %vm1450 = vcmp.ge.f32.partialorder %v1434, 0.0
  %vm1451 = vcmp.ge.f32.partialorder %v1435, 0.0
  %vm1452 = vcmp.ge.f32.partialorder %v1436, 0.0
  %v1453 = vmul.f32 %v1421, 0.2
  %v1454 = vmul.f32 %v1422, 0.2
  %v1455 = vmul.f32 %v1423, 0.2
  %v1456 = vmul.f32 %v1424, 0.2
  %v1457 = vmul.f32 %v1425, 0.2
  %v1458 = vmul.f32 %v1426, 0.2
  %v1459 = vmul.f32 %v1427, 0.2
  %v1460 = vmul.f32 %v1428, 0.2
  %v1461 = vmul.f32 %v1429, 0.2
  %v1462 = vmul.f32 %v1430, 0.2
  %v1463 = vmul.f32 %v1431, 0.2
  %v1464 = vmul.f32 %v1432, 0.2
  %v1465 = vmul.f32 %v1433, 0.2
  %v1466 = vmul.f32 %v1434, 0.2
  %v1467 = vmul.f32 %v1435, 0.2
  %v1468 = vmul.f32 %v1436, 0.2
  %v1469 = vsel %vm1437, %v1421, %v1453
  %v1470 = vsel %vm1438, %v1422, %v1454
  %v1471 = vsel %vm1439, %v1423, %v1455
  %v1472 = vsel %vm1440, %v1424, %v1456
  %v1473 = vsel %vm1441, %v1425, %v1457
  %v1474 = vsel %vm1442, %v1426, %v1458
  %v1475 = vsel %vm1443, %v1427, %v1459
  %v1476 = vsel %vm1444, %v1428, %v1460
  %v1477 = vsel %vm1445, %v1429, %v1461
  %v1478 = vsel %vm1446, %v1430, %v1462
  %v1479 = vsel %vm1447, %v1431, %v1463
  %v1480 = vsel %vm1448, %v1432, %v1464
  %v1481 = vsel %vm1449, %v1433, %v1465
  %v1482 = vsel %vm1450, %v1434, %v1466
  %v1483 = vsel %vm1451, %v1435, %v1467
  %v1484 = vsel %vm1452, %v1436, %v1468
  %v1485 = vpack.c.bf16 %v1470, %v1469
  %v1486 = vpack.c.bf16 %v1472, %v1471
  %v1487 = vpack.c.bf16 %v1474, %v1473
  %v1488 = vpack.c.bf16 %v1476, %v1475
  %v1489 = vpack.c.bf16 %v1478, %v1477
  %v1490 = vpack.c.bf16 %v1480, %v1479
  %v1491 = vpack.c.bf16 %v1482, %v1481
  %v1492 = vpack.c.bf16 %v1484, %v1483
  %v1501 = vunpack.c.l.b16 %v1485
  %v1502 = vunpack.c.h.b16 %v1485
  %v1503 = vunpack.c.l.b16 %v1486
  %v1504 = vunpack.c.h.b16 %v1486
  %v1505 = vunpack.c.l.b16 %v1487
  %v1506 = vunpack.c.h.b16 %v1487
  %v1507 = vunpack.c.l.b16 %v1488
  %v1508 = vunpack.c.h.b16 %v1488
  %v1509 = vunpack.c.l.b16 %v1489
  %v1510 = vunpack.c.h.b16 %v1489
  %v1511 = vunpack.c.l.b16 %v1490
  %v1512 = vunpack.c.h.b16 %v1490
  %v1513 = vunpack.c.l.b16 %v1491
  %v1514 = vunpack.c.h.b16 %v1491
  %v1515 = vunpack.c.l.b16 %v1492
  %v1516 = vunpack.c.h.b16 %v1492
  %v1517 = vpack.c.b16 %v1501, %v1501
  %v1518 = vpack.c.b16 %v1502, %v1502
  %v1519 = vpack.c.b16 %v1503, %v1503
  %v1520 = vpack.c.b16 %v1504, %v1504
  %v1521 = vpack.c.b16 %v1505, %v1505
  %v1522 = vpack.c.b16 %v1506, %v1506
  %v1523 = vpack.c.b16 %v1507, %v1507
  %v1524 = vpack.c.b16 %v1508, %v1508
  %v1525 = vpack.c.b16 %v1509, %v1509
  %v1526 = vpack.c.b16 %v1510, %v1510
  %v1527 = vpack.c.b16 %v1511, %v1511
  %v1528 = vpack.c.b16 %v1512, %v1512
  %v1529 = vpack.c.b16 %v1513, %v1513
  %v1530 = vpack.c.b16 %v1514, %v1514
  %v1531 = vpack.c.b16 %v1515, %v1515
  %v1532 = vpack.c.b16 %v1516, %v1516
  %1549 = vst [vmem:[%s5] sm:$0xf] %v1517
  %1550 = vst [vmem:[%s5 + $0x4] sm:$0xf] %v1518
  %1551 = vst [vmem:[%s5 + $0x8] sm:$0xf] %v1519
  %1552 = vst [vmem:[%s5 + $0xc] sm:$0xf] %v1520
  %1553 = vst [vmem:[%s5 + $0x10] sm:$0xf] %v1521
  %1554 = vst [vmem:[%s5 + $0x14] sm:$0xf] %v1522
  %1555 = vst [vmem:[%s5 + $0x18] sm:$0xf] %v1523
  %1556 = vst [vmem:[%s5 + $0x1c] sm:$0xf] %v1524
  %1557 = vst [vmem:[%s5 + $0x20] sm:$0xf] %v1525
  %1558 = vst [vmem:[%s5 + $0x24] sm:$0xf] %v1526
  %1559 = vst [vmem:[%s5 + $0x28] sm:$0xf] %v1527
  %1560 = vst [vmem:[%s5 + $0x2c] sm:$0xf] %v1528
  %1561 = vst [vmem:[%s5 + $0x30] sm:$0xf] %v1529
  %1562 = vst [vmem:[%s5 + $0x34] sm:$0xf] %v1530
  %1563 = vst [vmem:[%s5 + $0x38] sm:$0xf] %v1531
  %1564 = vst [vmem:[%s5 + $0x3c] sm:$0xf] %v1532
  // Predicated region
  $region22: #{conditional_discriminator.4} parent=0 // pred_check
    _
  $region23: #{conditional_discriminator.4} parent=0 // pred_check_branch
    %1566 = sbr.rel (0) target = $region25
  $region24: #{conditional_discriminator.4} parent=0 // pred_region
    _
  $region25: #{conditional_discriminator.4} parent=0 // pred_fallthru
    _
  // Predicated region
  $region26: #{conditional_discriminator.4} parent=0 // pred_check
    _
  $region27: #{conditional_discriminator.4} parent=0 // pred_check_branch
    %1568 = sbr.rel (0) target = $region29
  $region28: #{conditional_discriminator.4} parent=0 // pred_region
    _
  $region29: #{conditional_discriminator.4} parent=0 // pred_fallthru
    _

// kernel: conditional_discriminator.5
$region0: #{conditional_discriminator.5}
  #allocation0 [shape = 'u32[]', space=smem, size = 0x4, offset = 0x4, fixed_abs, tag = 'smem constant byte address 0x4 - core index']
  #allocation1 [shape = 'u32[144,128]{1,0:T(1,128)}', space=vmem, size = 0x12000, scoped, tag = 'internal scratch']
  %s0 = inlined_call_operand.vmem [shape: bf16[32,2048], index: 0, kind: input, shape index: {}]
  %s1 = inlined_call_operand.vmem [shape: bf16[2048,256], index: 1, kind: input, shape index: {}]
  %s2 = inlined_call_operand.vmem [shape: f32[1,256], index: 2, kind: input, shape index: {}]
  %s3 = inlined_call_operand.vmem [shape: f32[1,256], index: 3, kind: input, shape index: {}]
  %s4 = inlined_call_operand.vmem [shape: f32[1,256], index: 4, kind: input, shape index: {}]
  %s5 = inlined_call_operand.vmem [shape: bf16[32,256], index: 5, kind: output, shape index: {}]
  %s6 = sld [smem:[#allocation0]]
  $region131: #{conditional_discriminator.5} parent=0
    _
  %s8 = ssub.s32 1, %s6
  %s9 = scalar_select 0, %s8, %s6
  $region1: #{conditional_discriminator.5} parent=0
    #allocation2 [shape = 'u8[1048576]{0}', space=vmem, size = 0x100000, scoped, tag = 'input window, operand 1']
    #allocation3 [shape = 'u8[16384]{0}', space=vmem, size = 0x4000, scoped, tag = 'output window, operand 0']
    loop: start=0, step=1, limit=4
    $region2: #{conditional_discriminator.5} parent=1 // loop_pre_header
      _
    $region3: #{conditional_discriminator.5} parent=1 // loop_header
      %s11 = sphi 0, %s15
      %p12 = scmp.ge.s32.totalorder %s11, 4
      %s19 = sphi 0, %s19
      %s21 = sphi 0, %s19
      %s22 = sphi 0, %s21
      %s36 = sphi 0, %s22
      %s42 = sphi 0, %s44
      %s45 = sphi 0, %s42
      %s46 = sphi 0, %s45
      %s62 = sphi 0, %s46
      %s68 = sphi 0, %s70
      %s71 = sphi 0, %s68
      %s72 = sphi 0, %s71
      %s88 = sphi 0, %s72
      %s94 = sphi 0, %s96
      %s97 = sphi 0, %s94
      %s98 = sphi 0, %s97
      %s114 = sphi 0, %s98
      %s120 = sphi 0, %s122
      %s123 = sphi 0, %s120
      %s124 = sphi 0, %s123
      %s140 = sphi 0, %s124
      %s146 = sphi 0, %s148
      %s149 = sphi 0, %s146
      %s150 = sphi 0, %s149
      %s166 = sphi 0, %s150
    $region4: #{conditional_discriminator.5} parent=1 // loop_header_branch
      %14 = sbr.rel (%p12) target = $region8
    $region5: #{conditional_discriminator.5} parent=1 // loop_body
      %s16 = ssub.s32 %s11, 1
      %s17 = ssub.s32 %s11, 2
      %s18 = sadd.s32 %s11, 1
      %s20 = sadd.s32 %s19, 1
      %p23 = scmp.eq.s32.totalorder %s11, 1
      %p24 = scmp.ne.s32.totalorder %s19, %s21
      %p25 = scmp.eq.s32.totalorder %s11, 0
      %p26 = por %p24, %p25
      %p27 = scmp.ne.s32.totalorder %s19, %s21
      %p28 = scmp.eq.s32.totalorder %s16, 1
      %p29 = por %p27, %p28
      %p30 = scmp.ne.s32.totalorder %s21, %s22
      %p31 = scmp.eq.s32.totalorder %s16, 0
      %p32 = por %p30, %p31
      %p33 = scmp.ne.s32.totalorder %s21, %s22
      %p34 = scmp.eq.s32.totalorder %s17, 1
      %p35 = por %p33, %p34
      %p37 = scmp.ne.s32.totalorder %s22, %s36
      %p38 = scmp.eq.s32.totalorder %s17, 0
      %p39 = por %p37, %p38
      %s40 = ssub.s32 %s11, %s18
      %p41 = scmp.eq.s32.totalorder %s40, 0
      %s43 = sadd.s32 %s42, 1
      %s44 = scalar_select %p41, %s42, %s43
      %p47 = pneg %p41
      %p48 = scmp.eq.s32.totalorder %s11, 1
      %p49 = por %p47, %p48
      %p50 = scmp.ne.s32.totalorder %s42, %s45
      %p51 = scmp.eq.s32.totalorder %s11, 0
      %p52 = por %p50, %p51
      %p53 = scmp.ne.s32.totalorder %s42, %s45
      %p54 = scmp.eq.s32.totalorder %s16, 1
      %p55 = por %p53, %p54
      %p56 = scmp.ne.s32.totalorder %s45, %s46
      %p57 = scmp.eq.s32.totalorder %s16, 0
      %p58 = por %p56, %p57
      %p59 = scmp.ne.s32.totalorder %s45, %s46
      %p60 = scmp.eq.s32.totalorder %s17, 1
      %p61 = por %p59, %p60
      %p63 = scmp.ne.s32.totalorder %s46, %s62
      %p64 = scmp.eq.s32.totalorder %s17, 0
      %p65 = por %p63, %p64
      %s66 = ssub.s32 %s11, %s18
      %p67 = scmp.eq.s32.totalorder %s66, 0
      %s69 = sadd.s32 %s68, 1
      %s70 = scalar_select %p67, %s68, %s69
      %p73 = pneg %p67
      %p74 = scmp.eq.s32.totalorder %s11, 1
      %p75 = por %p73, %p74
      %p76 = scmp.ne.s32.totalorder %s68, %s71
      %p77 = scmp.eq.s32.totalorder %s11, 0
      %p78 = por %p76, %p77
      %p79 = scmp.ne.s32.totalorder %s68, %s71
      %p80 = scmp.eq.s32.totalorder %s16, 1
      %p81 = por %p79, %p80
      %p82 = scmp.ne.s32.totalorder %s71, %s72
      %p83 = scmp.eq.s32.totalorder %s16, 0
      %p84 = por %p82, %p83
      %p85 = scmp.ne.s32.totalorder %s71, %s72
      %p86 = scmp.eq.s32.totalorder %s17, 1
      %p87 = por %p85, %p86
      %p89 = scmp.ne.s32.totalorder %s72, %s88
      %p90 = scmp.eq.s32.totalorder %s17, 0
      %p91 = por %p89, %p90
      %s92 = ssub.s32 %s11, %s18
      %p93 = scmp.eq.s32.totalorder %s92, 0
      %s95 = sadd.s32 %s94, 1
      %s96 = scalar_select %p93, %s94, %s95
      %p99 = pneg %p93
      %p100 = scmp.eq.s32.totalorder %s11, 1
      %p101 = por %p99, %p100
      %p102 = scmp.ne.s32.totalorder %s94, %s97
      %p103 = scmp.eq.s32.totalorder %s11, 0
      %p104 = por %p102, %p103
      %p105 = scmp.ne.s32.totalorder %s94, %s97
      %p106 = scmp.eq.s32.totalorder %s16, 1
      %p107 = por %p105, %p106
      %p108 = scmp.ne.s32.totalorder %s97, %s98
      %p109 = scmp.eq.s32.totalorder %s16, 0
      %p110 = por %p108, %p109
      %p111 = scmp.ne.s32.totalorder %s97, %s98
      %p112 = scmp.eq.s32.totalorder %s17, 1
      %p113 = por %p111, %p112
      %p115 = scmp.ne.s32.totalorder %s98, %s114
      %p116 = scmp.eq.s32.totalorder %s17, 0
      %p117 = por %p115, %p116
      %s118 = ssub.s32 %s11, %s18
      %p119 = scmp.eq.s32.totalorder %s118, 0
      %s121 = sadd.s32 %s120, 1
      %s122 = scalar_select %p119, %s120, %s121
      %p125 = pneg %p119
      %p126 = scmp.eq.s32.totalorder %s11, 1
      %p127 = por %p125, %p126
      %p128 = scmp.ne.s32.totalorder %s120, %s123
      %p129 = scmp.eq.s32.totalorder %s11, 0
      %p130 = por %p128, %p129
      %p131 = scmp.ne.s32.totalorder %s120, %s123
      %p132 = scmp.eq.s32.totalorder %s16, 1
      %p133 = por %p131, %p132
      %p134 = scmp.ne.s32.totalorder %s123, %s124
      %p135 = scmp.eq.s32.totalorder %s16, 0
      %p136 = por %p134, %p135
      %p137 = scmp.ne.s32.totalorder %s123, %s124
      %p138 = scmp.eq.s32.totalorder %s17, 1
      %p139 = por %p137, %p138
      %p141 = scmp.ne.s32.totalorder %s124, %s140
      %p142 = scmp.eq.s32.totalorder %s17, 0
      %p143 = por %p141, %p142
      %s144 = ssub.s32 %s11, %s18
      %p145 = scmp.eq.s32.totalorder %s144, 0
      %s147 = sadd.s32 %s146, 1
      %s148 = scalar_select %p145, %s146, %s147
      %p151 = pneg %p145
      %p152 = scmp.eq.s32.totalorder %s11, 1
      %p153 = por %p151, %p152
      %p154 = scmp.ne.s32.totalorder %s146, %s149
      %p155 = scmp.eq.s32.totalorder %s11, 0
      %p156 = por %p154, %p155
      %p157 = scmp.ne.s32.totalorder %s146, %s149
      %p158 = scmp.eq.s32.totalorder %s16, 1
      %p159 = por %p157, %p158
      %p160 = scmp.ne.s32.totalorder %s149, %s150
      %p161 = scmp.eq.s32.totalorder %s16, 0
      %p162 = por %p160, %p161
      %p163 = scmp.ne.s32.totalorder %s149, %s150
      %p164 = scmp.eq.s32.totalorder %s17, 1
      %p165 = por %p163, %p164
      %p167 = scmp.ne.s32.totalorder %s150, %s166
      %p168 = scmp.eq.s32.totalorder %s17, 0
      %p169 = por %p167, %p168
      %p170 = scmp.le.s32.totalorder 1, %s11
      %p171 = scmp.lt.s32.totalorder %s11, 3
      %p172 = pnand %p170, %p171
      %p173 = pneg %p172
      // Predicated region
      $region9: #{conditional_discriminator.5} parent=5 // pred_check
        _
      $region10: #{conditional_discriminator.5} parent=5 // pred_check_branch
        %175 = sbr.rel (%p172) target = $region12
      $region11: #{conditional_discriminator.5} parent=5 // pred_region
        %s176 = ssub.s32 %s11, 1
        // Predicated region
        $region13: #{conditional_discriminator.5} parent=11 // pred_check
          %p177 = pneg %p32
        $region14: #{conditional_discriminator.5} parent=11 // pred_check_branch
          %179 = sbr.rel (%p177) target = $region16
        $region15: #{conditional_discriminator.5} parent=11 // pred_region
          _
        $region16: #{conditional_discriminator.5} parent=11 // pred_fallthru
          _
      $region12: #{conditional_discriminator.5} parent=5 // pred_fallthru
        _
      %p180 = scmp.lt.s32.totalorder %s11, 2
      // Predicated region
      $region17: #{conditional_discriminator.5} parent=5 // pred_check
        %p181 = pneg %p180
      $region18: #{conditional_discriminator.5} parent=5 // pred_check_branch
        %183 = sbr.rel (%p181) target = $region20
      $region19: #{conditional_discriminator.5} parent=5 // pred_region
        // Predicated region
        $region21: #{conditional_discriminator.5} parent=19 // pred_check
          %p184 = pneg %p52
        $region22: #{conditional_discriminator.5} parent=19 // pred_check_branch
          %186 = sbr.rel (%p184) target = $region24
        $region23: #{conditional_discriminator.5} parent=19 // pred_region
          %s187 = sand.u32 %s42, 1
          %s188 = sand.u32 %s42, 1
          %s189 = smul.addr %s188, 1024
          %s190 = scalar_lea.vmem [#allocation2], %s189
          %s191 = smul.addr %s11, 4
          %s192 = scalar_lea.vmem %s1, %s191
          // Predicated region
          $region25: #{conditional_discriminator.5} parent=23 // pred_check
            _
          $region26: #{conditional_discriminator.5} parent=23 // pred_check_branch
            %194 = sbr.rel (0) target = $region28
          $region27: #{conditional_discriminator.5} parent=23 // pred_region
            // Predicated region
            $region29: #{conditional_discriminator.5} parent=27 // pred_check
              _
            $region30: #{conditional_discriminator.5} parent=27 // pred_check_branch
              %196 = sbr.rel target = $region32
            $region31: #{conditional_discriminator.5} parent=27 // pred_region
              // Predicated region
              $region44: #{conditional_discriminator.5} parent=31 // pred_check
                _
              $region45: #{conditional_discriminator.5} parent=31 // pred_check_branch
                %721 = sbr.rel (0) target = $region47
              $region46: #{conditional_discriminator.5} parent=31 // pred_region
                loop: start=0, step=1, limit=1
                $region48: #{conditional_discriminator.5} parent=46 // loop_pre_header
                  _
                $region49: #{conditional_discriminator.5} parent=46 // loop_header
                  %s723 = sphi 0, %s727
                  %p724 = scmp.ge.s32.totalorder %s723, 1
                  %s728 = sphi %s192, %s192
                  %s729 = sphi %s190, %s190
                $region50: #{conditional_discriminator.5} parent=46 // loop_header_branch
                  %726 = sbr.rel (%p724) target = $region54
                $region51: #{conditional_discriminator.5} parent=46 // loop_body
                  _
                $region52: #{conditional_discriminator.5} parent=46 // loop_footer
                  %s727 = sadd.s32 1, %s723
                $region53: #{conditional_discriminator.5} parent=46 // loop_footer_branch
                  %722 = sbr.rel target = $region49
                $region54: #{conditional_discriminator.5} parent=46 // loop_exit
                  _
                loop: start=0, step=1, limit=1
                $region55: #{conditional_discriminator.5} parent=46 // loop_pre_header
                  _
                $region56: #{conditional_discriminator.5} parent=46 // loop_header
                  %s732 = sphi 0, %s736
                  %p733 = scmp.ge.s32.totalorder %s732, 1
                  %s737 = sphi %s192, %s192
                  %s738 = sphi %s190, %s190
                $region57: #{conditional_discriminator.5} parent=46 // loop_header_branch
                  %735 = sbr.rel (%p733) target = $region61
                $region58: #{conditional_discriminator.5} parent=46 // loop_body
                  %v739 = vld [vmem:[%s737] sm:$0xf]
                  %740 = vst [vmem:[%s738] sm:$0xf] %v739
                  %v741 = vld [vmem:[%s737 + $0x8] sm:$0xf]
                  %742 = vst [vmem:[%s738 + $0x4] sm:$0xf] %v741
                  %v743 = vld [vmem:[%s737 + $0x10] sm:$0xf]
                  %744 = vst [vmem:[%s738 + $0x8] sm:$0xf] %v743
                  %v745 = vld [vmem:[%s737 + $0x18] sm:$0xf]
                  %746 = vst [vmem:[%s738 + $0xc] sm:$0xf] %v745
                  %v747 = vld [vmem:[%s737 + $0x20] sm:$0xf]
                  %748 = vst [vmem:[%s738 + $0x10] sm:$0xf] %v747
                  %v749 = vld [vmem:[%s737 + $0x28] sm:$0xf]
                  %750 = vst [vmem:[%s738 + $0x14] sm:$0xf] %v749
                  %v751 = vld [vmem:[%s737 + $0x30] sm:$0xf]
                  %752 = vst [vmem:[%s738 + $0x18] sm:$0xf] %v751
                  %v753 = vld [vmem:[%s737 + $0x38] sm:$0xf]
                  %754 = vst [vmem:[%s738 + $0x1c] sm:$0xf] %v753
                  %v755 = vld [vmem:[%s737 + $0x40] sm:$0xf]
                  %756 = vst [vmem:[%s738 + $0x20] sm:$0xf] %v755
                  %v757 = vld [vmem:[%s737 + $0x48] sm:$0xf]
                  %758 = vst [vmem:[%s738 + $0x24] sm:$0xf] %v757
                  %v759 = vld [vmem:[%s737 + $0x50] sm:$0xf]
                  %760 = vst [vmem:[%s738 + $0x28] sm:$0xf] %v759
                  %v761 = vld [vmem:[%s737 + $0x58] sm:$0xf]
                  %762 = vst [vmem:[%s738 + $0x2c] sm:$0xf] %v761
                  %v763 = vld [vmem:[%s737 + $0x60] sm:$0xf]
                  %764 = vst [vmem:[%s738 + $0x30] sm:$0xf] %v763
                  %v765 = vld [vmem:[%s737 + $0x68] sm:$0xf]
                  %766 = vst [vmem:[%s738 + $0x34] sm:$0xf] %v765
                  %v767 = vld [vmem:[%s737 + $0x70] sm:$0xf]
                  %768 = vst [vmem:[%s738 + $0x38] sm:$0xf] %v767
                  %v769 = vld [vmem:[%s737 + $0x78] sm:$0xf]
                  %770 = vst [vmem:[%s738 + $0x3c] sm:$0xf] %v769
                  %v771 = vld [vmem:[%s737 + $0x80] sm:$0xf]
                  %772 = vst [vmem:[%s738 + $0x40] sm:$0xf] %v771
                  %v773 = vld [vmem:[%s737 + $0x88] sm:$0xf]
                  %774 = vst [vmem:[%s738 + $0x44] sm:$0xf] %v773
                  %v775 = vld [vmem:[%s737 + $0x90] sm:$0xf]
                  %776 = vst [vmem:[%s738 + $0x48] sm:$0xf] %v775
                  %v777 = vld [vmem:[%s737 + $0x98] sm:$0xf]
                  %778 = vst [vmem:[%s738 + $0x4c] sm:$0xf] %v777
                  %v779 = vld [vmem:[%s737 + $0xa0] sm:$0xf]
                  %780 = vst [vmem:[%s738 + $0x50] sm:$0xf] %v779
                  %v781 = vld [vmem:[%s737 + $0xa8] sm:$0xf]
                  %782 = vst [vmem:[%s738 + $0x54] sm:$0xf] %v781
                  %v783 = vld [vmem:[%s737 + $0xb0] sm:$0xf]
                  %784 = vst [vmem:[%s738 + $0x58] sm:$0xf] %v783
                  %v785 = vld [vmem:[%s737 + $0xb8] sm:$0xf]
                  %786 = vst [vmem:[%s738 + $0x5c] sm:$0xf] %v785
                  %v787 = vld [vmem:[%s737 + $0xc0] sm:$0xf]
                  %788 = vst [vmem:[%s738 + $0x60] sm:$0xf] %v787
                  %v789 = vld [vmem:[%s737 + $0xc8] sm:$0xf]
                  %790 = vst [vmem:[%s738 + $0x64] sm:$0xf] %v789
                  %v791 = vld [vmem:[%s737 + $0xd0] sm:$0xf]
                  %792 = vst [vmem:[%s738 + $0x68] sm:$0xf] %v791
                  %v793 = vld [vmem:[%s737 + $0xd8] sm:$0xf]
                  %794 = vst [vmem:[%s738 + $0x6c] sm:$0xf] %v793
                  %v795 = vld [vmem:[%s737 + $0xe0] sm:$0xf]
                  %796 = vst [vmem:[%s738 + $0x70] sm:$0xf] %v795
                  %v797 = vld [vmem:[%s737 + $0xe8] sm:$0xf]
                  %798 = vst [vmem:[%s738 + $0x74] sm:$0xf] %v797
                  %v799 = vld [vmem:[%s737 + $0xf0] sm:$0xf]
                  %800 = vst [vmem:[%s738 + $0x78] sm:$0xf] %v799
                  %v801 = vld [vmem:[%s737 + $0xf8] sm:$0xf]
                  %802 = vst [vmem:[%s738 + $0x7c] sm:$0xf] %v801
                  %v803 = vld [vmem:[%s737 + $0x100] sm:$0xf]
                  %804 = vst [vmem:[%s738 + $0x80] sm:$0xf] %v803
                  %v805 = vld [vmem:[%s737 + $0x108] sm:$0xf]
                  %806 = vst [vmem:[%s738 + $0x84] sm:$0xf] %v805
                  %v807 = vld [vmem:[%s737 + $0x110] sm:$0xf]
                  %808 = vst [vmem:[%s738 + $0x88] sm:$0xf] %v807
                  %v809 = vld [vmem:[%s737 + $0x118] sm:$0xf]
                  %810 = vst [vmem:[%s738 + $0x8c] sm:$0xf] %v809
                  %v811 = vld [vmem:[%s737 + $0x120] sm:$0xf]
                  %812 = vst [vmem:[%s738 + $0x90] sm:$0xf] %v811
                  %v813 = vld [vmem:[%s737 + $0x128] sm:$0xf]
                  %814 = vst [vmem:[%s738 + $0x94] sm:$0xf] %v813
                  %v815 = vld [vmem:[%s737 + $0x130] sm:$0xf]
                  %816 = vst [vmem:[%s738 + $0x98] sm:$0xf] %v815
                  %v817 = vld [vmem:[%s737 + $0x138] sm:$0xf]
                  %818 = vst [vmem:[%s738 + $0x9c] sm:$0xf] %v817
                  %v819 = vld [vmem:[%s737 + $0x140] sm:$0xf]
                  %820 = vst [vmem:[%s738 + $0xa0] sm:$0xf] %v819
                  %v821 = vld [vmem:[%s737 + $0x148] sm:$0xf]
                  %822 = vst [vmem:[%s738 + $0xa4] sm:$0xf] %v821
                  %v823 = vld [vmem:[%s737 + $0x150] sm:$0xf]
                  %824 = vst [vmem:[%s738 + $0xa8] sm:$0xf] %v823
                  %v825 = vld [vmem:[%s737 + $0x158] sm:$0xf]
                  %826 = vst [vmem:[%s738 + $0xac] sm:$0xf] %v825
                  %v827 = vld [vmem:[%s737 + $0x160] sm:$0xf]
                  %828 = vst [vmem:[%s738 + $0xb0] sm:$0xf] %v827
                  %v829 = vld [vmem:[%s737 + $0x168] sm:$0xf]
                  %830 = vst [vmem:[%s738 + $0xb4] sm:$0xf] %v829
                  %v831 = vld [vmem:[%s737 + $0x170] sm:$0xf]
                  %832 = vst [vmem:[%s738 + $0xb8] sm:$0xf] %v831
                  %v833 = vld [vmem:[%s737 + $0x178] sm:$0xf]
                  %834 = vst [vmem:[%s738 + $0xbc] sm:$0xf] %v833
                  %v835 = vld [vmem:[%s737 + $0x180] sm:$0xf]
                  %836 = vst [vmem:[%s738 + $0xc0] sm:$0xf] %v835
                  %v837 = vld [vmem:[%s737 + $0x188] sm:$0xf]
                  %838 = vst [vmem:[%s738 + $0xc4] sm:$0xf] %v837
                  %v839 = vld [vmem:[%s737 + $0x190] sm:$0xf]
                  %840 = vst [vmem:[%s738 + $0xc8] sm:$0xf] %v839
                  %v841 = vld [vmem:[%s737 + $0x198] sm:$0xf]
                  %842 = vst [vmem:[%s738 + $0xcc] sm:$0xf] %v841
                  %v843 = vld [vmem:[%s737 + $0x1a0] sm:$0xf]
                  %844 = vst [vmem:[%s738 + $0xd0] sm:$0xf] %v843
                  %v845 = vld [vmem:[%s737 + $0x1a8] sm:$0xf]
                  %846 = vst [vmem:[%s738 + $0xd4] sm:$0xf] %v845
                  %v847 = vld [vmem:[%s737 + $0x1b0] sm:$0xf]
                  %848 = vst [vmem:[%s738 + $0xd8] sm:$0xf] %v847
                  %v849 = vld [vmem:[%s737 + $0x1b8] sm:$0xf]
                  %850 = vst [vmem:[%s738 + $0xdc] sm:$0xf] %v849
                  %v851 = vld [vmem:[%s737 + $0x1c0] sm:$0xf]
                  %852 = vst [vmem:[%s738 + $0xe0] sm:$0xf] %v851
                  %v853 = vld [vmem:[%s737 + $0x1c8] sm:$0xf]
                  %854 = vst [vmem:[%s738 + $0xe4] sm:$0xf] %v853
                  %v855 = vld [vmem:[%s737 + $0x1d0] sm:$0xf]
                  %856 = vst [vmem:[%s738 + $0xe8] sm:$0xf] %v855
                  %v857 = vld [vmem:[%s737 + $0x1d8] sm:$0xf]
                  %858 = vst [vmem:[%s738 + $0xec] sm:$0xf] %v857
                  %v859 = vld [vmem:[%s737 + $0x1e0] sm:$0xf]
                  %860 = vst [vmem:[%s738 + $0xf0] sm:$0xf] %v859
                  %v861 = vld [vmem:[%s737 + $0x1e8] sm:$0xf]
                  %862 = vst [vmem:[%s738 + $0xf4] sm:$0xf] %v861
                  %v863 = vld [vmem:[%s737 + $0x1f0] sm:$0xf]
                  %864 = vst [vmem:[%s738 + $0xf8] sm:$0xf] %v863
                  %v865 = vld [vmem:[%s737 + $0x1f8] sm:$0xf]
                  %866 = vst [vmem:[%s738 + $0xfc] sm:$0xf] %v865
                  %v867 = vld [vmem:[%s737 + $0x200] sm:$0xf]
                  %868 = vst [vmem:[%s738 + $0x100] sm:$0xf] %v867
                  %v869 = vld [vmem:[%s737 + $0x208] sm:$0xf]
                  %870 = vst [vmem:[%s738 + $0x104] sm:$0xf] %v869
                  %v871 = vld [vmem:[%s737 + $0x210] sm:$0xf]
                  %872 = vst [vmem:[%s738 + $0x108] sm:$0xf] %v871
                  %v873 = vld [vmem:[%s737 + $0x218] sm:$0xf]
                  %874 = vst [vmem:[%s738 + $0x10c] sm:$0xf] %v873
                  %v875 = vld [vmem:[%s737 + $0x220] sm:$0xf]
                  %876 = vst [vmem:[%s738 + $0x110] sm:$0xf] %v875
                  %v877 = vld [vmem:[%s737 + $0x228] sm:$0xf]
                  %878 = vst [vmem:[%s738 + $0x114] sm:$0xf] %v877
                  %v879 = vld [vmem:[%s737 + $0x230] sm:$0xf]
                  %880 = vst [vmem:[%s738 + $0x118] sm:$0xf] %v879
                  %v881 = vld [vmem:[%s737 + $0x238] sm:$0xf]
                  %882 = vst [vmem:[%s738 + $0x11c] sm:$0xf] %v881
                  %v883 = vld [vmem:[%s737 + $0x240] sm:$0xf]
                  %884 = vst [vmem:[%s738 + $0x120] sm:$0xf] %v883
                  %v885 = vld [vmem:[%s737 + $0x248] sm:$0xf]
                  %886 = vst [vmem:[%s738 + $0x124] sm:$0xf] %v885
                  %v887 = vld [vmem:[%s737 + $0x250] sm:$0xf]
                  %888 = vst [vmem:[%s738 + $0x128] sm:$0xf] %v887
                  %v889 = vld [vmem:[%s737 + $0x258] sm:$0xf]
                  %890 = vst [vmem:[%s738 + $0x12c] sm:$0xf] %v889
                  %v891 = vld [vmem:[%s737 + $0x260] sm:$0xf]
                  %892 = vst [vmem:[%s738 + $0x130] sm:$0xf] %v891
                  %v893 = vld [vmem:[%s737 + $0x268] sm:$0xf]
                  %894 = vst [vmem:[%s738 + $0x134] sm:$0xf] %v893
                  %v895 = vld [vmem:[%s737 + $0x270] sm:$0xf]
                  %896 = vst [vmem:[%s738 + $0x138] sm:$0xf] %v895
                  %v897 = vld [vmem:[%s737 + $0x278] sm:$0xf]
                  %898 = vst [vmem:[%s738 + $0x13c] sm:$0xf] %v897
                  %v899 = vld [vmem:[%s737 + $0x280] sm:$0xf]
                  %900 = vst [vmem:[%s738 + $0x140] sm:$0xf] %v899
                  %v901 = vld [vmem:[%s737 + $0x288] sm:$0xf]
                  %902 = vst [vmem:[%s738 + $0x144] sm:$0xf] %v901
                  %v903 = vld [vmem:[%s737 + $0x290] sm:$0xf]
                  %904 = vst [vmem:[%s738 + $0x148] sm:$0xf] %v903
                  %v905 = vld [vmem:[%s737 + $0x298] sm:$0xf]
                  %906 = vst [vmem:[%s738 + $0x14c] sm:$0xf] %v905
                  %v907 = vld [vmem:[%s737 + $0x2a0] sm:$0xf]
                  %908 = vst [vmem:[%s738 + $0x150] sm:$0xf] %v907
                  %v909 = vld [vmem:[%s737 + $0x2a8] sm:$0xf]
                  %910 = vst [vmem:[%s738 + $0x154] sm:$0xf] %v909
                  %v911 = vld [vmem:[%s737 + $0x2b0] sm:$0xf]
                  %912 = vst [vmem:[%s738 + $0x158] sm:$0xf] %v911
                  %v913 = vld [vmem:[%s737 + $0x2b8] sm:$0xf]
                  %914 = vst [vmem:[%s738 + $0x15c] sm:$0xf] %v913
                  %v915 = vld [vmem:[%s737 + $0x2c0] sm:$0xf]
                  %916 = vst [vmem:[%s738 + $0x160] sm:$0xf] %v915
                  %v917 = vld [vmem:[%s737 + $0x2c8] sm:$0xf]
                  %918 = vst [vmem:[%s738 + $0x164] sm:$0xf] %v917
                  %v919 = vld [vmem:[%s737 + $0x2d0] sm:$0xf]
                  %920 = vst [vmem:[%s738 + $0x168] sm:$0xf] %v919
                  %v921 = vld [vmem:[%s737 + $0x2d8] sm:$0xf]
                  %922 = vst [vmem:[%s738 + $0x16c] sm:$0xf] %v921
                  %v923 = vld [vmem:[%s737 + $0x2e0] sm:$0xf]
                  %924 = vst [vmem:[%s738 + $0x170] sm:$0xf] %v923
                  %v925 = vld [vmem:[%s737 + $0x2e8] sm:$0xf]
                  %926 = vst [vmem:[%s738 + $0x174] sm:$0xf] %v925
                  %v927 = vld [vmem:[%s737 + $0x2f0] sm:$0xf]
                  %928 = vst [vmem:[%s738 + $0x178] sm:$0xf] %v927
                  %v929 = vld [vmem:[%s737 + $0x2f8] sm:$0xf]
                  %930 = vst [vmem:[%s738 + $0x17c] sm:$0xf] %v929
                  %v931 = vld [vmem:[%s737 + $0x300] sm:$0xf]
                  %932 = vst [vmem:[%s738 + $0x180] sm:$0xf] %v931
                  %v933 = vld [vmem:[%s737 + $0x308] sm:$0xf]
                  %934 = vst [vmem:[%s738 + $0x184] sm:$0xf] %v933
                  %v935 = vld [vmem:[%s737 + $0x310] sm:$0xf]
                  %936 = vst [vmem:[%s738 + $0x188] sm:$0xf] %v935
                  %v937 = vld [vmem:[%s737 + $0x318] sm:$0xf]
                  %938 = vst [vmem:[%s738 + $0x18c] sm:$0xf] %v937
                  %v939 = vld [vmem:[%s737 + $0x320] sm:$0xf]
                  %940 = vst [vmem:[%s738 + $0x190] sm:$0xf] %v939
                  %v941 = vld [vmem:[%s737 + $0x328] sm:$0xf]
                  %942 = vst [vmem:[%s738 + $0x194] sm:$0xf] %v941
                  %v943 = vld [vmem:[%s737 + $0x330] sm:$0xf]
                  %944 = vst [vmem:[%s738 + $0x198] sm:$0xf] %v943
                  %v945 = vld [vmem:[%s737 + $0x338] sm:$0xf]
                  %946 = vst [vmem:[%s738 + $0x19c] sm:$0xf] %v945
                  %v947 = vld [vmem:[%s737 + $0x340] sm:$0xf]
                  %948 = vst [vmem:[%s738 + $0x1a0] sm:$0xf] %v947
                  %v949 = vld [vmem:[%s737 + $0x348] sm:$0xf]
                  %950 = vst [vmem:[%s738 + $0x1a4] sm:$0xf] %v949
                  %v951 = vld [vmem:[%s737 + $0x350] sm:$0xf]
                  %952 = vst [vmem:[%s738 + $0x1a8] sm:$0xf] %v951
                  %v953 = vld [vmem:[%s737 + $0x358] sm:$0xf]
                  %954 = vst [vmem:[%s738 + $0x1ac] sm:$0xf] %v953
                  %v955 = vld [vmem:[%s737 + $0x360] sm:$0xf]
                  %956 = vst [vmem:[%s738 + $0x1b0] sm:$0xf] %v955
                  %v957 = vld [vmem:[%s737 + $0x368] sm:$0xf]
                  %958 = vst [vmem:[%s738 + $0x1b4] sm:$0xf] %v957
                  %v959 = vld [vmem:[%s737 + $0x370] sm:$0xf]
                  %960 = vst [vmem:[%s738 + $0x1b8] sm:$0xf] %v959
                  %v961 = vld [vmem:[%s737 + $0x378] sm:$0xf]
                  %962 = vst [vmem:[%s738 + $0x1bc] sm:$0xf] %v961
                  %v963 = vld [vmem:[%s737 + $0x380] sm:$0xf]
                  %964 = vst [vmem:[%s738 + $0x1c0] sm:$0xf] %v963
                  %v965 = vld [vmem:[%s737 + $0x388] sm:$0xf]
                  %966 = vst [vmem:[%s738 + $0x1c4] sm:$0xf] %v965
                  %v967 = vld [vmem:[%s737 + $0x390] sm:$0xf]
                  %968 = vst [vmem:[%s738 + $0x1c8] sm:$0xf] %v967
                  %v969 = vld [vmem:[%s737 + $0x398] sm:$0xf]
                  %970 = vst [vmem:[%s738 + $0x1cc] sm:$0xf] %v969
                  %v971 = vld [vmem:[%s737 + $0x3a0] sm:$0xf]
                  %972 = vst [vmem:[%s738 + $0x1d0] sm:$0xf] %v971
                  %v973 = vld [vmem:[%s737 + $0x3a8] sm:$0xf]
                  %974 = vst [vmem:[%s738 + $0x1d4] sm:$0xf] %v973
                  %v975 = vld [vmem:[%s737 + $0x3b0] sm:$0xf]
                  %976 = vst [vmem:[%s738 + $0x1d8] sm:$0xf] %v975
                  %v977 = vld [vmem:[%s737 + $0x3b8] sm:$0xf]
                  %978 = vst [vmem:[%s738 + $0x1dc] sm:$0xf] %v977
                  %v979 = vld [vmem:[%s737 + $0x3c0] sm:$0xf]
                  %980 = vst [vmem:[%s738 + $0x1e0] sm:$0xf] %v979
                  %v981 = vld [vmem:[%s737 + $0x3c8] sm:$0xf]
                  %982 = vst [vmem:[%s738 + $0x1e4] sm:$0xf] %v981
                  %v983 = vld [vmem:[%s737 + $0x3d0] sm:$0xf]
                  %984 = vst [vmem:[%s738 + $0x1e8] sm:$0xf] %v983
                  %v985 = vld [vmem:[%s737 + $0x3d8] sm:$0xf]
                  %986 = vst [vmem:[%s738 + $0x1ec] sm:$0xf] %v985
                  %v987 = vld [vmem:[%s737 + $0x3e0] sm:$0xf]
                  %988 = vst [vmem:[%s738 + $0x1f0] sm:$0xf] %v987
                  %v989 = vld [vmem:[%s737 + $0x3e8] sm:$0xf]
                  %990 = vst [vmem:[%s738 + $0x1f4] sm:$0xf] %v989
                  %v991 = vld [vmem:[%s737 + $0x3f0] sm:$0xf]
                  %992 = vst [vmem:[%s738 + $0x1f8] sm:$0xf] %v991
                  %v993 = vld [vmem:[%s737 + $0x3f8] sm:$0xf]
                  %994 = vst [vmem:[%s738 + $0x1fc] sm:$0xf] %v993
                  %v995 = vld [vmem:[%s737 + $0x400] sm:$0xf]
                  %996 = vst [vmem:[%s738 + $0x200] sm:$0xf] %v995
                  %v997 = vld [vmem:[%s737 + $0x408] sm:$0xf]
                  %998 = vst [vmem:[%s738 + $0x204] sm:$0xf] %v997
                  %v999 = vld [vmem:[%s737 + $0x410] sm:$0xf]
                  %1000 = vst [vmem:[%s738 + $0x208] sm:$0xf] %v999
                  %v1001 = vld [vmem:[%s737 + $0x418] sm:$0xf]
                  %1002 = vst [vmem:[%s738 + $0x20c] sm:$0xf] %v1001
                  %v1003 = vld [vmem:[%s737 + $0x420] sm:$0xf]
                  %1004 = vst [vmem:[%s738 + $0x210] sm:$0xf] %v1003
                  %v1005 = vld [vmem:[%s737 + $0x428] sm:$0xf]
                  %1006 = vst [vmem:[%s738 + $0x214] sm:$0xf] %v1005
                  %v1007 = vld [vmem:[%s737 + $0x430] sm:$0xf]
                  %1008 = vst [vmem:[%s738 + $0x218] sm:$0xf] %v1007
                  %v1009 = vld [vmem:[%s737 + $0x438] sm:$0xf]
                  %1010 = vst [vmem:[%s738 + $0x21c] sm:$0xf] %v1009
                  %v1011 = vld [vmem:[%s737 + $0x440] sm:$0xf]
                  %1012 = vst [vmem:[%s738 + $0x220] sm:$0xf] %v1011
                  %v1013 = vld [vmem:[%s737 + $0x448] sm:$0xf]
                  %1014 = vst [vmem:[%s738 + $0x224] sm:$0xf] %v1013
                  %v1015 = vld [vmem:[%s737 + $0x450] sm:$0xf]
                  %1016 = vst [vmem:[%s738 + $0x228] sm:$0xf] %v1015
                  %v1017 = vld [vmem:[%s737 + $0x458] sm:$0xf]
                  %1018 = vst [vmem:[%s738 + $0x22c] sm:$0xf] %v1017
                  %v1019 = vld [vmem:[%s737 + $0x460] sm:$0xf]
                  %1020 = vst [vmem:[%s738 + $0x230] sm:$0xf] %v1019
                  %v1021 = vld [vmem:[%s737 + $0x468] sm:$0xf]
                  %1022 = vst [vmem:[%s738 + $0x234] sm:$0xf] %v1021
                  %v1023 = vld [vmem:[%s737 + $0x470] sm:$0xf]
                  %1024 = vst [vmem:[%s738 + $0x238] sm:$0xf] %v1023
                  %v1025 = vld [vmem:[%s737 + $0x478] sm:$0xf]
                  %1026 = vst [vmem:[%s738 + $0x23c] sm:$0xf] %v1025
                  %v1027 = vld [vmem:[%s737 + $0x480] sm:$0xf]
                  %1028 = vst [vmem:[%s738 + $0x240] sm:$0xf] %v1027
                  %v1029 = vld [vmem:[%s737 + $0x488] sm:$0xf]
                  %1030 = vst [vmem:[%s738 + $0x244] sm:$0xf] %v1029
                  %v1031 = vld [vmem:[%s737 + $0x490] sm:$0xf]
                  %1032 = vst [vmem:[%s738 + $0x248] sm:$0xf] %v1031
                  %v1033 = vld [vmem:[%s737 + $0x498] sm:$0xf]
                  %1034 = vst [vmem:[%s738 + $0x24c] sm:$0xf] %v1033
                  %v1035 = vld [vmem:[%s737 + $0x4a0] sm:$0xf]
                  %1036 = vst [vmem:[%s738 + $0x250] sm:$0xf] %v1035
                  %v1037 = vld [vmem:[%s737 + $0x4a8] sm:$0xf]
                  %1038 = vst [vmem:[%s738 + $0x254] sm:$0xf] %v1037
                  %v1039 = vld [vmem:[%s737 + $0x4b0] sm:$0xf]
                  %1040 = vst [vmem:[%s738 + $0x258] sm:$0xf] %v1039
                  %v1041 = vld [vmem:[%s737 + $0x4b8] sm:$0xf]
                  %1042 = vst [vmem:[%s738 + $0x25c] sm:$0xf] %v1041
                  %v1043 = vld [vmem:[%s737 + $0x4c0] sm:$0xf]
                  %1044 = vst [vmem:[%s738 + $0x260] sm:$0xf] %v1043
                  %v1045 = vld [vmem:[%s737 + $0x4c8] sm:$0xf]
                  %1046 = vst [vmem:[%s738 + $0x264] sm:$0xf] %v1045
                  %v1047 = vld [vmem:[%s737 + $0x4d0] sm:$0xf]
                  %1048 = vst [vmem:[%s738 + $0x268] sm:$0xf] %v1047
                  %v1049 = vld [vmem:[%s737 + $0x4d8] sm:$0xf]
                  %1050 = vst [vmem:[%s738 + $0x26c] sm:$0xf] %v1049
                  %v1051 = vld [vmem:[%s737 + $0x4e0] sm:$0xf]
                  %1052 = vst [vmem:[%s738 + $0x270] sm:$0xf] %v1051
                  %v1053 = vld [vmem:[%s737 + $0x4e8] sm:$0xf]
                  %1054 = vst [vmem:[%s738 + $0x274] sm:$0xf] %v1053
                  %v1055 = vld [vmem:[%s737 + $0x4f0] sm:$0xf]
                  %1056 = vst [vmem:[%s738 + $0x278] sm:$0xf] %v1055
                  %v1057 = vld [vmem:[%s737 + $0x4f8] sm:$0xf]
                  %1058 = vst [vmem:[%s738 + $0x27c] sm:$0xf] %v1057
                  %v1059 = vld [vmem:[%s737 + $0x500] sm:$0xf]
                  %1060 = vst [vmem:[%s738 + $0x280] sm:$0xf] %v1059
                  %v1061 = vld [vmem:[%s737 + $0x508] sm:$0xf]
                  %1062 = vst [vmem:[%s738 + $0x284] sm:$0xf] %v1061
                  %v1063 = vld [vmem:[%s737 + $0x510] sm:$0xf]
                  %1064 = vst [vmem:[%s738 + $0x288] sm:$0xf] %v1063
                  %v1065 = vld [vmem:[%s737 + $0x518] sm:$0xf]
                  %1066 = vst [vmem:[%s738 + $0x28c] sm:$0xf] %v1065
                  %v1067 = vld [vmem:[%s737 + $0x520] sm:$0xf]
                  %1068 = vst [vmem:[%s738 + $0x290] sm:$0xf] %v1067
                  %v1069 = vld [vmem:[%s737 + $0x528] sm:$0xf]
                  %1070 = vst [vmem:[%s738 + $0x294] sm:$0xf] %v1069
                  %v1071 = vld [vmem:[%s737 + $0x530] sm:$0xf]
                  %1072 = vst [vmem:[%s738 + $0x298] sm:$0xf] %v1071
                  %v1073 = vld [vmem:[%s737 + $0x538] sm:$0xf]
                  %1074 = vst [vmem:[%s738 + $0x29c] sm:$0xf] %v1073
                  %v1075 = vld [vmem:[%s737 + $0x540] sm:$0xf]
                  %1076 = vst [vmem:[%s738 + $0x2a0] sm:$0xf] %v1075
                  %v1077 = vld [vmem:[%s737 + $0x548] sm:$0xf]
                  %1078 = vst [vmem:[%s738 + $0x2a4] sm:$0xf] %v1077
                  %v1079 = vld [vmem:[%s737 + $0x550] sm:$0xf]
                  %1080 = vst [vmem:[%s738 + $0x2a8] sm:$0xf] %v1079
                  %v1081 = vld [vmem:[%s737 + $0x558] sm:$0xf]
                  %1082 = vst [vmem:[%s738 + $0x2ac] sm:$0xf] %v1081
                  %v1083 = vld [vmem:[%s737 + $0x560] sm:$0xf]
                  %1084 = vst [vmem:[%s738 + $0x2b0] sm:$0xf] %v1083
                  %v1085 = vld [vmem:[%s737 + $0x568] sm:$0xf]
                  %1086 = vst [vmem:[%s738 + $0x2b4] sm:$0xf] %v1085
                  %v1087 = vld [vmem:[%s737 + $0x570] sm:$0xf]
                  %1088 = vst [vmem:[%s738 + $0x2b8] sm:$0xf] %v1087
                  %v1089 = vld [vmem:[%s737 + $0x578] sm:$0xf]
                  %1090 = vst [vmem:[%s738 + $0x2bc] sm:$0xf] %v1089
                  %v1091 = vld [vmem:[%s737 + $0x580] sm:$0xf]
                  %1092 = vst [vmem:[%s738 + $0x2c0] sm:$0xf] %v1091
                  %v1093 = vld [vmem:[%s737 + $0x588] sm:$0xf]
                  %1094 = vst [vmem:[%s738 + $0x2c4] sm:$0xf] %v1093
                  %v1095 = vld [vmem:[%s737 + $0x590] sm:$0xf]
                  %1096 = vst [vmem:[%s738 + $0x2c8] sm:$0xf] %v1095
                  %v1097 = vld [vmem:[%s737 + $0x598] sm:$0xf]
                  %1098 = vst [vmem:[%s738 + $0x2cc] sm:$0xf] %v1097
                  %v1099 = vld [vmem:[%s737 + $0x5a0] sm:$0xf]
                  %1100 = vst [vmem:[%s738 + $0x2d0] sm:$0xf] %v1099
                  %v1101 = vld [vmem:[%s737 + $0x5a8] sm:$0xf]
                  %1102 = vst [vmem:[%s738 + $0x2d4] sm:$0xf] %v1101
                  %v1103 = vld [vmem:[%s737 + $0x5b0] sm:$0xf]
                  %1104 = vst [vmem:[%s738 + $0x2d8] sm:$0xf] %v1103
                  %v1105 = vld [vmem:[%s737 + $0x5b8] sm:$0xf]
                  %1106 = vst [vmem:[%s738 + $0x2dc] sm:$0xf] %v1105
                  %v1107 = vld [vmem:[%s737 + $0x5c0] sm:$0xf]
                  %1108 = vst [vmem:[%s738 + $0x2e0] sm:$0xf] %v1107
                  %v1109 = vld [vmem:[%s737 + $0x5c8] sm:$0xf]
                  %1110 = vst [vmem:[%s738 + $0x2e4] sm:$0xf] %v1109
                  %v1111 = vld [vmem:[%s737 + $0x5d0] sm:$0xf]
                  %1112 = vst [vmem:[%s738 + $0x2e8] sm:$0xf] %v1111
                  %v1113 = vld [vmem:[%s737 + $0x5d8] sm:$0xf]
                  %1114 = vst [vmem:[%s738 + $0x2ec] sm:$0xf] %v1113
                  %v1115 = vld [vmem:[%s737 + $0x5e0] sm:$0xf]
                  %1116 = vst [vmem:[%s738 + $0x2f0] sm:$0xf] %v1115
                  %v1117 = vld [vmem:[%s737 + $0x5e8] sm:$0xf]
                  %1118 = vst [vmem:[%s738 + $0x2f4] sm:$0xf] %v1117
                  %v1119 = vld [vmem:[%s737 + $0x5f0] sm:$0xf]
                  %1120 = vst [vmem:[%s738 + $0x2f8] sm:$0xf] %v1119
                  %v1121 = vld [vmem:[%s737 + $0x5f8] sm:$0xf]
                  %1122 = vst [vmem:[%s738 + $0x2fc] sm:$0xf] %v1121
                  %v1123 = vld [vmem:[%s737 + $0x600] sm:$0xf]
                  %1124 = vst [vmem:[%s738 + $0x300] sm:$0xf] %v1123
                  %v1125 = vld [vmem:[%s737 + $0x608] sm:$0xf]
                  %1126 = vst [vmem:[%s738 + $0x304] sm:$0xf] %v1125
                  %v1127 = vld [vmem:[%s737 + $0x610] sm:$0xf]
                  %1128 = vst [vmem:[%s738 + $0x308] sm:$0xf] %v1127
                  %v1129 = vld [vmem:[%s737 + $0x618] sm:$0xf]
                  %1130 = vst [vmem:[%s738 + $0x30c] sm:$0xf] %v1129
                  %v1131 = vld [vmem:[%s737 + $0x620] sm:$0xf]
                  %1132 = vst [vmem:[%s738 + $0x310] sm:$0xf] %v1131
                  %v1133 = vld [vmem:[%s737 + $0x628] sm:$0xf]
                  %1134 = vst [vmem:[%s738 + $0x314] sm:$0xf] %v1133
                  %v1135 = vld [vmem:[%s737 + $0x630] sm:$0xf]
                  %1136 = vst [vmem:[%s738 + $0x318] sm:$0xf] %v1135
                  %v1137 = vld [vmem:[%s737 + $0x638] sm:$0xf]
                  %1138 = vst [vmem:[%s738 + $0x31c] sm:$0xf] %v1137
                  %v1139 = vld [vmem:[%s737 + $0x640] sm:$0xf]
                  %1140 = vst [vmem:[%s738 + $0x320] sm:$0xf] %v1139
                  %v1141 = vld [vmem:[%s737 + $0x648] sm:$0xf]
                  %1142 = vst [vmem:[%s738 + $0x324] sm:$0xf] %v1141
                  %v1143 = vld [vmem:[%s737 + $0x650] sm:$0xf]
                  %1144 = vst [vmem:[%s738 + $0x328] sm:$0xf] %v1143
                  %v1145 = vld [vmem:[%s737 + $0x658] sm:$0xf]
                  %1146 = vst [vmem:[%s738 + $0x32c] sm:$0xf] %v1145
                  %v1147 = vld [vmem:[%s737 + $0x660] sm:$0xf]
                  %1148 = vst [vmem:[%s738 + $0x330] sm:$0xf] %v1147
                  %v1149 = vld [vmem:[%s737 + $0x668] sm:$0xf]
                  %1150 = vst [vmem:[%s738 + $0x334] sm:$0xf] %v1149
                  %v1151 = vld [vmem:[%s737 + $0x670] sm:$0xf]
                  %1152 = vst [vmem:[%s738 + $0x338] sm:$0xf] %v1151
                  %v1153 = vld [vmem:[%s737 + $0x678] sm:$0xf]
                  %1154 = vst [vmem:[%s738 + $0x33c] sm:$0xf] %v1153
                  %v1155 = vld [vmem:[%s737 + $0x680] sm:$0xf]
                  %1156 = vst [vmem:[%s738 + $0x340] sm:$0xf] %v1155
                  %v1157 = vld [vmem:[%s737 + $0x688] sm:$0xf]
                  %1158 = vst [vmem:[%s738 + $0x344] sm:$0xf] %v1157
                  %v1159 = vld [vmem:[%s737 + $0x690] sm:$0xf]
                  %1160 = vst [vmem:[%s738 + $0x348] sm:$0xf] %v1159
                  %v1161 = vld [vmem:[%s737 + $0x698] sm:$0xf]
                  %1162 = vst [vmem:[%s738 + $0x34c] sm:$0xf] %v1161
                  %v1163 = vld [vmem:[%s737 + $0x6a0] sm:$0xf]
                  %1164 = vst [vmem:[%s738 + $0x350] sm:$0xf] %v1163
                  %v1165 = vld [vmem:[%s737 + $0x6a8] sm:$0xf]
                  %1166 = vst [vmem:[%s738 + $0x354] sm:$0xf] %v1165
                  %v1167 = vld [vmem:[%s737 + $0x6b0] sm:$0xf]
                  %1168 = vst [vmem:[%s738 + $0x358] sm:$0xf] %v1167
                  %v1169 = vld [vmem:[%s737 + $0x6b8] sm:$0xf]
                  %1170 = vst [vmem:[%s738 + $0x35c] sm:$0xf] %v1169
                  %v1171 = vld [vmem:[%s737 + $0x6c0] sm:$0xf]
                  %1172 = vst [vmem:[%s738 + $0x360] sm:$0xf] %v1171
                  %v1173 = vld [vmem:[%s737 + $0x6c8] sm:$0xf]
                  %1174 = vst [vmem:[%s738 + $0x364] sm:$0xf] %v1173
                  %v1175 = vld [vmem:[%s737 + $0x6d0] sm:$0xf]
                  %1176 = vst [vmem:[%s738 + $0x368] sm:$0xf] %v1175
                  %v1177 = vld [vmem:[%s737 + $0x6d8] sm:$0xf]
                  %1178 = vst [vmem:[%s738 + $0x36c] sm:$0xf] %v1177
                  %v1179 = vld [vmem:[%s737 + $0x6e0] sm:$0xf]
                  %1180 = vst [vmem:[%s738 + $0x370] sm:$0xf] %v1179
                  %v1181 = vld [vmem:[%s737 + $0x6e8] sm:$0xf]
                  %1182 = vst [vmem:[%s738 + $0x374] sm:$0xf] %v1181
                  %v1183 = vld [vmem:[%s737 + $0x6f0] sm:$0xf]
                  %1184 = vst [vmem:[%s738 + $0x378] sm:$0xf] %v1183
                  %v1185 = vld [vmem:[%s737 + $0x6f8] sm:$0xf]
                  %1186 = vst [vmem:[%s738 + $0x37c] sm:$0xf] %v1185
                  %v1187 = vld [vmem:[%s737 + $0x700] sm:$0xf]
                  %1188 = vst [vmem:[%s738 + $0x380] sm:$0xf] %v1187
                  %v1189 = vld [vmem:[%s737 + $0x708] sm:$0xf]
                  %1190 = vst [vmem:[%s738 + $0x384] sm:$0xf] %v1189
                  %v1191 = vld [vmem:[%s737 + $0x710] sm:$0xf]
                  %1192 = vst [vmem:[%s738 + $0x388] sm:$0xf] %v1191
                  %v1193 = vld [vmem:[%s737 + $0x718] sm:$0xf]
                  %1194 = vst [vmem:[%s738 + $0x38c] sm:$0xf] %v1193
                  %v1195 = vld [vmem:[%s737 + $0x720] sm:$0xf]
                  %1196 = vst [vmem:[%s738 + $0x390] sm:$0xf] %v1195
                  %v1197 = vld [vmem:[%s737 + $0x728] sm:$0xf]
                  %1198 = vst [vmem:[%s738 + $0x394] sm:$0xf] %v1197
                  %v1199 = vld [vmem:[%s737 + $0x730] sm:$0xf]
                  %1200 = vst [vmem:[%s738 + $0x398] sm:$0xf] %v1199
                  %v1201 = vld [vmem:[%s737 + $0x738] sm:$0xf]
                  %1202 = vst [vmem:[%s738 + $0x39c] sm:$0xf] %v1201
                  %v1203 = vld [vmem:[%s737 + $0x740] sm:$0xf]
                  %1204 = vst [vmem:[%s738 + $0x3a0] sm:$0xf] %v1203
                  %v1205 = vld [vmem:[%s737 + $0x748] sm:$0xf]
                  %1206 = vst [vmem:[%s738 + $0x3a4] sm:$0xf] %v1205
                  %v1207 = vld [vmem:[%s737 + $0x750] sm:$0xf]
                  %1208 = vst [vmem:[%s738 + $0x3a8] sm:$0xf] %v1207
                  %v1209 = vld [vmem:[%s737 + $0x758] sm:$0xf]
                  %1210 = vst [vmem:[%s738 + $0x3ac] sm:$0xf] %v1209
                  %v1211 = vld [vmem:[%s737 + $0x760] sm:$0xf]
                  %1212 = vst [vmem:[%s738 + $0x3b0] sm:$0xf] %v1211
                  %v1213 = vld [vmem:[%s737 + $0x768] sm:$0xf]
                  %1214 = vst [vmem:[%s738 + $0x3b4] sm:$0xf] %v1213
                  %v1215 = vld [vmem:[%s737 + $0x770] sm:$0xf]
                  %1216 = vst [vmem:[%s738 + $0x3b8] sm:$0xf] %v1215
                  %v1217 = vld [vmem:[%s737 + $0x778] sm:$0xf]
                  %1218 = vst [vmem:[%s738 + $0x3bc] sm:$0xf] %v1217
                  %v1219 = vld [vmem:[%s737 + $0x780] sm:$0xf]
                  %1220 = vst [vmem:[%s738 + $0x3c0] sm:$0xf] %v1219
                  %v1221 = vld [vmem:[%s737 + $0x788] sm:$0xf]
                  %1222 = vst [vmem:[%s738 + $0x3c4] sm:$0xf] %v1221
                  %v1223 = vld [vmem:[%s737 + $0x790] sm:$0xf]
                  %1224 = vst [vmem:[%s738 + $0x3c8] sm:$0xf] %v1223
                  %v1225 = vld [vmem:[%s737 + $0x798] sm:$0xf]
                  %1226 = vst [vmem:[%s738 + $0x3cc] sm:$0xf] %v1225
                  %v1227 = vld [vmem:[%s737 + $0x7a0] sm:$0xf]
                  %1228 = vst [vmem:[%s738 + $0x3d0] sm:$0xf] %v1227
                  %v1229 = vld [vmem:[%s737 + $0x7a8] sm:$0xf]
                  %1230 = vst [vmem:[%s738 + $0x3d4] sm:$0xf] %v1229
                  %v1231 = vld [vmem:[%s737 + $0x7b0] sm:$0xf]
                  %1232 = vst [vmem:[%s738 + $0x3d8] sm:$0xf] %v1231
                  %v1233 = vld [vmem:[%s737 + $0x7b8] sm:$0xf]
                  %1234 = vst [vmem:[%s738 + $0x3dc] sm:$0xf] %v1233
                  %v1235 = vld [vmem:[%s737 + $0x7c0] sm:$0xf]
                  %1236 = vst [vmem:[%s738 + $0x3e0] sm:$0xf] %v1235
                  %v1237 = vld [vmem:[%s737 + $0x7c8] sm:$0xf]
                  %1238 = vst [vmem:[%s738 + $0x3e4] sm:$0xf] %v1237
                  %v1239 = vld [vmem:[%s737 + $0x7d0] sm:$0xf]
                  %1240 = vst [vmem:[%s738 + $0x3e8] sm:$0xf] %v1239
                  %v1241 = vld [vmem:[%s737 + $0x7d8] sm:$0xf]
                  %1242 = vst [vmem:[%s738 + $0x3ec] sm:$0xf] %v1241
                  %v1243 = vld [vmem:[%s737 + $0x7e0] sm:$0xf]
                  %1244 = vst [vmem:[%s738 + $0x3f0] sm:$0xf] %v1243
                  %v1245 = vld [vmem:[%s737 + $0x7e8] sm:$0xf]
                  %1246 = vst [vmem:[%s738 + $0x3f4] sm:$0xf] %v1245
                  %v1247 = vld [vmem:[%s737 + $0x7f0] sm:$0xf]
                  %1248 = vst [vmem:[%s738 + $0x3f8] sm:$0xf] %v1247
                  %v1249 = vld [vmem:[%s737 + $0x7f8] sm:$0xf]
                  %1250 = vst [vmem:[%s738 + $0x3fc] sm:$0xf] %v1249
                $region59: #{conditional_discriminator.5} parent=46 // loop_footer
                  %s736 = sadd.s32 1, %s732
                $region60: #{conditional_discriminator.5} parent=46 // loop_footer_branch
                  %731 = sbr.rel target = $region56
                $region61: #{conditional_discriminator.5} parent=46 // loop_exit
                  _
              $region47: #{conditional_discriminator.5} parent=31 // pred_fallthru
                _
            $region32: #{conditional_discriminator.5} parent=27 // pred_fallthru
              _
            // Predicated region
            $region33: #{conditional_discriminator.5} parent=27 // pred_check
              _
            $region34: #{conditional_discriminator.5} parent=27 // pred_check_branch
              %198 = sbr.rel (0) target = $region36
            $region35: #{conditional_discriminator.5} parent=27 // pred_region
              loop: start=0, step=1, limit=1
              $region37: #{conditional_discriminator.5} parent=35 // loop_pre_header
                _
              $region38: #{conditional_discriminator.5} parent=35 // loop_header
                %s201 = sphi 0, %s205
                %p202 = scmp.ge.s32.totalorder %s201, 1
                %s206 = sphi %s192, %s192
                %s207 = sphi %s190, %s190
              $region39: #{conditional_discriminator.5} parent=35 // loop_header_branch
                %204 = sbr.rel (%p202) target = $region43
              $region40: #{conditional_discriminator.5} parent=35 // loop_body
                %v208 = vld [vmem:[%s206] sm:$0xf]
                %209 = vst [vmem:[%s207] sm:$0xf] %v208
                %v210 = vld [vmem:[%s206 + $0x8] sm:$0xf]
                %211 = vst [vmem:[%s207 + $0x4] sm:$0xf] %v210
                %v212 = vld [vmem:[%s206 + $0x10] sm:$0xf]
                %213 = vst [vmem:[%s207 + $0x8] sm:$0xf] %v212
                %v214 = vld [vmem:[%s206 + $0x18] sm:$0xf]
                %215 = vst [vmem:[%s207 + $0xc] sm:$0xf] %v214
                %v216 = vld [vmem:[%s206 + $0x20] sm:$0xf]
                %217 = vst [vmem:[%s207 + $0x10] sm:$0xf] %v216
                %v218 = vld [vmem:[%s206 + $0x28] sm:$0xf]
                %219 = vst [vmem:[%s207 + $0x14] sm:$0xf] %v218
                %v220 = vld [vmem:[%s206 + $0x30] sm:$0xf]
                %221 = vst [vmem:[%s207 + $0x18] sm:$0xf] %v220
                %v222 = vld [vmem:[%s206 + $0x38] sm:$0xf]
                %223 = vst [vmem:[%s207 + $0x1c] sm:$0xf] %v222
                %v224 = vld [vmem:[%s206 + $0x40] sm:$0xf]
                %225 = vst [vmem:[%s207 + $0x20] sm:$0xf] %v224
                %v226 = vld [vmem:[%s206 + $0x48] sm:$0xf]
                %227 = vst [vmem:[%s207 + $0x24] sm:$0xf] %v226
                %v228 = vld [vmem:[%s206 + $0x50] sm:$0xf]
                %229 = vst [vmem:[%s207 + $0x28] sm:$0xf] %v228
                %v230 = vld [vmem:[%s206 + $0x58] sm:$0xf]
                %231 = vst [vmem:[%s207 + $0x2c] sm:$0xf] %v230
                %v232 = vld [vmem:[%s206 + $0x60] sm:$0xf]
                %233 = vst [vmem:[%s207 + $0x30] sm:$0xf] %v232
                %v234 = vld [vmem:[%s206 + $0x68] sm:$0xf]
                %235 = vst [vmem:[%s207 + $0x34] sm:$0xf] %v234
                %v236 = vld [vmem:[%s206 + $0x70] sm:$0xf]
                %237 = vst [vmem:[%s207 + $0x38] sm:$0xf] %v236
                %v238 = vld [vmem:[%s206 + $0x78] sm:$0xf]
                %239 = vst [vmem:[%s207 + $0x3c] sm:$0xf] %v238
                %v240 = vld [vmem:[%s206 + $0x80] sm:$0xf]
                %241 = vst [vmem:[%s207 + $0x40] sm:$0xf] %v240
                %v242 = vld [vmem:[%s206 + $0x88] sm:$0xf]
                %243 = vst [vmem:[%s207 + $0x44] sm:$0xf] %v242
                %v244 = vld [vmem:[%s206 + $0x90] sm:$0xf]
                %245 = vst [vmem:[%s207 + $0x48] sm:$0xf] %v244
                %v246 = vld [vmem:[%s206 + $0x98] sm:$0xf]
                %247 = vst [vmem:[%s207 + $0x4c] sm:$0xf] %v246
                %v248 = vld [vmem:[%s206 + $0xa0] sm:$0xf]
                %249 = vst [vmem:[%s207 + $0x50] sm:$0xf] %v248
                %v250 = vld [vmem:[%s206 + $0xa8] sm:$0xf]
                %251 = vst [vmem:[%s207 + $0x54] sm:$0xf] %v250
                %v252 = vld [vmem:[%s206 + $0xb0] sm:$0xf]
                %253 = vst [vmem:[%s207 + $0x58] sm:$0xf] %v252
                %v254 = vld [vmem:[%s206 + $0xb8] sm:$0xf]
                %255 = vst [vmem:[%s207 + $0x5c] sm:$0xf] %v254
                %v256 = vld [vmem:[%s206 + $0xc0] sm:$0xf]
                %257 = vst [vmem:[%s207 + $0x60] sm:$0xf] %v256
                %v258 = vld [vmem:[%s206 + $0xc8] sm:$0xf]
                %259 = vst [vmem:[%s207 + $0x64] sm:$0xf] %v258
                %v260 = vld [vmem:[%s206 + $0xd0] sm:$0xf]
                %261 = vst [vmem:[%s207 + $0x68] sm:$0xf] %v260
                %v262 = vld [vmem:[%s206 + $0xd8] sm:$0xf]
                %263 = vst [vmem:[%s207 + $0x6c] sm:$0xf] %v262
                %v264 = vld [vmem:[%s206 + $0xe0] sm:$0xf]
                %265 = vst [vmem:[%s207 + $0x70] sm:$0xf] %v264
                %v266 = vld [vmem:[%s206 + $0xe8] sm:$0xf]
                %267 = vst [vmem:[%s207 + $0x74] sm:$0xf] %v266
                %v268 = vld [vmem:[%s206 + $0xf0] sm:$0xf]
                %269 = vst [vmem:[%s207 + $0x78] sm:$0xf] %v268
                %v270 = vld [vmem:[%s206 + $0xf8] sm:$0xf]
                %271 = vst [vmem:[%s207 + $0x7c] sm:$0xf] %v270
                %v272 = vld [vmem:[%s206 + $0x100] sm:$0xf]
                %273 = vst [vmem:[%s207 + $0x80] sm:$0xf] %v272
                %v274 = vld [vmem:[%s206 + $0x108] sm:$0xf]
                %275 = vst [vmem:[%s207 + $0x84] sm:$0xf] %v274
                %v276 = vld [vmem:[%s206 + $0x110] sm:$0xf]
                %277 = vst [vmem:[%s207 + $0x88] sm:$0xf] %v276
                %v278 = vld [vmem:[%s206 + $0x118] sm:$0xf]
                %279 = vst [vmem:[%s207 + $0x8c] sm:$0xf] %v278
                %v280 = vld [vmem:[%s206 + $0x120] sm:$0xf]
                %281 = vst [vmem:[%s207 + $0x90] sm:$0xf] %v280
                %v282 = vld [vmem:[%s206 + $0x128] sm:$0xf]
                %283 = vst [vmem:[%s207 + $0x94] sm:$0xf] %v282
                %v284 = vld [vmem:[%s206 + $0x130] sm:$0xf]
                %285 = vst [vmem:[%s207 + $0x98] sm:$0xf] %v284
                %v286 = vld [vmem:[%s206 + $0x138] sm:$0xf]
                %287 = vst [vmem:[%s207 + $0x9c] sm:$0xf] %v286
                %v288 = vld [vmem:[%s206 + $0x140] sm:$0xf]
                %289 = vst [vmem:[%s207 + $0xa0] sm:$0xf] %v288
                %v290 = vld [vmem:[%s206 + $0x148] sm:$0xf]
                %291 = vst [vmem:[%s207 + $0xa4] sm:$0xf] %v290
                %v292 = vld [vmem:[%s206 + $0x150] sm:$0xf]
                %293 = vst [vmem:[%s207 + $0xa8] sm:$0xf] %v292
                %v294 = vld [vmem:[%s206 + $0x158] sm:$0xf]
                %295 = vst [vmem:[%s207 + $0xac] sm:$0xf] %v294
                %v296 = vld [vmem:[%s206 + $0x160] sm:$0xf]
                %297 = vst [vmem:[%s207 + $0xb0] sm:$0xf] %v296
                %v298 = vld [vmem:[%s206 + $0x168] sm:$0xf]
                %299 = vst [vmem:[%s207 + $0xb4] sm:$0xf] %v298
                %v300 = vld [vmem:[%s206 + $0x170] sm:$0xf]
                %301 = vst [vmem:[%s207 + $0xb8] sm:$0xf] %v300
                %v302 = vld [vmem:[%s206 + $0x178] sm:$0xf]
                %303 = vst [vmem:[%s207 + $0xbc] sm:$0xf] %v302
                %v304 = vld [vmem:[%s206 + $0x180] sm:$0xf]
                %305 = vst [vmem:[%s207 + $0xc0] sm:$0xf] %v304
                %v306 = vld [vmem:[%s206 + $0x188] sm:$0xf]
                %307 = vst [vmem:[%s207 + $0xc4] sm:$0xf] %v306
                %v308 = vld [vmem:[%s206 + $0x190] sm:$0xf]
                %309 = vst [vmem:[%s207 + $0xc8] sm:$0xf] %v308
                %v310 = vld [vmem:[%s206 + $0x198] sm:$0xf]
                %311 = vst [vmem:[%s207 + $0xcc] sm:$0xf] %v310
                %v312 = vld [vmem:[%s206 + $0x1a0] sm:$0xf]
                %313 = vst [vmem:[%s207 + $0xd0] sm:$0xf] %v312
                %v314 = vld [vmem:[%s206 + $0x1a8] sm:$0xf]
                %315 = vst [vmem:[%s207 + $0xd4] sm:$0xf] %v314
                %v316 = vld [vmem:[%s206 + $0x1b0] sm:$0xf]
                %317 = vst [vmem:[%s207 + $0xd8] sm:$0xf] %v316
                %v318 = vld [vmem:[%s206 + $0x1b8] sm:$0xf]
                %319 = vst [vmem:[%s207 + $0xdc] sm:$0xf] %v318
                %v320 = vld [vmem:[%s206 + $0x1c0] sm:$0xf]
                %321 = vst [vmem:[%s207 + $0xe0] sm:$0xf] %v320
                %v322 = vld [vmem:[%s206 + $0x1c8] sm:$0xf]
                %323 = vst [vmem:[%s207 + $0xe4] sm:$0xf] %v322
                %v324 = vld [vmem:[%s206 + $0x1d0] sm:$0xf]
                %325 = vst [vmem:[%s207 + $0xe8] sm:$0xf] %v324
                %v326 = vld [vmem:[%s206 + $0x1d8] sm:$0xf]
                %327 = vst [vmem:[%s207 + $0xec] sm:$0xf] %v326
                %v328 = vld [vmem:[%s206 + $0x1e0] sm:$0xf]
                %329 = vst [vmem:[%s207 + $0xf0] sm:$0xf] %v328
                %v330 = vld [vmem:[%s206 + $0x1e8] sm:$0xf]
                %331 = vst [vmem:[%s207 + $0xf4] sm:$0xf] %v330
                %v332 = vld [vmem:[%s206 + $0x1f0] sm:$0xf]
                %333 = vst [vmem:[%s207 + $0xf8] sm:$0xf] %v332
                %v334 = vld [vmem:[%s206 + $0x1f8] sm:$0xf]
                %335 = vst [vmem:[%s207 + $0xfc] sm:$0xf] %v334
                %v336 = vld [vmem:[%s206 + $0x200] sm:$0xf]
                %337 = vst [vmem:[%s207 + $0x100] sm:$0xf] %v336
                %v338 = vld [vmem:[%s206 + $0x208] sm:$0xf]
                %339 = vst [vmem:[%s207 + $0x104] sm:$0xf] %v338
                %v340 = vld [vmem:[%s206 + $0x210] sm:$0xf]
                %341 = vst [vmem:[%s207 + $0x108] sm:$0xf] %v340
                %v342 = vld [vmem:[%s206 + $0x218] sm:$0xf]
                %343 = vst [vmem:[%s207 + $0x10c] sm:$0xf] %v342
                %v344 = vld [vmem:[%s206 + $0x220] sm:$0xf]
                %345 = vst [vmem:[%s207 + $0x110] sm:$0xf] %v344
                %v346 = vld [vmem:[%s206 + $0x228] sm:$0xf]
                %347 = vst [vmem:[%s207 + $0x114] sm:$0xf] %v346
                %v348 = vld [vmem:[%s206 + $0x230] sm:$0xf]
                %349 = vst [vmem:[%s207 + $0x118] sm:$0xf] %v348
                %v350 = vld [vmem:[%s206 + $0x238] sm:$0xf]
                %351 = vst [vmem:[%s207 + $0x11c] sm:$0xf] %v350
                %v352 = vld [vmem:[%s206 + $0x240] sm:$0xf]
                %353 = vst [vmem:[%s207 + $0x120] sm:$0xf] %v352
                %v354 = vld [vmem:[%s206 + $0x248] sm:$0xf]
                %355 = vst [vmem:[%s207 + $0x124] sm:$0xf] %v354
                %v356 = vld [vmem:[%s206 + $0x250] sm:$0xf]
                %357 = vst [vmem:[%s207 + $0x128] sm:$0xf] %v356
                %v358 = vld [vmem:[%s206 + $0x258] sm:$0xf]
                %359 = vst [vmem:[%s207 + $0x12c] sm:$0xf] %v358
                %v360 = vld [vmem:[%s206 + $0x260] sm:$0xf]
                %361 = vst [vmem:[%s207 + $0x130] sm:$0xf] %v360
                %v362 = vld [vmem:[%s206 + $0x268] sm:$0xf]
                %363 = vst [vmem:[%s207 + $0x134] sm:$0xf] %v362
                %v364 = vld [vmem:[%s206 + $0x270] sm:$0xf]
                %365 = vst [vmem:[%s207 + $0x138] sm:$0xf] %v364
                %v366 = vld [vmem:[%s206 + $0x278] sm:$0xf]
                %367 = vst [vmem:[%s207 + $0x13c] sm:$0xf] %v366
                %v368 = vld [vmem:[%s206 + $0x280] sm:$0xf]
                %369 = vst [vmem:[%s207 + $0x140] sm:$0xf] %v368
                %v370 = vld [vmem:[%s206 + $0x288] sm:$0xf]
                %371 = vst [vmem:[%s207 + $0x144] sm:$0xf] %v370
                %v372 = vld [vmem:[%s206 + $0x290] sm:$0xf]
                %373 = vst [vmem:[%s207 + $0x148] sm:$0xf] %v372
                %v374 = vld [vmem:[%s206 + $0x298] sm:$0xf]
                %375 = vst [vmem:[%s207 + $0x14c] sm:$0xf] %v374
                %v376 = vld [vmem:[%s206 + $0x2a0] sm:$0xf]
                %377 = vst [vmem:[%s207 + $0x150] sm:$0xf] %v376
                %v378 = vld [vmem:[%s206 + $0x2a8] sm:$0xf]
                %379 = vst [vmem:[%s207 + $0x154] sm:$0xf] %v378
                %v380 = vld [vmem:[%s206 + $0x2b0] sm:$0xf]
                %381 = vst [vmem:[%s207 + $0x158] sm:$0xf] %v380
                %v382 = vld [vmem:[%s206 + $0x2b8] sm:$0xf]
                %383 = vst [vmem:[%s207 + $0x15c] sm:$0xf] %v382
                %v384 = vld [vmem:[%s206 + $0x2c0] sm:$0xf]
                %385 = vst [vmem:[%s207 + $0x160] sm:$0xf] %v384
                %v386 = vld [vmem:[%s206 + $0x2c8] sm:$0xf]
                %387 = vst [vmem:[%s207 + $0x164] sm:$0xf] %v386
                %v388 = vld [vmem:[%s206 + $0x2d0] sm:$0xf]
                %389 = vst [vmem:[%s207 + $0x168] sm:$0xf] %v388
                %v390 = vld [vmem:[%s206 + $0x2d8] sm:$0xf]
                %391 = vst [vmem:[%s207 + $0x16c] sm:$0xf] %v390
                %v392 = vld [vmem:[%s206 + $0x2e0] sm:$0xf]
                %393 = vst [vmem:[%s207 + $0x170] sm:$0xf] %v392
                %v394 = vld [vmem:[%s206 + $0x2e8] sm:$0xf]
                %395 = vst [vmem:[%s207 + $0x174] sm:$0xf] %v394
                %v396 = vld [vmem:[%s206 + $0x2f0] sm:$0xf]
                %397 = vst [vmem:[%s207 + $0x178] sm:$0xf] %v396
                %v398 = vld [vmem:[%s206 + $0x2f8] sm:$0xf]
                %399 = vst [vmem:[%s207 + $0x17c] sm:$0xf] %v398
                %v400 = vld [vmem:[%s206 + $0x300] sm:$0xf]
                %401 = vst [vmem:[%s207 + $0x180] sm:$0xf] %v400
                %v402 = vld [vmem:[%s206 + $0x308] sm:$0xf]
                %403 = vst [vmem:[%s207 + $0x184] sm:$0xf] %v402
                %v404 = vld [vmem:[%s206 + $0x310] sm:$0xf]
                %405 = vst [vmem:[%s207 + $0x188] sm:$0xf] %v404
                %v406 = vld [vmem:[%s206 + $0x318] sm:$0xf]
                %407 = vst [vmem:[%s207 + $0x18c] sm:$0xf] %v406
                %v408 = vld [vmem:[%s206 + $0x320] sm:$0xf]
                %409 = vst [vmem:[%s207 + $0x190] sm:$0xf] %v408
                %v410 = vld [vmem:[%s206 + $0x328] sm:$0xf]
                %411 = vst [vmem:[%s207 + $0x194] sm:$0xf] %v410
                %v412 = vld [vmem:[%s206 + $0x330] sm:$0xf]
                %413 = vst [vmem:[%s207 + $0x198] sm:$0xf] %v412
                %v414 = vld [vmem:[%s206 + $0x338] sm:$0xf]
                %415 = vst [vmem:[%s207 + $0x19c] sm:$0xf] %v414
                %v416 = vld [vmem:[%s206 + $0x340] sm:$0xf]
                %417 = vst [vmem:[%s207 + $0x1a0] sm:$0xf] %v416
                %v418 = vld [vmem:[%s206 + $0x348] sm:$0xf]
                %419 = vst [vmem:[%s207 + $0x1a4] sm:$0xf] %v418
                %v420 = vld [vmem:[%s206 + $0x350] sm:$0xf]
                %421 = vst [vmem:[%s207 + $0x1a8] sm:$0xf] %v420
                %v422 = vld [vmem:[%s206 + $0x358] sm:$0xf]
                %423 = vst [vmem:[%s207 + $0x1ac] sm:$0xf] %v422
                %v424 = vld [vmem:[%s206 + $0x360] sm:$0xf]
                %425 = vst [vmem:[%s207 + $0x1b0] sm:$0xf] %v424
                %v426 = vld [vmem:[%s206 + $0x368] sm:$0xf]
                %427 = vst [vmem:[%s207 + $0x1b4] sm:$0xf] %v426
                %v428 = vld [vmem:[%s206 + $0x370] sm:$0xf]
                %429 = vst [vmem:[%s207 + $0x1b8] sm:$0xf] %v428
                %v430 = vld [vmem:[%s206 + $0x378] sm:$0xf]
                %431 = vst [vmem:[%s207 + $0x1bc] sm:$0xf] %v430
                %v432 = vld [vmem:[%s206 + $0x380] sm:$0xf]
                %433 = vst [vmem:[%s207 + $0x1c0] sm:$0xf] %v432
                %v434 = vld [vmem:[%s206 + $0x388] sm:$0xf]
                %435 = vst [vmem:[%s207 + $0x1c4] sm:$0xf] %v434
                %v436 = vld [vmem:[%s206 + $0x390] sm:$0xf]
                %437 = vst [vmem:[%s207 + $0x1c8] sm:$0xf] %v436
                %v438 = vld [vmem:[%s206 + $0x398] sm:$0xf]
                %439 = vst [vmem:[%s207 + $0x1cc] sm:$0xf] %v438
                %v440 = vld [vmem:[%s206 + $0x3a0] sm:$0xf]
                %441 = vst [vmem:[%s207 + $0x1d0] sm:$0xf] %v440
                %v442 = vld [vmem:[%s206 + $0x3a8] sm:$0xf]
                %443 = vst [vmem:[%s207 + $0x1d4] sm:$0xf] %v442
                %v444 = vld [vmem:[%s206 + $0x3b0] sm:$0xf]
                %445 = vst [vmem:[%s207 + $0x1d8] sm:$0xf] %v444
                %v446 = vld [vmem:[%s206 + $0x3b8] sm:$0xf]
                %447 = vst [vmem:[%s207 + $0x1dc] sm:$0xf] %v446
                %v448 = vld [vmem:[%s206 + $0x3c0] sm:$0xf]
                %449 = vst [vmem:[%s207 + $0x1e0] sm:$0xf] %v448
                %v450 = vld [vmem:[%s206 + $0x3c8] sm:$0xf]
                %451 = vst [vmem:[%s207 + $0x1e4] sm:$0xf] %v450
                %v452 = vld [vmem:[%s206 + $0x3d0] sm:$0xf]
                %453 = vst [vmem:[%s207 + $0x1e8] sm:$0xf] %v452
                %v454 = vld [vmem:[%s206 + $0x3d8] sm:$0xf]
                %455 = vst [vmem:[%s207 + $0x1ec] sm:$0xf] %v454
                %v456 = vld [vmem:[%s206 + $0x3e0] sm:$0xf]
                %457 = vst [vmem:[%s207 + $0x1f0] sm:$0xf] %v456
                %v458 = vld [vmem:[%s206 + $0x3e8] sm:$0xf]
                %459 = vst [vmem:[%s207 + $0x1f4] sm:$0xf] %v458
                %v460 = vld [vmem:[%s206 + $0x3f0] sm:$0xf]
                %461 = vst [vmem:[%s207 + $0x1f8] sm:$0xf] %v460
                %v462 = vld [vmem:[%s206 + $0x3f8] sm:$0xf]
                %463 = vst [vmem:[%s207 + $0x1fc] sm:$0xf] %v462
                %v464 = vld [vmem:[%s206 + $0x400] sm:$0xf]
                %465 = vst [vmem:[%s207 + $0x200] sm:$0xf] %v464
                %v466 = vld [vmem:[%s206 + $0x408] sm:$0xf]
                %467 = vst [vmem:[%s207 + $0x204] sm:$0xf] %v466
                %v468 = vld [vmem:[%s206 + $0x410] sm:$0xf]
                %469 = vst [vmem:[%s207 + $0x208] sm:$0xf] %v468
                %v470 = vld [vmem:[%s206 + $0x418] sm:$0xf]
                %471 = vst [vmem:[%s207 + $0x20c] sm:$0xf] %v470
                %v472 = vld [vmem:[%s206 + $0x420] sm:$0xf]
                %473 = vst [vmem:[%s207 + $0x210] sm:$0xf] %v472
                %v474 = vld [vmem:[%s206 + $0x428] sm:$0xf]
                %475 = vst [vmem:[%s207 + $0x214] sm:$0xf] %v474
                %v476 = vld [vmem:[%s206 + $0x430] sm:$0xf]
                %477 = vst [vmem:[%s207 + $0x218] sm:$0xf] %v476
                %v478 = vld [vmem:[%s206 + $0x438] sm:$0xf]
                %479 = vst [vmem:[%s207 + $0x21c] sm:$0xf] %v478
                %v480 = vld [vmem:[%s206 + $0x440] sm:$0xf]
                %481 = vst [vmem:[%s207 + $0x220] sm:$0xf] %v480
                %v482 = vld [vmem:[%s206 + $0x448] sm:$0xf]
                %483 = vst [vmem:[%s207 + $0x224] sm:$0xf] %v482
                %v484 = vld [vmem:[%s206 + $0x450] sm:$0xf]
                %485 = vst [vmem:[%s207 + $0x228] sm:$0xf] %v484
                %v486 = vld [vmem:[%s206 + $0x458] sm:$0xf]
                %487 = vst [vmem:[%s207 + $0x22c] sm:$0xf] %v486
                %v488 = vld [vmem:[%s206 + $0x460] sm:$0xf]
                %489 = vst [vmem:[%s207 + $0x230] sm:$0xf] %v488
                %v490 = vld [vmem:[%s206 + $0x468] sm:$0xf]
                %491 = vst [vmem:[%s207 + $0x234] sm:$0xf] %v490
                %v492 = vld [vmem:[%s206 + $0x470] sm:$0xf]
                %493 = vst [vmem:[%s207 + $0x238] sm:$0xf] %v492
                %v494 = vld [vmem:[%s206 + $0x478] sm:$0xf]
                %495 = vst [vmem:[%s207 + $0x23c] sm:$0xf] %v494
                %v496 = vld [vmem:[%s206 + $0x480] sm:$0xf]
                %497 = vst [vmem:[%s207 + $0x240] sm:$0xf] %v496
                %v498 = vld [vmem:[%s206 + $0x488] sm:$0xf]
                %499 = vst [vmem:[%s207 + $0x244] sm:$0xf] %v498
                %v500 = vld [vmem:[%s206 + $0x490] sm:$0xf]
                %501 = vst [vmem:[%s207 + $0x248] sm:$0xf] %v500
                %v502 = vld [vmem:[%s206 + $0x498] sm:$0xf]
                %503 = vst [vmem:[%s207 + $0x24c] sm:$0xf] %v502
                %v504 = vld [vmem:[%s206 + $0x4a0] sm:$0xf]
                %505 = vst [vmem:[%s207 + $0x250] sm:$0xf] %v504
                %v506 = vld [vmem:[%s206 + $0x4a8] sm:$0xf]
                %507 = vst [vmem:[%s207 + $0x254] sm:$0xf] %v506
                %v508 = vld [vmem:[%s206 + $0x4b0] sm:$0xf]
                %509 = vst [vmem:[%s207 + $0x258] sm:$0xf] %v508
                %v510 = vld [vmem:[%s206 + $0x4b8] sm:$0xf]
                %511 = vst [vmem:[%s207 + $0x25c] sm:$0xf] %v510
                %v512 = vld [vmem:[%s206 + $0x4c0] sm:$0xf]
                %513 = vst [vmem:[%s207 + $0x260] sm:$0xf] %v512
                %v514 = vld [vmem:[%s206 + $0x4c8] sm:$0xf]
                %515 = vst [vmem:[%s207 + $0x264] sm:$0xf] %v514
                %v516 = vld [vmem:[%s206 + $0x4d0] sm:$0xf]
                %517 = vst [vmem:[%s207 + $0x268] sm:$0xf] %v516
                %v518 = vld [vmem:[%s206 + $0x4d8] sm:$0xf]
                %519 = vst [vmem:[%s207 + $0x26c] sm:$0xf] %v518
                %v520 = vld [vmem:[%s206 + $0x4e0] sm:$0xf]
                %521 = vst [vmem:[%s207 + $0x270] sm:$0xf] %v520
                %v522 = vld [vmem:[%s206 + $0x4e8] sm:$0xf]
                %523 = vst [vmem:[%s207 + $0x274] sm:$0xf] %v522
                %v524 = vld [vmem:[%s206 + $0x4f0] sm:$0xf]
                %525 = vst [vmem:[%s207 + $0x278] sm:$0xf] %v524
                %v526 = vld [vmem:[%s206 + $0x4f8] sm:$0xf]
                %527 = vst [vmem:[%s207 + $0x27c] sm:$0xf] %v526
                %v528 = vld [vmem:[%s206 + $0x500] sm:$0xf]
                %529 = vst [vmem:[%s207 + $0x280] sm:$0xf] %v528
                %v530 = vld [vmem:[%s206 + $0x508] sm:$0xf]
                %531 = vst [vmem:[%s207 + $0x284] sm:$0xf] %v530
                %v532 = vld [vmem:[%s206 + $0x510] sm:$0xf]
                %533 = vst [vmem:[%s207 + $0x288] sm:$0xf] %v532
                %v534 = vld [vmem:[%s206 + $0x518] sm:$0xf]
                %535 = vst [vmem:[%s207 + $0x28c] sm:$0xf] %v534
                %v536 = vld [vmem:[%s206 + $0x520] sm:$0xf]
                %537 = vst [vmem:[%s207 + $0x290] sm:$0xf] %v536
                %v538 = vld [vmem:[%s206 + $0x528] sm:$0xf]
                %539 = vst [vmem:[%s207 + $0x294] sm:$0xf] %v538
                %v540 = vld [vmem:[%s206 + $0x530] sm:$0xf]
                %541 = vst [vmem:[%s207 + $0x298] sm:$0xf] %v540
                %v542 = vld [vmem:[%s206 + $0x538] sm:$0xf]
                %543 = vst [vmem:[%s207 + $0x29c] sm:$0xf] %v542
                %v544 = vld [vmem:[%s206 + $0x540] sm:$0xf]
                %545 = vst [vmem:[%s207 + $0x2a0] sm:$0xf] %v544
                %v546 = vld [vmem:[%s206 + $0x548] sm:$0xf]
                %547 = vst [vmem:[%s207 + $0x2a4] sm:$0xf] %v546
                %v548 = vld [vmem:[%s206 + $0x550] sm:$0xf]
                %549 = vst [vmem:[%s207 + $0x2a8] sm:$0xf] %v548
                %v550 = vld [vmem:[%s206 + $0x558] sm:$0xf]
                %551 = vst [vmem:[%s207 + $0x2ac] sm:$0xf] %v550
                %v552 = vld [vmem:[%s206 + $0x560] sm:$0xf]
                %553 = vst [vmem:[%s207 + $0x2b0] sm:$0xf] %v552
                %v554 = vld [vmem:[%s206 + $0x568] sm:$0xf]
                %555 = vst [vmem:[%s207 + $0x2b4] sm:$0xf] %v554
                %v556 = vld [vmem:[%s206 + $0x570] sm:$0xf]
                %557 = vst [vmem:[%s207 + $0x2b8] sm:$0xf] %v556
                %v558 = vld [vmem:[%s206 + $0x578] sm:$0xf]
                %559 = vst [vmem:[%s207 + $0x2bc] sm:$0xf] %v558
                %v560 = vld [vmem:[%s206 + $0x580] sm:$0xf]
                %561 = vst [vmem:[%s207 + $0x2c0] sm:$0xf] %v560
                %v562 = vld [vmem:[%s206 + $0x588] sm:$0xf]
                %563 = vst [vmem:[%s207 + $0x2c4] sm:$0xf] %v562
                %v564 = vld [vmem:[%s206 + $0x590] sm:$0xf]
                %565 = vst [vmem:[%s207 + $0x2c8] sm:$0xf] %v564
                %v566 = vld [vmem:[%s206 + $0x598] sm:$0xf]
                %567 = vst [vmem:[%s207 + $0x2cc] sm:$0xf] %v566
                %v568 = vld [vmem:[%s206 + $0x5a0] sm:$0xf]
                %569 = vst [vmem:[%s207 + $0x2d0] sm:$0xf] %v568
                %v570 = vld [vmem:[%s206 + $0x5a8] sm:$0xf]
                %571 = vst [vmem:[%s207 + $0x2d4] sm:$0xf] %v570
                %v572 = vld [vmem:[%s206 + $0x5b0] sm:$0xf]
                %573 = vst [vmem:[%s207 + $0x2d8] sm:$0xf] %v572
                %v574 = vld [vmem:[%s206 + $0x5b8] sm:$0xf]
                %575 = vst [vmem:[%s207 + $0x2dc] sm:$0xf] %v574
                %v576 = vld [vmem:[%s206 + $0x5c0] sm:$0xf]
                %577 = vst [vmem:[%s207 + $0x2e0] sm:$0xf] %v576
                %v578 = vld [vmem:[%s206 + $0x5c8] sm:$0xf]
                %579 = vst [vmem:[%s207 + $0x2e4] sm:$0xf] %v578
                %v580 = vld [vmem:[%s206 + $0x5d0] sm:$0xf]
                %581 = vst [vmem:[%s207 + $0x2e8] sm:$0xf] %v580
                %v582 = vld [vmem:[%s206 + $0x5d8] sm:$0xf]
                %583 = vst [vmem:[%s207 + $0x2ec] sm:$0xf] %v582
                %v584 = vld [vmem:[%s206 + $0x5e0] sm:$0xf]
                %585 = vst [vmem:[%s207 + $0x2f0] sm:$0xf] %v584
                %v586 = vld [vmem:[%s206 + $0x5e8] sm:$0xf]
                %587 = vst [vmem:[%s207 + $0x2f4] sm:$0xf] %v586
                %v588 = vld [vmem:[%s206 + $0x5f0] sm:$0xf]
                %589 = vst [vmem:[%s207 + $0x2f8] sm:$0xf] %v588
                %v590 = vld [vmem:[%s206 + $0x5f8] sm:$0xf]
                %591 = vst [vmem:[%s207 + $0x2fc] sm:$0xf] %v590
                %v592 = vld [vmem:[%s206 + $0x600] sm:$0xf]
                %593 = vst [vmem:[%s207 + $0x300] sm:$0xf] %v592
                %v594 = vld [vmem:[%s206 + $0x608] sm:$0xf]
                %595 = vst [vmem:[%s207 + $0x304] sm:$0xf] %v594
                %v596 = vld [vmem:[%s206 + $0x610] sm:$0xf]
                %597 = vst [vmem:[%s207 + $0x308] sm:$0xf] %v596
                %v598 = vld [vmem:[%s206 + $0x618] sm:$0xf]
                %599 = vst [vmem:[%s207 + $0x30c] sm:$0xf] %v598
                %v600 = vld [vmem:[%s206 + $0x620] sm:$0xf]
                %601 = vst [vmem:[%s207 + $0x310] sm:$0xf] %v600
                %v602 = vld [vmem:[%s206 + $0x628] sm:$0xf]
                %603 = vst [vmem:[%s207 + $0x314] sm:$0xf] %v602
                %v604 = vld [vmem:[%s206 + $0x630] sm:$0xf]
                %605 = vst [vmem:[%s207 + $0x318] sm:$0xf] %v604
                %v606 = vld [vmem:[%s206 + $0x638] sm:$0xf]
                %607 = vst [vmem:[%s207 + $0x31c] sm:$0xf] %v606
                %v608 = vld [vmem:[%s206 + $0x640] sm:$0xf]
                %609 = vst [vmem:[%s207 + $0x320] sm:$0xf] %v608
                %v610 = vld [vmem:[%s206 + $0x648] sm:$0xf]
                %611 = vst [vmem:[%s207 + $0x324] sm:$0xf] %v610
                %v612 = vld [vmem:[%s206 + $0x650] sm:$0xf]
                %613 = vst [vmem:[%s207 + $0x328] sm:$0xf] %v612
                %v614 = vld [vmem:[%s206 + $0x658] sm:$0xf]
                %615 = vst [vmem:[%s207 + $0x32c] sm:$0xf] %v614
                %v616 = vld [vmem:[%s206 + $0x660] sm:$0xf]
                %617 = vst [vmem:[%s207 + $0x330] sm:$0xf] %v616
                %v618 = vld [vmem:[%s206 + $0x668] sm:$0xf]
                %619 = vst [vmem:[%s207 + $0x334] sm:$0xf] %v618
                %v620 = vld [vmem:[%s206 + $0x670] sm:$0xf]
                %621 = vst [vmem:[%s207 + $0x338] sm:$0xf] %v620
                %v622 = vld [vmem:[%s206 + $0x678] sm:$0xf]
                %623 = vst [vmem:[%s207 + $0x33c] sm:$0xf] %v622
                %v624 = vld [vmem:[%s206 + $0x680] sm:$0xf]
                %625 = vst [vmem:[%s207 + $0x340] sm:$0xf] %v624
                %v626 = vld [vmem:[%s206 + $0x688] sm:$0xf]
                %627 = vst [vmem:[%s207 + $0x344] sm:$0xf] %v626
                %v628 = vld [vmem:[%s206 + $0x690] sm:$0xf]
                %629 = vst [vmem:[%s207 + $0x348] sm:$0xf] %v628
                %v630 = vld [vmem:[%s206 + $0x698] sm:$0xf]
                %631 = vst [vmem:[%s207 + $0x34c] sm:$0xf] %v630
                %v632 = vld [vmem:[%s206 + $0x6a0] sm:$0xf]
                %633 = vst [vmem:[%s207 + $0x350] sm:$0xf] %v632
                %v634 = vld [vmem:[%s206 + $0x6a8] sm:$0xf]
                %635 = vst [vmem:[%s207 + $0x354] sm:$0xf] %v634
                %v636 = vld [vmem:[%s206 + $0x6b0] sm:$0xf]
                %637 = vst [vmem:[%s207 + $0x358] sm:$0xf] %v636
                %v638 = vld [vmem:[%s206 + $0x6b8] sm:$0xf]
                %639 = vst [vmem:[%s207 + $0x35c] sm:$0xf] %v638
                %v640 = vld [vmem:[%s206 + $0x6c0] sm:$0xf]
                %641 = vst [vmem:[%s207 + $0x360] sm:$0xf] %v640
                %v642 = vld [vmem:[%s206 + $0x6c8] sm:$0xf]
                %643 = vst [vmem:[%s207 + $0x364] sm:$0xf] %v642
                %v644 = vld [vmem:[%s206 + $0x6d0] sm:$0xf]
                %645 = vst [vmem:[%s207 + $0x368] sm:$0xf] %v644
                %v646 = vld [vmem:[%s206 + $0x6d8] sm:$0xf]
                %647 = vst [vmem:[%s207 + $0x36c] sm:$0xf] %v646
                %v648 = vld [vmem:[%s206 + $0x6e0] sm:$0xf]
                %649 = vst [vmem:[%s207 + $0x370] sm:$0xf] %v648
                %v650 = vld [vmem:[%s206 + $0x6e8] sm:$0xf]
                %651 = vst [vmem:[%s207 + $0x374] sm:$0xf] %v650
                %v652 = vld [vmem:[%s206 + $0x6f0] sm:$0xf]
                %653 = vst [vmem:[%s207 + $0x378] sm:$0xf] %v652
                %v654 = vld [vmem:[%s206 + $0x6f8] sm:$0xf]
                %655 = vst [vmem:[%s207 + $0x37c] sm:$0xf] %v654
                %v656 = vld [vmem:[%s206 + $0x700] sm:$0xf]
                %657 = vst [vmem:[%s207 + $0x380] sm:$0xf] %v656
                %v658 = vld [vmem:[%s206 + $0x708] sm:$0xf]
                %659 = vst [vmem:[%s207 + $0x384] sm:$0xf] %v658
                %v660 = vld [vmem:[%s206 + $0x710] sm:$0xf]
                %661 = vst [vmem:[%s207 + $0x388] sm:$0xf] %v660
                %v662 = vld [vmem:[%s206 + $0x718] sm:$0xf]
                %663 = vst [vmem:[%s207 + $0x38c] sm:$0xf] %v662
                %v664 = vld [vmem:[%s206 + $0x720] sm:$0xf]
                %665 = vst [vmem:[%s207 + $0x390] sm:$0xf] %v664
                %v666 = vld [vmem:[%s206 + $0x728] sm:$0xf]
                %667 = vst [vmem:[%s207 + $0x394] sm:$0xf] %v666
                %v668 = vld [vmem:[%s206 + $0x730] sm:$0xf]
                %669 = vst [vmem:[%s207 + $0x398] sm:$0xf] %v668
                %v670 = vld [vmem:[%s206 + $0x738] sm:$0xf]
                %671 = vst [vmem:[%s207 + $0x39c] sm:$0xf] %v670
                %v672 = vld [vmem:[%s206 + $0x740] sm:$0xf]
                %673 = vst [vmem:[%s207 + $0x3a0] sm:$0xf] %v672
                %v674 = vld [vmem:[%s206 + $0x748] sm:$0xf]
                %675 = vst [vmem:[%s207 + $0x3a4] sm:$0xf] %v674
                %v676 = vld [vmem:[%s206 + $0x750] sm:$0xf]
                %677 = vst [vmem:[%s207 + $0x3a8] sm:$0xf] %v676
                %v678 = vld [vmem:[%s206 + $0x758] sm:$0xf]
                %679 = vst [vmem:[%s207 + $0x3ac] sm:$0xf] %v678
                %v680 = vld [vmem:[%s206 + $0x760] sm:$0xf]
                %681 = vst [vmem:[%s207 + $0x3b0] sm:$0xf] %v680
                %v682 = vld [vmem:[%s206 + $0x768] sm:$0xf]
                %683 = vst [vmem:[%s207 + $0x3b4] sm:$0xf] %v682
                %v684 = vld [vmem:[%s206 + $0x770] sm:$0xf]
                %685 = vst [vmem:[%s207 + $0x3b8] sm:$0xf] %v684
                %v686 = vld [vmem:[%s206 + $0x778] sm:$0xf]
                %687 = vst [vmem:[%s207 + $0x3bc] sm:$0xf] %v686
                %v688 = vld [vmem:[%s206 + $0x780] sm:$0xf]
                %689 = vst [vmem:[%s207 + $0x3c0] sm:$0xf] %v688
                %v690 = vld [vmem:[%s206 + $0x788] sm:$0xf]
                %691 = vst [vmem:[%s207 + $0x3c4] sm:$0xf] %v690
                %v692 = vld [vmem:[%s206 + $0x790] sm:$0xf]
                %693 = vst [vmem:[%s207 + $0x3c8] sm:$0xf] %v692
                %v694 = vld [vmem:[%s206 + $0x798] sm:$0xf]
                %695 = vst [vmem:[%s207 + $0x3cc] sm:$0xf] %v694
                %v696 = vld [vmem:[%s206 + $0x7a0] sm:$0xf]
                %697 = vst [vmem:[%s207 + $0x3d0] sm:$0xf] %v696
                %v698 = vld [vmem:[%s206 + $0x7a8] sm:$0xf]
                %699 = vst [vmem:[%s207 + $0x3d4] sm:$0xf] %v698
                %v700 = vld [vmem:[%s206 + $0x7b0] sm:$0xf]
                %701 = vst [vmem:[%s207 + $0x3d8] sm:$0xf] %v700
                %v702 = vld [vmem:[%s206 + $0x7b8] sm:$0xf]
                %703 = vst [vmem:[%s207 + $0x3dc] sm:$0xf] %v702
                %v704 = vld [vmem:[%s206 + $0x7c0] sm:$0xf]
                %705 = vst [vmem:[%s207 + $0x3e0] sm:$0xf] %v704
                %v706 = vld [vmem:[%s206 + $0x7c8] sm:$0xf]
                %707 = vst [vmem:[%s207 + $0x3e4] sm:$0xf] %v706
                %v708 = vld [vmem:[%s206 + $0x7d0] sm:$0xf]
                %709 = vst [vmem:[%s207 + $0x3e8] sm:$0xf] %v708
                %v710 = vld [vmem:[%s206 + $0x7d8] sm:$0xf]
                %711 = vst [vmem:[%s207 + $0x3ec] sm:$0xf] %v710
                %v712 = vld [vmem:[%s206 + $0x7e0] sm:$0xf]
                %713 = vst [vmem:[%s207 + $0x3f0] sm:$0xf] %v712
                %v714 = vld [vmem:[%s206 + $0x7e8] sm:$0xf]
                %715 = vst [vmem:[%s207 + $0x3f4] sm:$0xf] %v714
                %v716 = vld [vmem:[%s206 + $0x7f0] sm:$0xf]
                %717 = vst [vmem:[%s207 + $0x3f8] sm:$0xf] %v716
                %v718 = vld [vmem:[%s206 + $0x7f8] sm:$0xf]
                %719 = vst [vmem:[%s207 + $0x3fc] sm:$0xf] %v718
              $region41: #{conditional_discriminator.5} parent=35 // loop_footer
                %s205 = sadd.s32 1, %s201
              $region42: #{conditional_discriminator.5} parent=35 // loop_footer_branch
                %200 = sbr.rel target = $region38
              $region43: #{conditional_discriminator.5} parent=35 // loop_exit
                _
            $region36: #{conditional_discriminator.5} parent=27 // pred_fallthru
              _
          $region28: #{conditional_discriminator.5} parent=23 // pred_fallthru
            _
          %1251 = vnop
        $region24: #{conditional_discriminator.5} parent=19 // pred_fallthru
          _
        // Predicated region
        $region62: #{conditional_discriminator.5} parent=19 // pred_check
          %p1252 = pneg %p78
        $region63: #{conditional_discriminator.5} parent=19 // pred_check_branch
          %1254 = sbr.rel (%p1252) target = $region65
        $region64: #{conditional_discriminator.5} parent=19 // pred_region
          %p1255 = scmp.lt.s32.totalorder %s11, 1
          %s1256 = scalar_select %p1255, %s11, 1
          %s1257 = scalar_lea.vmem %s2, %s1256
        $region65: #{conditional_discriminator.5} parent=19 // pred_fallthru
          _
        // Predicated region
        $region66: #{conditional_discriminator.5} parent=19 // pred_check
          %p1258 = pneg %p104
        $region67: #{conditional_discriminator.5} parent=19 // pred_check_branch
          %1260 = sbr.rel (%p1258) target = $region69
        $region68: #{conditional_discriminator.5} parent=19 // pred_region
          %p1261 = scmp.lt.s32.totalorder %s11, 1
          %s1262 = scalar_select %p1261, %s11, 1
          %s1263 = scalar_lea.vmem %s3, %s1262
        $region69: #{conditional_discriminator.5} parent=19 // pred_fallthru
          _
        // Predicated region
        $region70: #{conditional_discriminator.5} parent=19 // pred_check
          %p1264 = pneg %p130
        $region71: #{conditional_discriminator.5} parent=19 // pred_check_branch
          %1266 = sbr.rel (%p1264) target = $region73
        $region72: #{conditional_discriminator.5} parent=19 // pred_region
          %p1267 = scmp.lt.s32.totalorder %s11, 1
          %s1268 = scalar_select %p1267, %s11, 1
          %s1269 = scalar_lea.vmem %s4, %s1268
        $region73: #{conditional_discriminator.5} parent=19 // pred_fallthru
          _
      $region20: #{conditional_discriminator.5} parent=5 // pred_fallthru
        _
      %p1270 = scmp.le.s32.totalorder 1, %s11
      %p1271 = scmp.lt.s32.totalorder %s11, 3
      %p1272 = pnand %p1270, %p1271
      %p1273 = pneg %p1272
      // Predicated region
      $region74: #{conditional_discriminator.5} parent=5 // pred_check
        _
      $region75: #{conditional_discriminator.5} parent=5 // pred_check_branch
        %1275 = sbr.rel (%p1272) target = $region77
      $region76: #{conditional_discriminator.5} parent=5 // pred_region
        %s1276 = ssub.s32 %s11, 1
        %s1277 = sand.u32 %s45, 1
        %s1278 = sand.u32 %s45, 1
        %s1279 = smul.addr %s1278, 1024
        %s1280 = scalar_lea.vmem [#allocation2], %s1279
        // Predicated region
        $region78: #{conditional_discriminator.5} parent=76 // pred_check
          %p1281 = pneg %p58
        $region79: #{conditional_discriminator.5} parent=76 // pred_check_branch
          %1283 = sbr.rel (%p1281) target = $region81
        $region80: #{conditional_discriminator.5} parent=76 // pred_region
          _
        $region81: #{conditional_discriminator.5} parent=76 // pred_fallthru
          _
        %p1284 = pneg %p32
        %p1285 = pneg %p29
        %s1286 = sand.u32 %s45, 1
        %s1287 = sand.u32 %s45, 1
        %s1288 = smul.addr %s1287, 1024
        %s1289 = scalar_lea.vmem [#allocation2], %s1288
        %p1290 = pneg %p58
        %p1291 = pneg %p55
        %p1292 = scmp.lt.s32.totalorder %s16, 1
        %s1293 = scalar_select %p1292, %s16, 1
        %s1294 = scalar_lea.vmem %s2, %s1293
        %p1295 = pneg %p84
        %p1296 = pneg %p81
        %p1297 = scmp.lt.s32.totalorder %s16, 1
        %s1298 = scalar_select %p1297, %s16, 1
        %s1299 = scalar_lea.vmem %s3, %s1298
        %p1300 = pneg %p110
        %p1301 = pneg %p107
        %p1302 = scmp.lt.s32.totalorder %s16, 1
        %s1303 = scalar_select %p1302, %s16, 1
        %s1304 = scalar_lea.vmem %s4, %s1303
        %p1305 = pneg %p136
        %p1306 = pneg %p133
        %p1307 = pneg %p162
        %p1308 = pneg %p159
        %s1309 = sand.u32 %s149, 1
        %s1310 = sand.u32 %s149, 1
        %s1311 = smul.addr %s1310, 16
        %s1312 = scalar_lea.vmem [#allocation3], %s1311
        %p1313 = scmp.lt.s32.totalorder %s16, 1
        %s1314 = scalar_select %p1313, %s16, 1
        %s1315 = scalar_lea.vmem %s2, %s1314
        %p1316 = scmp.lt.s32.totalorder %s16, 1
        %s1317 = scalar_select %p1316, %s16, 1
        %s1318 = scalar_lea.vmem %s3, %s1317
        %p1319 = scmp.lt.s32.totalorder %s16, 1
        %s1320 = scalar_select %p1319, %s16, 1
        %s1321 = scalar_lea.vmem %s4, %s1320
        %v1323 = vld [vmem:[%s0] sm:$0xff]
        %v1324 = vld [vmem:[%s0 + $0x8] sm:$0xff]
        %v1325 = vld [vmem:[%s0 + $0x10] sm:$0xff]
        %v1326 = vld [vmem:[%s0 + $0x18] sm:$0xff]
        %v1327 = vld [vmem:[%s0 + $0x20] sm:$0xff]
        %v1328 = vld [vmem:[%s0 + $0x28] sm:$0xff]
        %v1329 = vld [vmem:[%s0 + $0x30] sm:$0xff]
        %v1330 = vld [vmem:[%s0 + $0x38] sm:$0xff]
        %v1331 = vld [vmem:[%s0 + $0x40] sm:$0xff]
        %v1332 = vld [vmem:[%s0 + $0x48] sm:$0xff]
        %v1333 = vld [vmem:[%s0 + $0x50] sm:$0xff]
        %v1334 = vld [vmem:[%s0 + $0x58] sm:$0xff]
        %v1335 = vld [vmem:[%s0 + $0x60] sm:$0xff]
        %v1336 = vld [vmem:[%s0 + $0x68] sm:$0xff]
        %v1337 = vld [vmem:[%s0 + $0x70] sm:$0xff]
        %v1338 = vld [vmem:[%s0 + $0x78] sm:$0xff]
        %v1339 = vld [vmem:[%s0 + $0x80] sm:$0xff]
        %v1340 = vld [vmem:[%s0 + $0x88] sm:$0xff]
        %v1341 = vld [vmem:[%s0 + $0x90] sm:$0xff]
        %v1342 = vld [vmem:[%s0 + $0x98] sm:$0xff]
        %v1343 = vld [vmem:[%s0 + $0xa0] sm:$0xff]
        %v1344 = vld [vmem:[%s0 + $0xa8] sm:$0xff]
        %v1345 = vld [vmem:[%s0 + $0xb0] sm:$0xff]
        %v1346 = vld [vmem:[%s0 + $0xb8] sm:$0xff]
        %v1347 = vld [vmem:[%s0 + $0xc0] sm:$0xff]
        %v1348 = vld [vmem:[%s0 + $0xc8] sm:$0xff]
        %v1349 = vld [vmem:[%s0 + $0xd0] sm:$0xff]
        %v1350 = vld [vmem:[%s0 + $0xd8] sm:$0xff]
        %v1351 = vld [vmem:[%s0 + $0xe0] sm:$0xff]
        %v1352 = vld [vmem:[%s0 + $0xe8] sm:$0xff]
        %v1353 = vld [vmem:[%s0 + $0xf0] sm:$0xff]
        %v1354 = vld [vmem:[%s0 + $0xf8] sm:$0xff]
        %v1355 = vld [vmem:[%s1280] sm:$0xf]
        %v1356 = vld [vmem:[%s1280 + $0x4] sm:$0xf]
        %v1357 = vld [vmem:[%s1280 + $0x8] sm:$0xf]
        %v1358 = vld [vmem:[%s1280 + $0xc] sm:$0xf]
        %v1359 = vld [vmem:[%s1280 + $0x10] sm:$0xf]
        %v1360 = vld [vmem:[%s1280 + $0x14] sm:$0xf]
        %v1361 = vld [vmem:[%s1280 + $0x18] sm:$0xf]
        %v1362 = vld [vmem:[%s1280 + $0x1c] sm:$0xf]
        %v1363 = vld [vmem:[%s1280 + $0x20] sm:$0xf]
        %v1364 = vld [vmem:[%s1280 + $0x24] sm:$0xf]
        %v1365 = vld [vmem:[%s1280 + $0x28] sm:$0xf]
        %v1366 = vld [vmem:[%s1280 + $0x2c] sm:$0xf]
        %v1367 = vld [vmem:[%s1280 + $0x30] sm:$0xf]
        %v1368 = vld [vmem:[%s1280 + $0x34] sm:$0xf]
        %v1369 = vld [vmem:[%s1280 + $0x38] sm:$0xf]
        %v1370 = vld [vmem:[%s1280 + $0x3c] sm:$0xf]
        %v1371 = vld [vmem:[%s1280 + $0x40] sm:$0xf]
        %v1372 = vld [vmem:[%s1280 + $0x44] sm:$0xf]
        %v1373 = vld [vmem:[%s1280 + $0x48] sm:$0xf]
        %v1374 = vld [vmem:[%s1280 + $0x4c] sm:$0xf]
        %v1375 = vld [vmem:[%s1280 + $0x50] sm:$0xf]
        %v1376 = vld [vmem:[%s1280 + $0x54] sm:$0xf]
        %v1377 = vld [vmem:[%s1280 + $0x58] sm:$0xf]
        %v1378 = vld [vmem:[%s1280 + $0x5c] sm:$0xf]
        %v1379 = vld [vmem:[%s1280 + $0x60] sm:$0xf]
        %v1380 = vld [vmem:[%s1280 + $0x64] sm:$0xf]
        %v1381 = vld [vmem:[%s1280 + $0x68] sm:$0xf]
        %v1382 = vld [vmem:[%s1280 + $0x6c] sm:$0xf]
        %v1383 = vld [vmem:[%s1280 + $0x70] sm:$0xf]
        %v1384 = vld [vmem:[%s1280 + $0x74] sm:$0xf]
        %v1385 = vld [vmem:[%s1280 + $0x78] sm:$0xf]
        %v1386 = vld [vmem:[%s1280 + $0x7c] sm:$0xf]
        %v1387 = vld [vmem:[%s1280 + $0x80] sm:$0xf]
        %v1388 = vld [vmem:[%s1280 + $0x84] sm:$0xf]
        %v1389 = vld [vmem:[%s1280 + $0x88] sm:$0xf]
        %v1390 = vld [vmem:[%s1280 + $0x8c] sm:$0xf]
        %v1391 = vld [vmem:[%s1280 + $0x90] sm:$0xf]
        %v1392 = vld [vmem:[%s1280 + $0x94] sm:$0xf]
        %v1393 = vld [vmem:[%s1280 + $0x98] sm:$0xf]
        %v1394 = vld [vmem:[%s1280 + $0x9c] sm:$0xf]
        %v1395 = vld [vmem:[%s1280 + $0xa0] sm:$0xf]
        %v1396 = vld [vmem:[%s1280 + $0xa4] sm:$0xf]
        %v1397 = vld [vmem:[%s1280 + $0xa8] sm:$0xf]
        %v1398 = vld [vmem:[%s1280 + $0xac] sm:$0xf]
        %v1399 = vld [vmem:[%s1280 + $0xb0] sm:$0xf]
        %v1400 = vld [vmem:[%s1280 + $0xb4] sm:$0xf]
        %v1401 = vld [vmem:[%s1280 + $0xb8] sm:$0xf]
        %v1402 = vld [vmem:[%s1280 + $0xbc] sm:$0xf]
        %v1403 = vld [vmem:[%s1280 + $0xc0] sm:$0xf]
        %v1404 = vld [vmem:[%s1280 + $0xc4] sm:$0xf]
        %v1405 = vld [vmem:[%s1280 + $0xc8] sm:$0xf]
        %v1406 = vld [vmem:[%s1280 + $0xcc] sm:$0xf]
        %v1407 = vld [vmem:[%s1280 + $0xd0] sm:$0xf]
        %v1408 = vld [vmem:[%s1280 + $0xd4] sm:$0xf]
        %v1409 = vld [vmem:[%s1280 + $0xd8] sm:$0xf]
        %v1410 = vld [vmem:[%s1280 + $0xdc] sm:$0xf]
        %v1411 = vld [vmem:[%s1280 + $0xe0] sm:$0xf]
        %v1412 = vld [vmem:[%s1280 + $0xe4] sm:$0xf]
        %v1413 = vld [vmem:[%s1280 + $0xe8] sm:$0xf]
        %v1414 = vld [vmem:[%s1280 + $0xec] sm:$0xf]
        %v1415 = vld [vmem:[%s1280 + $0xf0] sm:$0xf]
        %v1416 = vld [vmem:[%s1280 + $0xf4] sm:$0xf]
        %v1417 = vld [vmem:[%s1280 + $0xf8] sm:$0xf]
        %v1418 = vld [vmem:[%s1280 + $0xfc] sm:$0xf]
        %v1419 = vld [vmem:[%s1280 + $0x100] sm:$0xf]
        %v1420 = vld [vmem:[%s1280 + $0x104] sm:$0xf]
        %v1421 = vld [vmem:[%s1280 + $0x108] sm:$0xf]
        %v1422 = vld [vmem:[%s1280 + $0x10c] sm:$0xf]
        %v1423 = vld [vmem:[%s1280 + $0x110] sm:$0xf]
        %v1424 = vld [vmem:[%s1280 + $0x114] sm:$0xf]
        %v1425 = vld [vmem:[%s1280 + $0x118] sm:$0xf]
        %v1426 = vld [vmem:[%s1280 + $0x11c] sm:$0xf]
        %v1427 = vld [vmem:[%s1280 + $0x120] sm:$0xf]
        %v1428 = vld [vmem:[%s1280 + $0x124] sm:$0xf]
        %v1429 = vld [vmem:[%s1280 + $0x128] sm:$0xf]
        %v1430 = vld [vmem:[%s1280 + $0x12c] sm:$0xf]
        %v1431 = vld [vmem:[%s1280 + $0x130] sm:$0xf]
        %v1432 = vld [vmem:[%s1280 + $0x134] sm:$0xf]
        %v1433 = vld [vmem:[%s1280 + $0x138] sm:$0xf]
        %v1434 = vld [vmem:[%s1280 + $0x13c] sm:$0xf]
        %v1435 = vld [vmem:[%s1280 + $0x140] sm:$0xf]
        %v1436 = vld [vmem:[%s1280 + $0x144] sm:$0xf]
        %v1437 = vld [vmem:[%s1280 + $0x148] sm:$0xf]
        %v1438 = vld [vmem:[%s1280 + $0x14c] sm:$0xf]
        %v1439 = vld [vmem:[%s1280 + $0x150] sm:$0xf]
        %v1440 = vld [vmem:[%s1280 + $0x154] sm:$0xf]
        %v1441 = vld [vmem:[%s1280 + $0x158] sm:$0xf]
        %v1442 = vld [vmem:[%s1280 + $0x15c] sm:$0xf]
        %v1443 = vld [vmem:[%s1280 + $0x160] sm:$0xf]
        %v1444 = vld [vmem:[%s1280 + $0x164] sm:$0xf]
        %v1445 = vld [vmem:[%s1280 + $0x168] sm:$0xf]
        %v1446 = vld [vmem:[%s1280 + $0x16c] sm:$0xf]
        %v1447 = vld [vmem:[%s1280 + $0x170] sm:$0xf]
        %v1448 = vld [vmem:[%s1280 + $0x174] sm:$0xf]
        %v1449 = vld [vmem:[%s1280 + $0x178] sm:$0xf]
        %v1450 = vld [vmem:[%s1280 + $0x17c] sm:$0xf]
        %v1451 = vld [vmem:[%s1280 + $0x180] sm:$0xf]
        %v1452 = vld [vmem:[%s1280 + $0x184] sm:$0xf]
        %v1453 = vld [vmem:[%s1280 + $0x188] sm:$0xf]
        %v1454 = vld [vmem:[%s1280 + $0x18c] sm:$0xf]
        %v1455 = vld [vmem:[%s1280 + $0x190] sm:$0xf]
        %v1456 = vld [vmem:[%s1280 + $0x194] sm:$0xf]
        %v1457 = vld [vmem:[%s1280 + $0x198] sm:$0xf]
        %v1458 = vld [vmem:[%s1280 + $0x19c] sm:$0xf]
        %v1459 = vld [vmem:[%s1280 + $0x1a0] sm:$0xf]
        %v1460 = vld [vmem:[%s1280 + $0x1a4] sm:$0xf]
        %v1461 = vld [vmem:[%s1280 + $0x1a8] sm:$0xf]
        %v1462 = vld [vmem:[%s1280 + $0x1ac] sm:$0xf]
        %v1463 = vld [vmem:[%s1280 + $0x1b0] sm:$0xf]
        %v1464 = vld [vmem:[%s1280 + $0x1b4] sm:$0xf]
        %v1465 = vld [vmem:[%s1280 + $0x1b8] sm:$0xf]
        %v1466 = vld [vmem:[%s1280 + $0x1bc] sm:$0xf]
        %v1467 = vld [vmem:[%s1280 + $0x1c0] sm:$0xf]
        %v1468 = vld [vmem:[%s1280 + $0x1c4] sm:$0xf]
        %v1469 = vld [vmem:[%s1280 + $0x1c8] sm:$0xf]
        %v1470 = vld [vmem:[%s1280 + $0x1cc] sm:$0xf]
        %v1471 = vld [vmem:[%s1280 + $0x1d0] sm:$0xf]
        %v1472 = vld [vmem:[%s1280 + $0x1d4] sm:$0xf]
        %v1473 = vld [vmem:[%s1280 + $0x1d8] sm:$0xf]
        %v1474 = vld [vmem:[%s1280 + $0x1dc] sm:$0xf]
        %v1475 = vld [vmem:[%s1280 + $0x1e0] sm:$0xf]
        %v1476 = vld [vmem:[%s1280 + $0x1e4] sm:$0xf]
        %v1477 = vld [vmem:[%s1280 + $0x1e8] sm:$0xf]
        %v1478 = vld [vmem:[%s1280 + $0x1ec] sm:$0xf]
        %v1479 = vld [vmem:[%s1280 + $0x1f0] sm:$0xf]
        %v1480 = vld [vmem:[%s1280 + $0x1f4] sm:$0xf]
        %v1481 = vld [vmem:[%s1280 + $0x1f8] sm:$0xf]
        %v1482 = vld [vmem:[%s1280 + $0x1fc] sm:$0xf]
        %v1483 = vld [vmem:[%s1280 + $0x200] sm:$0xf]
        %v1484 = vld [vmem:[%s1280 + $0x204] sm:$0xf]
        %v1485 = vld [vmem:[%s1280 + $0x208] sm:$0xf]
        %v1486 = vld [vmem:[%s1280 + $0x20c] sm:$0xf]
        %v1487 = vld [vmem:[%s1280 + $0x210] sm:$0xf]
        %v1488 = vld [vmem:[%s1280 + $0x214] sm:$0xf]
        %v1489 = vld [vmem:[%s1280 + $0x218] sm:$0xf]
        %v1490 = vld [vmem:[%s1280 + $0x21c] sm:$0xf]
        %v1491 = vld [vmem:[%s1280 + $0x220] sm:$0xf]
        %v1492 = vld [vmem:[%s1280 + $0x224] sm:$0xf]
        %v1493 = vld [vmem:[%s1280 + $0x228] sm:$0xf]
        %v1494 = vld [vmem:[%s1280 + $0x22c] sm:$0xf]
        %v1495 = vld [vmem:[%s1280 + $0x230] sm:$0xf]
        %v1496 = vld [vmem:[%s1280 + $0x234] sm:$0xf]
        %v1497 = vld [vmem:[%s1280 + $0x238] sm:$0xf]
        %v1498 = vld [vmem:[%s1280 + $0x23c] sm:$0xf]
        %v1499 = vld [vmem:[%s1280 + $0x240] sm:$0xf]
        %v1500 = vld [vmem:[%s1280 + $0x244] sm:$0xf]
        %v1501 = vld [vmem:[%s1280 + $0x248] sm:$0xf]
        %v1502 = vld [vmem:[%s1280 + $0x24c] sm:$0xf]
        %v1503 = vld [vmem:[%s1280 + $0x250] sm:$0xf]
        %v1504 = vld [vmem:[%s1280 + $0x254] sm:$0xf]
        %v1505 = vld [vmem:[%s1280 + $0x258] sm:$0xf]
        %v1506 = vld [vmem:[%s1280 + $0x25c] sm:$0xf]
        %v1507 = vld [vmem:[%s1280 + $0x260] sm:$0xf]
        %v1508 = vld [vmem:[%s1280 + $0x264] sm:$0xf]
        %v1509 = vld [vmem:[%s1280 + $0x268] sm:$0xf]
        %v1510 = vld [vmem:[%s1280 + $0x26c] sm:$0xf]
        %v1511 = vld [vmem:[%s1280 + $0x270] sm:$0xf]
        %v1512 = vld [vmem:[%s1280 + $0x274] sm:$0xf]
        %v1513 = vld [vmem:[%s1280 + $0x278] sm:$0xf]
        %v1514 = vld [vmem:[%s1280 + $0x27c] sm:$0xf]
        %v1515 = vld [vmem:[%s1280 + $0x280] sm:$0xf]
        %v1516 = vld [vmem:[%s1280 + $0x284] sm:$0xf]
        %v1517 = vld [vmem:[%s1280 + $0x288] sm:$0xf]
        %v1518 = vld [vmem:[%s1280 + $0x28c] sm:$0xf]
        %v1519 = vld [vmem:[%s1280 + $0x290] sm:$0xf]
        %v1520 = vld [vmem:[%s1280 + $0x294] sm:$0xf]
        %v1521 = vld [vmem:[%s1280 + $0x298] sm:$0xf]
        %v1522 = vld [vmem:[%s1280 + $0x29c] sm:$0xf]
        %v1523 = vld [vmem:[%s1280 + $0x2a0] sm:$0xf]
        %v1524 = vld [vmem:[%s1280 + $0x2a4] sm:$0xf]
        %v1525 = vld [vmem:[%s1280 + $0x2a8] sm:$0xf]
        %v1526 = vld [vmem:[%s1280 + $0x2ac] sm:$0xf]
        %v1527 = vld [vmem:[%s1280 + $0x2b0] sm:$0xf]
        %v1528 = vld [vmem:[%s1280 + $0x2b4] sm:$0xf]
        %v1529 = vld [vmem:[%s1280 + $0x2b8] sm:$0xf]
        %v1530 = vld [vmem:[%s1280 + $0x2bc] sm:$0xf]
        %v1531 = vld [vmem:[%s1280 + $0x2c0] sm:$0xf]
        %v1532 = vld [vmem:[%s1280 + $0x2c4] sm:$0xf]
        %v1533 = vld [vmem:[%s1280 + $0x2c8] sm:$0xf]
        %v1534 = vld [vmem:[%s1280 + $0x2cc] sm:$0xf]
        %v1535 = vld [vmem:[%s1280 + $0x2d0] sm:$0xf]
        %v1536 = vld [vmem:[%s1280 + $0x2d4] sm:$0xf]
        %v1537 = vld [vmem:[%s1280 + $0x2d8] sm:$0xf]
        %v1538 = vld [vmem:[%s1280 + $0x2dc] sm:$0xf]
        %v1539 = vld [vmem:[%s1280 + $0x2e0] sm:$0xf]
        %v1540 = vld [vmem:[%s1280 + $0x2e4] sm:$0xf]
        %v1541 = vld [vmem:[%s1280 + $0x2e8] sm:$0xf]
        %v1542 = vld [vmem:[%s1280 + $0x2ec] sm:$0xf]
        %v1543 = vld [vmem:[%s1280 + $0x2f0] sm:$0xf]
        %v1544 = vld [vmem:[%s1280 + $0x2f4] sm:$0xf]
        %v1545 = vld [vmem:[%s1280 + $0x2f8] sm:$0xf]
        %v1546 = vld [vmem:[%s1280 + $0x2fc] sm:$0xf]
        %v1547 = vld [vmem:[%s1280 + $0x300] sm:$0xf]
        %v1548 = vld [vmem:[%s1280 + $0x304] sm:$0xf]
        %v1549 = vld [vmem:[%s1280 + $0x308] sm:$0xf]
        %v1550 = vld [vmem:[%s1280 + $0x30c] sm:$0xf]
        %v1551 = vld [vmem:[%s1280 + $0x310] sm:$0xf]
        %v1552 = vld [vmem:[%s1280 + $0x314] sm:$0xf]
        %v1553 = vld [vmem:[%s1280 + $0x318] sm:$0xf]
        %v1554 = vld [vmem:[%s1280 + $0x31c] sm:$0xf]
        %v1555 = vld [vmem:[%s1280 + $0x320] sm:$0xf]
        %v1556 = vld [vmem:[%s1280 + $0x324] sm:$0xf]
        %v1557 = vld [vmem:[%s1280 + $0x328] sm:$0xf]
        %v1558 = vld [vmem:[%s1280 + $0x32c] sm:$0xf]
        %v1559 = vld [vmem:[%s1280 + $0x330] sm:$0xf]
        %v1560 = vld [vmem:[%s1280 + $0x334] sm:$0xf]
        %v1561 = vld [vmem:[%s1280 + $0x338] sm:$0xf]
        %v1562 = vld [vmem:[%s1280 + $0x33c] sm:$0xf]
        %v1563 = vld [vmem:[%s1280 + $0x340] sm:$0xf]
        %v1564 = vld [vmem:[%s1280 + $0x344] sm:$0xf]
        %v1565 = vld [vmem:[%s1280 + $0x348] sm:$0xf]
        %v1566 = vld [vmem:[%s1280 + $0x34c] sm:$0xf]
        %v1567 = vld [vmem:[%s1280 + $0x350] sm:$0xf]
        %v1568 = vld [vmem:[%s1280 + $0x354] sm:$0xf]
        %v1569 = vld [vmem:[%s1280 + $0x358] sm:$0xf]
        %v1570 = vld [vmem:[%s1280 + $0x35c] sm:$0xf]
        %v1571 = vld [vmem:[%s1280 + $0x360] sm:$0xf]
        %v1572 = vld [vmem:[%s1280 + $0x364] sm:$0xf]
        %v1573 = vld [vmem:[%s1280 + $0x368] sm:$0xf]
        %v1574 = vld [vmem:[%s1280 + $0x36c] sm:$0xf]
        %v1575 = vld [vmem:[%s1280 + $0x370] sm:$0xf]
        %v1576 = vld [vmem:[%s1280 + $0x374] sm:$0xf]
        %v1577 = vld [vmem:[%s1280 + $0x378] sm:$0xf]
        %v1578 = vld [vmem:[%s1280 + $0x37c] sm:$0xf]
        %v1579 = vld [vmem:[%s1280 + $0x380] sm:$0xf]
        %v1580 = vld [vmem:[%s1280 + $0x384] sm:$0xf]
        %v1581 = vld [vmem:[%s1280 + $0x388] sm:$0xf]
        %v1582 = vld [vmem:[%s1280 + $0x38c] sm:$0xf]
        %v1583 = vld [vmem:[%s1280 + $0x390] sm:$0xf]
        %v1584 = vld [vmem:[%s1280 + $0x394] sm:$0xf]
        %v1585 = vld [vmem:[%s1280 + $0x398] sm:$0xf]
        %v1586 = vld [vmem:[%s1280 + $0x39c] sm:$0xf]
        %v1587 = vld [vmem:[%s1280 + $0x3a0] sm:$0xf]
        %v1588 = vld [vmem:[%s1280 + $0x3a4] sm:$0xf]
        %v1589 = vld [vmem:[%s1280 + $0x3a8] sm:$0xf]
        %v1590 = vld [vmem:[%s1280 + $0x3ac] sm:$0xf]
        %v1591 = vld [vmem:[%s1280 + $0x3b0] sm:$0xf]
        %v1592 = vld [vmem:[%s1280 + $0x3b4] sm:$0xf]
        %v1593 = vld [vmem:[%s1280 + $0x3b8] sm:$0xf]
        %v1594 = vld [vmem:[%s1280 + $0x3bc] sm:$0xf]
        %v1595 = vld [vmem:[%s1280 + $0x3c0] sm:$0xf]
        %v1596 = vld [vmem:[%s1280 + $0x3c4] sm:$0xf]
        %v1597 = vld [vmem:[%s1280 + $0x3c8] sm:$0xf]
        %v1598 = vld [vmem:[%s1280 + $0x3cc] sm:$0xf]
        %v1599 = vld [vmem:[%s1280 + $0x3d0] sm:$0xf]
        %v1600 = vld [vmem:[%s1280 + $0x3d4] sm:$0xf]
        %v1601 = vld [vmem:[%s1280 + $0x3d8] sm:$0xf]
        %v1602 = vld [vmem:[%s1280 + $0x3dc] sm:$0xf]
        %v1603 = vld [vmem:[%s1280 + $0x3e0] sm:$0xf]
        %v1604 = vld [vmem:[%s1280 + $0x3e4] sm:$0xf]
        %v1605 = vld [vmem:[%s1280 + $0x3e8] sm:$0xf]
        %v1606 = vld [vmem:[%s1280 + $0x3ec] sm:$0xf]
        %v1607 = vld [vmem:[%s1280 + $0x3f0] sm:$0xf]
        %v1608 = vld [vmem:[%s1280 + $0x3f4] sm:$0xf]
        %v1609 = vld [vmem:[%s1280 + $0x3f8] sm:$0xf]
        %v1610 = vld [vmem:[%s1280 + $0x3fc] sm:$0xf]
        %v1611 = vld [vmem:[%s1315] sm:$0x1]
        %v1613 = vlaneseq
        %v1614 = vshrl.u32 %v1613, 7
        %v1615 = vsub.s32 0, %v1614
        %v1616 = vrot.slane %v1611, %v1615
        %v1650 = vunpack.c.l.b16 %v1323
        %v1651 = vunpack.c.h.b16 %v1323
        %v1652 = vunpack.c.l.b16 %v1324
        %v1653 = vunpack.c.h.b16 %v1324
        %v1654 = vunpack.c.l.b16 %v1325
        %v1655 = vunpack.c.h.b16 %v1325
        %v1656 = vunpack.c.l.b16 %v1326
        %v1657 = vunpack.c.h.b16 %v1326
        %v1658 = vunpack.c.l.b16 %v1327
        %v1659 = vunpack.c.h.b16 %v1327
        %v1660 = vunpack.c.l.b16 %v1328
        %v1661 = vunpack.c.h.b16 %v1328
        %v1662 = vunpack.c.l.b16 %v1329
        %v1663 = vunpack.c.h.b16 %v1329
        %v1664 = vunpack.c.l.b16 %v1330
        %v1665 = vunpack.c.h.b16 %v1330
        %v1666 = vunpack.c.l.b16 %v1331
        %v1667 = vunpack.c.h.b16 %v1331
        %v1668 = vunpack.c.l.b16 %v1332
        %v1669 = vunpack.c.h.b16 %v1332
        %v1670 = vunpack.c.l.b16 %v1333
        %v1671 = vunpack.c.h.b16 %v1333
        %v1672 = vunpack.c.l.b16 %v1334
        %v1673 = vunpack.c.h.b16 %v1334
        %v1674 = vunpack.c.l.b16 %v1335
        %v1675 = vunpack.c.h.b16 %v1335
        %v1676 = vunpack.c.l.b16 %v1336
        %v1677 = vunpack.c.h.b16 %v1336
        %v1678 = vunpack.c.l.b16 %v1337
        %v1679 = vunpack.c.h.b16 %v1337
        %v1680 = vunpack.c.l.b16 %v1338
        %v1681 = vunpack.c.h.b16 %v1338
        %v1682 = vunpack.c.l.b16 %v1339
        %v1683 = vunpack.c.h.b16 %v1339
        %v1684 = vunpack.c.l.b16 %v1340
        %v1685 = vunpack.c.h.b16 %v1340
        %v1686 = vunpack.c.l.b16 %v1341
        %v1687 = vunpack.c.h.b16 %v1341
        %v1688 = vunpack.c.l.b16 %v1342
        %v1689 = vunpack.c.h.b16 %v1342
        %v1690 = vunpack.c.l.b16 %v1343
        %v1691 = vunpack.c.h.b16 %v1343
        %v1692 = vunpack.c.l.b16 %v1344
        %v1693 = vunpack.c.h.b16 %v1344
        %v1694 = vunpack.c.l.b16 %v1345
        %v1695 = vunpack.c.h.b16 %v1345
        %v1696 = vunpack.c.l.b16 %v1346
        %v1697 = vunpack.c.h.b16 %v1346
        %v1698 = vunpack.c.l.b16 %v1347
        %v1699 = vunpack.c.h.b16 %v1347
        %v1700 = vunpack.c.l.b16 %v1348
        %v1701 = vunpack.c.h.b16 %v1348
        %v1702 = vunpack.c.l.b16 %v1349
        %v1703 = vunpack.c.h.b16 %v1349
        %v1704 = vunpack.c.l.b16 %v1350
        %v1705 = vunpack.c.h.b16 %v1350
        %v1706 = vunpack.c.l.b16 %v1351
        %v1707 = vunpack.c.h.b16 %v1351
        %v1708 = vunpack.c.l.b16 %v1352
        %v1709 = vunpack.c.h.b16 %v1352
        %v1710 = vunpack.c.l.b16 %v1353
        %v1711 = vunpack.c.h.b16 %v1353
        %v1712 = vunpack.c.l.b16 %v1354
        %v1713 = vunpack.c.h.b16 %v1354
        %v1714 = vpack.c.b16 %v1666, %v1650
        %v1715 = vpack.c.b16 %v1667, %v1651
        %v1716 = vpack.c.b16 %v1668, %v1652
        %v1717 = vpack.c.b16 %v1669, %v1653
        %v1718 = vpack.c.b16 %v1670, %v1654
        %v1719 = vpack.c.b16 %v1671, %v1655
        %v1720 = vpack.c.b16 %v1672, %v1656
        %v1721 = vpack.c.b16 %v1673, %v1657
        %v1722 = vpack.c.b16 %v1674, %v1658
        %v1723 = vpack.c.b16 %v1675, %v1659
        %v1724 = vpack.c.b16 %v1676, %v1660
        %v1725 = vpack.c.b16 %v1677, %v1661
        %v1726 = vpack.c.b16 %v1678, %v1662
        %v1727 = vpack.c.b16 %v1679, %v1663
        %v1728 = vpack.c.b16 %v1680, %v1664
        %v1729 = vpack.c.b16 %v1681, %v1665
        %v1730 = vpack.c.b16 %v1698, %v1682
        %v1731 = vpack.c.b16 %v1699, %v1683
        %v1732 = vpack.c.b16 %v1700, %v1684
        %v1733 = vpack.c.b16 %v1701, %v1685
        %v1734 = vpack.c.b16 %v1702, %v1686
        %v1735 = vpack.c.b16 %v1703, %v1687
        %v1736 = vpack.c.b16 %v1704, %v1688
        %v1737 = vpack.c.b16 %v1705, %v1689
        %v1738 = vpack.c.b16 %v1706, %v1690
        %v1739 = vpack.c.b16 %v1707, %v1691
        %v1740 = vpack.c.b16 %v1708, %v1692
        %v1741 = vpack.c.b16 %v1709, %v1693
        %v1742 = vpack.c.b16 %v1710, %v1694
        %v1743 = vpack.c.b16 %v1711, %v1695
        %v1744 = vpack.c.b16 %v1712, %v1696
        %v1745 = vpack.c.b16 %v1713, %v1697
        %v2034 = vunpack.c.l.b16 %v1355
        %v2035 = vunpack.c.l.b16 %v1356
        %v2036 = vunpack.c.l.b16 %v1357
        %v2037 = vunpack.c.l.b16 %v1358
        %v2038 = vunpack.c.l.b16 %v1359
        %v2039 = vunpack.c.l.b16 %v1360
        %v2040 = vunpack.c.l.b16 %v1361
        %v2041 = vunpack.c.l.b16 %v1362
        %v2042 = vunpack.c.l.b16 %v1363
        %v2043 = vunpack.c.l.b16 %v1364
        %v2044 = vunpack.c.l.b16 %v1365
        %v2045 = vunpack.c.l.b16 %v1366
        %v2046 = vunpack.c.l.b16 %v1367
        %v2047 = vunpack.c.l.b16 %v1368
        %v2048 = vunpack.c.l.b16 %v1369
        %v2049 = vunpack.c.l.b16 %v1370
        %v2050 = vunpack.c.l.b16 %v1371
        %v2051 = vunpack.c.l.b16 %v1372
        %v2052 = vunpack.c.l.b16 %v1373
        %v2053 = vunpack.c.l.b16 %v1374
        %v2054 = vunpack.c.l.b16 %v1375
        %v2055 = vunpack.c.l.b16 %v1376
        %v2056 = vunpack.c.l.b16 %v1377
        %v2057 = vunpack.c.l.b16 %v1378
        %v2058 = vunpack.c.l.b16 %v1379
        %v2059 = vunpack.c.l.b16 %v1380
        %v2060 = vunpack.c.l.b16 %v1381
        %v2061 = vunpack.c.l.b16 %v1382
        %v2062 = vunpack.c.l.b16 %v1383
        %v2063 = vunpack.c.l.b16 %v1384
        %v2064 = vunpack.c.l.b16 %v1385
        %v2065 = vunpack.c.l.b16 %v1386
        %v2066 = vunpack.c.l.b16 %v1387
        %v2067 = vunpack.c.l.b16 %v1388
        %v2068 = vunpack.c.l.b16 %v1389
        %v2069 = vunpack.c.l.b16 %v1390
        %v2070 = vunpack.c.l.b16 %v1391
        %v2071 = vunpack.c.l.b16 %v1392
        %v2072 = vunpack.c.l.b16 %v1393
        %v2073 = vunpack.c.l.b16 %v1394
        %v2074 = vunpack.c.l.b16 %v1395
        %v2075 = vunpack.c.l.b16 %v1396
        %v2076 = vunpack.c.l.b16 %v1397
        %v2077 = vunpack.c.l.b16 %v1398
        %v2078 = vunpack.c.l.b16 %v1399
        %v2079 = vunpack.c.l.b16 %v1400
        %v2080 = vunpack.c.l.b16 %v1401
        %v2081 = vunpack.c.l.b16 %v1402
        %v2082 = vunpack.c.l.b16 %v1403
        %v2083 = vunpack.c.l.b16 %v1404
        %v2084 = vunpack.c.l.b16 %v1405
        %v2085 = vunpack.c.l.b16 %v1406
        %v2086 = vunpack.c.l.b16 %v1407
        %v2087 = vunpack.c.l.b16 %v1408
        %v2088 = vunpack.c.l.b16 %v1409
        %v2089 = vunpack.c.l.b16 %v1410
        %v2090 = vunpack.c.l.b16 %v1411
        %v2091 = vunpack.c.l.b16 %v1412
        %v2092 = vunpack.c.l.b16 %v1413
        %v2093 = vunpack.c.l.b16 %v1414
        %v2094 = vunpack.c.l.b16 %v1415
        %v2095 = vunpack.c.l.b16 %v1416
        %v2096 = vunpack.c.l.b16 %v1417
        %v2097 = vunpack.c.l.b16 %v1418
        %v2098 = vunpack.c.l.b16 %v1419
        %v2099 = vunpack.c.l.b16 %v1420
        %v2100 = vunpack.c.l.b16 %v1421
        %v2101 = vunpack.c.l.b16 %v1422
        %v2102 = vunpack.c.l.b16 %v1423
        %v2103 = vunpack.c.l.b16 %v1424
        %v2104 = vunpack.c.l.b16 %v1425
        %v2105 = vunpack.c.l.b16 %v1426
        %v2106 = vunpack.c.l.b16 %v1427
        %v2107 = vunpack.c.l.b16 %v1428
        %v2108 = vunpack.c.l.b16 %v1429
        %v2109 = vunpack.c.l.b16 %v1430
        %v2110 = vunpack.c.l.b16 %v1431
        %v2111 = vunpack.c.l.b16 %v1432
        %v2112 = vunpack.c.l.b16 %v1433
        %v2113 = vunpack.c.l.b16 %v1434
        %v2114 = vunpack.c.l.b16 %v1435
        %v2115 = vunpack.c.l.b16 %v1436
        %v2116 = vunpack.c.l.b16 %v1437
        %v2117 = vunpack.c.l.b16 %v1438
        %v2118 = vunpack.c.l.b16 %v1439
        %v2119 = vunpack.c.l.b16 %v1440
        %v2120 = vunpack.c.l.b16 %v1441
        %v2121 = vunpack.c.l.b16 %v1442
        %v2122 = vunpack.c.l.b16 %v1443
        %v2123 = vunpack.c.l.b16 %v1444
        %v2124 = vunpack.c.l.b16 %v1445
        %v2125 = vunpack.c.l.b16 %v1446
        %v2126 = vunpack.c.l.b16 %v1447
        %v2127 = vunpack.c.l.b16 %v1448
        %v2128 = vunpack.c.l.b16 %v1449
        %v2129 = vunpack.c.l.b16 %v1450
        %v2130 = vunpack.c.l.b16 %v1451
        %v2131 = vunpack.c.l.b16 %v1452
        %v2132 = vunpack.c.l.b16 %v1453
        %v2133 = vunpack.c.l.b16 %v1454
        %v2134 = vunpack.c.l.b16 %v1455
        %v2135 = vunpack.c.l.b16 %v1456
        %v2136 = vunpack.c.l.b16 %v1457
        %v2137 = vunpack.c.l.b16 %v1458
        %v2138 = vunpack.c.l.b16 %v1459
        %v2139 = vunpack.c.l.b16 %v1460
        %v2140 = vunpack.c.l.b16 %v1461
        %v2141 = vunpack.c.l.b16 %v1462
        %v2142 = vunpack.c.l.b16 %v1463
        %v2143 = vunpack.c.l.b16 %v1464
        %v2144 = vunpack.c.l.b16 %v1465
        %v2145 = vunpack.c.l.b16 %v1466
        %v2146 = vunpack.c.l.b16 %v1467
        %v2147 = vunpack.c.l.b16 %v1468
        %v2148 = vunpack.c.l.b16 %v1469
        %v2149 = vunpack.c.l.b16 %v1470
        %v2150 = vunpack.c.l.b16 %v1471
        %v2151 = vunpack.c.l.b16 %v1472
        %v2152 = vunpack.c.l.b16 %v1473
        %v2153 = vunpack.c.l.b16 %v1474
        %v2154 = vunpack.c.l.b16 %v1475
        %v2155 = vunpack.c.l.b16 %v1476
        %v2156 = vunpack.c.l.b16 %v1477
        %v2157 = vunpack.c.l.b16 %v1478
        %v2158 = vunpack.c.l.b16 %v1479
        %v2159 = vunpack.c.l.b16 %v1480
        %v2160 = vunpack.c.l.b16 %v1481
        %v2161 = vunpack.c.l.b16 %v1482
        %v2162 = vunpack.c.l.b16 %v1483
        %v2163 = vunpack.c.l.b16 %v1484
        %v2164 = vunpack.c.l.b16 %v1485
        %v2165 = vunpack.c.l.b16 %v1486
        %v2166 = vunpack.c.l.b16 %v1487
        %v2167 = vunpack.c.l.b16 %v1488
        %v2168 = vunpack.c.l.b16 %v1489
        %v2169 = vunpack.c.l.b16 %v1490
        %v2170 = vunpack.c.l.b16 %v1491
        %v2171 = vunpack.c.l.b16 %v1492
        %v2172 = vunpack.c.l.b16 %v1493
        %v2173 = vunpack.c.l.b16 %v1494
        %v2174 = vunpack.c.l.b16 %v1495
        %v2175 = vunpack.c.l.b16 %v1496
        %v2176 = vunpack.c.l.b16 %v1497
        %v2177 = vunpack.c.l.b16 %v1498
        %v2178 = vunpack.c.l.b16 %v1499
        %v2179 = vunpack.c.l.b16 %v1500
        %v2180 = vunpack.c.l.b16 %v1501
        %v2181 = vunpack.c.l.b16 %v1502
        %v2182 = vunpack.c.l.b16 %v1503
        %v2183 = vunpack.c.l.b16 %v1504
        %v2184 = vunpack.c.l.b16 %v1505
        %v2185 = vunpack.c.l.b16 %v1506
        %v2186 = vunpack.c.l.b16 %v1507
        %v2187 = vunpack.c.l.b16 %v1508
        %v2188 = vunpack.c.l.b16 %v1509
        %v2189 = vunpack.c.l.b16 %v1510
        %v2190 = vunpack.c.l.b16 %v1511
        %v2191 = vunpack.c.l.b16 %v1512
        %v2192 = vunpack.c.l.b16 %v1513
        %v2193 = vunpack.c.l.b16 %v1514
        %v2194 = vunpack.c.l.b16 %v1515
        %v2195 = vunpack.c.l.b16 %v1516
        %v2196 = vunpack.c.l.b16 %v1517
        %v2197 = vunpack.c.l.b16 %v1518
        %v2198 = vunpack.c.l.b16 %v1519
        %v2199 = vunpack.c.l.b16 %v1520
        %v2200 = vunpack.c.l.b16 %v1521
        %v2201 = vunpack.c.l.b16 %v1522
        %v2202 = vunpack.c.l.b16 %v1523
        %v2203 = vunpack.c.l.b16 %v1524
        %v2204 = vunpack.c.l.b16 %v1525
        %v2205 = vunpack.c.l.b16 %v1526
        %v2206 = vunpack.c.l.b16 %v1527
        %v2207 = vunpack.c.l.b16 %v1528
        %v2208 = vunpack.c.l.b16 %v1529
        %v2209 = vunpack.c.l.b16 %v1530
        %v2210 = vunpack.c.l.b16 %v1531
        %v2211 = vunpack.c.l.b16 %v1532
        %v2212 = vunpack.c.l.b16 %v1533
        %v2213 = vunpack.c.l.b16 %v1534
        %v2214 = vunpack.c.l.b16 %v1535
        %v2215 = vunpack.c.l.b16 %v1536
        %v2216 = vunpack.c.l.b16 %v1537
        %v2217 = vunpack.c.l.b16 %v1538
        %v2218 = vunpack.c.l.b16 %v1539
        %v2219 = vunpack.c.l.b16 %v1540
        %v2220 = vunpack.c.l.b16 %v1541
        %v2221 = vunpack.c.l.b16 %v1542
        %v2222 = vunpack.c.l.b16 %v1543
        %v2223 = vunpack.c.l.b16 %v1544
        %v2224 = vunpack.c.l.b16 %v1545
        %v2225 = vunpack.c.l.b16 %v1546
        %v2226 = vunpack.c.l.b16 %v1547
        %v2227 = vunpack.c.l.b16 %v1548
        %v2228 = vunpack.c.l.b16 %v1549
        %v2229 = vunpack.c.l.b16 %v1550
        %v2230 = vunpack.c.l.b16 %v1551
        %v2231 = vunpack.c.l.b16 %v1552
        %v2232 = vunpack.c.l.b16 %v1553
        %v2233 = vunpack.c.l.b16 %v1554
        %v2234 = vunpack.c.l.b16 %v1555
        %v2235 = vunpack.c.l.b16 %v1556
        %v2236 = vunpack.c.l.b16 %v1557
        %v2237 = vunpack.c.l.b16 %v1558
        %v2238 = vunpack.c.l.b16 %v1559
        %v2239 = vunpack.c.l.b16 %v1560
        %v2240 = vunpack.c.l.b16 %v1561
        %v2241 = vunpack.c.l.b16 %v1562
        %v2242 = vunpack.c.l.b16 %v1563
        %v2243 = vunpack.c.l.b16 %v1564
        %v2244 = vunpack.c.l.b16 %v1565
        %v2245 = vunpack.c.l.b16 %v1566
        %v2246 = vunpack.c.l.b16 %v1567
        %v2247 = vunpack.c.l.b16 %v1568
        %v2248 = vunpack.c.l.b16 %v1569
        %v2249 = vunpack.c.l.b16 %v1570
        %v2250 = vunpack.c.l.b16 %v1571
        %v2251 = vunpack.c.l.b16 %v1572
        %v2252 = vunpack.c.l.b16 %v1573
        %v2253 = vunpack.c.l.b16 %v1574
        %v2254 = vunpack.c.l.b16 %v1575
        %v2255 = vunpack.c.l.b16 %v1576
        %v2256 = vunpack.c.l.b16 %v1577
        %v2257 = vunpack.c.l.b16 %v1578
        %v2258 = vunpack.c.l.b16 %v1579
        %v2259 = vunpack.c.l.b16 %v1580
        %v2260 = vunpack.c.l.b16 %v1581
        %v2261 = vunpack.c.l.b16 %v1582
        %v2262 = vunpack.c.l.b16 %v1583
        %v2263 = vunpack.c.l.b16 %v1584
        %v2264 = vunpack.c.l.b16 %v1585
        %v2265 = vunpack.c.l.b16 %v1586
        %v2266 = vunpack.c.l.b16 %v1587
        %v2267 = vunpack.c.l.b16 %v1588
        %v2268 = vunpack.c.l.b16 %v1589
        %v2269 = vunpack.c.l.b16 %v1590
        %v2270 = vunpack.c.l.b16 %v1591
        %v2271 = vunpack.c.l.b16 %v1592
        %v2272 = vunpack.c.l.b16 %v1593
        %v2273 = vunpack.c.l.b16 %v1594
        %v2274 = vunpack.c.l.b16 %v1595
        %v2275 = vunpack.c.l.b16 %v1596
        %v2276 = vunpack.c.l.b16 %v1597
        %v2277 = vunpack.c.l.b16 %v1598
        %v2278 = vunpack.c.l.b16 %v1599
        %v2279 = vunpack.c.l.b16 %v1600
        %v2280 = vunpack.c.l.b16 %v1601
        %v2281 = vunpack.c.l.b16 %v1602
        %v2282 = vunpack.c.l.b16 %v1603
        %v2283 = vunpack.c.l.b16 %v1604
        %v2284 = vunpack.c.l.b16 %v1605
        %v2285 = vunpack.c.l.b16 %v1606
        %v2286 = vunpack.c.l.b16 %v1607
        %v2287 = vunpack.c.l.b16 %v1608
        %v2288 = vunpack.c.l.b16 %v1609
        %v2289 = vunpack.c.l.b16 %v1610
        %v2290 = vpack.c.b16 %v2035, %v2034
        %v2291 = vpack.c.b16 %v2037, %v2036
        %v2292 = vpack.c.b16 %v2039, %v2038
        %v2293 = vpack.c.b16 %v2041, %v2040
        %v2294 = vpack.c.b16 %v2043, %v2042
        %v2295 = vpack.c.b16 %v2045, %v2044
        %v2296 = vpack.c.b16 %v2047, %v2046
        %v2297 = vpack.c.b16 %v2049, %v2048
        %v2298 = vpack.c.b16 %v2051, %v2050
        %v2299 = vpack.c.b16 %v2053, %v2052
        %v2300 = vpack.c.b16 %v2055, %v2054
        %v2301 = vpack.c.b16 %v2057, %v2056
        %v2302 = vpack.c.b16 %v2059, %v2058
        %v2303 = vpack.c.b16 %v2061, %v2060
        %v2304 = vpack.c.b16 %v2063, %v2062
        %v2305 = vpack.c.b16 %v2065, %v2064
        %v2306 = vpack.c.b16 %v2067, %v2066
        %v2307 = vpack.c.b16 %v2069, %v2068
        %v2308 = vpack.c.b16 %v2071, %v2070
        %v2309 = vpack.c.b16 %v2073, %v2072
        %v2310 = vpack.c.b16 %v2075, %v2074
        %v2311 = vpack.c.b16 %v2077, %v2076
        %v2312 = vpack.c.b16 %v2079, %v2078
        %v2313 = vpack.c.b16 %v2081, %v2080
        %v2314 = vpack.c.b16 %v2083, %v2082
        %v2315 = vpack.c.b16 %v2085, %v2084
        %v2316 = vpack.c.b16 %v2087, %v2086
        %v2317 = vpack.c.b16 %v2089, %v2088
        %v2318 = vpack.c.b16 %v2091, %v2090
        %v2319 = vpack.c.b16 %v2093, %v2092
        %v2320 = vpack.c.b16 %v2095, %v2094
        %v2321 = vpack.c.b16 %v2097, %v2096
        %v2322 = vpack.c.b16 %v2099, %v2098
        %v2323 = vpack.c.b16 %v2101, %v2100
        %v2324 = vpack.c.b16 %v2103, %v2102
        %v2325 = vpack.c.b16 %v2105, %v2104
        %v2326 = vpack.c.b16 %v2107, %v2106
        %v2327 = vpack.c.b16 %v2109, %v2108
        %v2328 = vpack.c.b16 %v2111, %v2110
        %v2329 = vpack.c.b16 %v2113, %v2112
        %v2330 = vpack.c.b16 %v2115, %v2114
        %v2331 = vpack.c.b16 %v2117, %v2116
        %v2332 = vpack.c.b16 %v2119, %v2118
        %v2333 = vpack.c.b16 %v2121, %v2120
        %v2334 = vpack.c.b16 %v2123, %v2122
        %v2335 = vpack.c.b16 %v2125, %v2124
        %v2336 = vpack.c.b16 %v2127, %v2126
        %v2337 = vpack.c.b16 %v2129, %v2128
        %v2338 = vpack.c.b16 %v2131, %v2130
        %v2339 = vpack.c.b16 %v2133, %v2132
        %v2340 = vpack.c.b16 %v2135, %v2134
        %v2341 = vpack.c.b16 %v2137, %v2136
        %v2342 = vpack.c.b16 %v2139, %v2138
        %v2343 = vpack.c.b16 %v2141, %v2140
        %v2344 = vpack.c.b16 %v2143, %v2142
        %v2345 = vpack.c.b16 %v2145, %v2144
        %v2346 = vpack.c.b16 %v2147, %v2146
        %v2347 = vpack.c.b16 %v2149, %v2148
        %v2348 = vpack.c.b16 %v2151, %v2150
        %v2349 = vpack.c.b16 %v2153, %v2152
        %v2350 = vpack.c.b16 %v2155, %v2154
        %v2351 = vpack.c.b16 %v2157, %v2156
        %v2352 = vpack.c.b16 %v2159, %v2158
        %v2353 = vpack.c.b16 %v2161, %v2160
        %v2354 = vpack.c.b16 %v2163, %v2162
        %v2355 = vpack.c.b16 %v2165, %v2164
        %v2356 = vpack.c.b16 %v2167, %v2166
        %v2357 = vpack.c.b16 %v2169, %v2168
        %v2358 = vpack.c.b16 %v2171, %v2170
        %v2359 = vpack.c.b16 %v2173, %v2172
        %v2360 = vpack.c.b16 %v2175, %v2174
        %v2361 = vpack.c.b16 %v2177, %v2176
        %v2362 = vpack.c.b16 %v2179, %v2178
        %v2363 = vpack.c.b16 %v2181, %v2180
        %v2364 = vpack.c.b16 %v2183, %v2182
        %v2365 = vpack.c.b16 %v2185, %v2184
        %v2366 = vpack.c.b16 %v2187, %v2186
        %v2367 = vpack.c.b16 %v2189, %v2188
        %v2368 = vpack.c.b16 %v2191, %v2190
        %v2369 = vpack.c.b16 %v2193, %v2192
        %v2370 = vpack.c.b16 %v2195, %v2194
        %v2371 = vpack.c.b16 %v2197, %v2196
        %v2372 = vpack.c.b16 %v2199, %v2198
        %v2373 = vpack.c.b16 %v2201, %v2200
        %v2374 = vpack.c.b16 %v2203, %v2202
        %v2375 = vpack.c.b16 %v2205, %v2204
        %v2376 = vpack.c.b16 %v2207, %v2206
        %v2377 = vpack.c.b16 %v2209, %v2208
        %v2378 = vpack.c.b16 %v2211, %v2210
        %v2379 = vpack.c.b16 %v2213, %v2212
        %v2380 = vpack.c.b16 %v2215, %v2214
        %v2381 = vpack.c.b16 %v2217, %v2216
        %v2382 = vpack.c.b16 %v2219, %v2218
        %v2383 = vpack.c.b16 %v2221, %v2220
        %v2384 = vpack.c.b16 %v2223, %v2222
        %v2385 = vpack.c.b16 %v2225, %v2224
        %v2386 = vpack.c.b16 %v2227, %v2226
        %v2387 = vpack.c.b16 %v2229, %v2228
        %v2388 = vpack.c.b16 %v2231, %v2230
        %v2389 = vpack.c.b16 %v2233, %v2232
        %v2390 = vpack.c.b16 %v2235, %v2234
        %v2391 = vpack.c.b16 %v2237, %v2236
        %v2392 = vpack.c.b16 %v2239, %v2238
        %v2393 = vpack.c.b16 %v2241, %v2240
        %v2394 = vpack.c.b16 %v2243, %v2242
        %v2395 = vpack.c.b16 %v2245, %v2244
        %v2396 = vpack.c.b16 %v2247, %v2246
        %v2397 = vpack.c.b16 %v2249, %v2248
        %v2398 = vpack.c.b16 %v2251, %v2250
        %v2399 = vpack.c.b16 %v2253, %v2252
        %v2400 = vpack.c.b16 %v2255, %v2254
        %v2401 = vpack.c.b16 %v2257, %v2256
        %v2402 = vpack.c.b16 %v2259, %v2258
        %v2403 = vpack.c.b16 %v2261, %v2260
        %v2404 = vpack.c.b16 %v2263, %v2262
        %v2405 = vpack.c.b16 %v2265, %v2264
        %v2406 = vpack.c.b16 %v2267, %v2266
        %v2407 = vpack.c.b16 %v2269, %v2268
        %v2408 = vpack.c.b16 %v2271, %v2270
        %v2409 = vpack.c.b16 %v2273, %v2272
        %v2410 = vpack.c.b16 %v2275, %v2274
        %v2411 = vpack.c.b16 %v2277, %v2276
        %v2412 = vpack.c.b16 %v2279, %v2278
        %v2413 = vpack.c.b16 %v2281, %v2280
        %v2414 = vpack.c.b16 %v2283, %v2282
        %v2415 = vpack.c.b16 %v2285, %v2284
        %v2416 = vpack.c.b16 %v2287, %v2286
        %v2417 = vpack.c.b16 %v2289, %v2288
        %2546 = vmatprep.subr.bf16.mxu0 0
        %2547 = vmatpush1.bf16.msra.mxu0 %v2290
        %2548 = vmatprep.subr.bf16.mxu0 0
        %2549 = vmatpush1.bf16.msra.mxu0 %v2291
        %2550 = vmatprep.subr.bf16.mxu0 0
        %2551 = vmatpush1.bf16.msra.mxu0 %v2292
        %2552 = vmatprep.subr.bf16.mxu0 0
        %2553 = vmatpush1.bf16.msra.mxu0 %v2293
        %2554 = vmatprep.subr.bf16.mxu0 0
        %2555 = vmatpush1.bf16.msra.mxu0 %v2294
        %2556 = vmatprep.subr.bf16.mxu0 0
        %2557 = vmatpush1.bf16.msra.mxu0 %v2295
        %2558 = vmatprep.subr.bf16.mxu0 0
        %2559 = vmatpush1.bf16.msra.mxu0 %v2296
        %2560 = vmatprep.subr.bf16.mxu0 0
        %2561 = vmatpush1.bf16.msra.mxu0 %v2297
        %2562 = vmatprep.subr.bf16.mxu0 0
        %2563 = vmatpush1.bf16.msra.mxu0 %v2298
        %2564 = vmatprep.subr.bf16.mxu0 0
        %2565 = vmatpush1.bf16.msra.mxu0 %v2299
        %2566 = vmatprep.subr.bf16.mxu0 0
        %2567 = vmatpush1.bf16.msra.mxu0 %v2300
        %2568 = vmatprep.subr.bf16.mxu0 0
        %2569 = vmatpush1.bf16.msra.mxu0 %v2301
        %2570 = vmatprep.subr.bf16.mxu0 0
        %2571 = vmatpush1.bf16.msra.mxu0 %v2302
        %2572 = vmatprep.subr.bf16.mxu0 0
        %2573 = vmatpush1.bf16.msra.mxu0 %v2303
        %2574 = vmatprep.subr.bf16.mxu0 0
        %2575 = vmatpush1.bf16.msra.mxu0 %v2304
        %2576 = vmatprep.subr.bf16.mxu0 0
        %2577 = vmatpush1.bf16.msra.mxu0 %v2305
        %2578 = vmatprep.mubr.bf16.mxu0 %v1715
        %2579 = vmatmul.mubr.bf16.gmra.mrb[0].mxu0 %v1714
        %v2580 = vpop.f32.mrb[0].mxu0
        %v2581 = vadd.f32 %v1616, %v2580
        %v2582 = vpop.f32.mrb[0].mxu0
        %v2583 = vpop.f32.mrb[0].mxu0
        %v2584 = vadd.f32 %v1616, %v2583
        %v2585 = vpop.f32.mrb[0].mxu0
        %2586 = vmatprep.mubr.bf16.mxu0 %v1731
        %2587 = vmatmul.mubr.bf16.gmra.mrb[0].mxu0 %v1730
        %v2588 = vpop.f32.mrb[0].mxu0
        %v2589 = vadd.f32 %v1616, %v2588
        %v2590 = vpop.f32.mrb[0].mxu0
        %v2591 = vpop.f32.mrb[0].mxu0
        %v2592 = vadd.f32 %v1616, %v2591
        %v2593 = vpop.f32.mrb[0].mxu0
        %2594 = vdwg.mxu0
        %2595 = vmatprep.subr.bf16.mxu0 0
        %2596 = vmatpush1.bf16.msra.mxu0 %v2306
        %2597 = vmatprep.subr.bf16.mxu0 0
        %2598 = vmatpush1.bf16.msra.mxu0 %v2307
        %2599 = vmatprep.subr.bf16.mxu0 0
        %2600 = vmatpush1.bf16.msra.mxu0 %v2308
        %2601 = vmatprep.subr.bf16.mxu0 0
        %2602 = vmatpush1.bf16.msra.mxu0 %v2309
        %2603 = vmatprep.subr.bf16.mxu0 0
        %2604 = vmatpush1.bf16.msra.mxu0 %v2310
        %2605 = vmatprep.subr.bf16.mxu0 0
        %2606 = vmatpush1.bf16.msra.mxu0 %v2311
        %2607 = vmatprep.subr.bf16.mxu0 0
        %2608 = vmatpush1.bf16.msra.mxu0 %v2312
        %2609 = vmatprep.subr.bf16.mxu0 0
        %2610 = vmatpush1.bf16.msra.mxu0 %v2313
        %2611 = vmatprep.subr.bf16.mxu0 0
        %2612 = vmatpush1.bf16.msra.mxu0 %v2314
        %2613 = vmatprep.subr.bf16.mxu0 0
        %2614 = vmatpush1.bf16.msra.mxu0 %v2315
        %2615 = vmatprep.subr.bf16.mxu0 0
        %2616 = vmatpush1.bf16.msra.mxu0 %v2316
        %2617 = vmatprep.subr.bf16.mxu0 0
        %2618 = vmatpush1.bf16.msra.mxu0 %v2317
        %2619 = vmatprep.subr.bf16.mxu0 0
        %2620 = vmatpush1.bf16.msra.mxu0 %v2318
        %2621 = vmatprep.subr.bf16.mxu0 0
        %2622 = vmatpush1.bf16.msra.mxu0 %v2319
        %2623 = vmatprep.subr.bf16.mxu0 0
        %2624 = vmatpush1.bf16.msra.mxu0 %v2320
        %2625 = vmatprep.subr.bf16.mxu0 0
        %2626 = vmatpush1.bf16.msra.mxu0 %v2321
        %2627 = vmatprep.mubr.bf16.mxu0 %v1717
        %2628 = vmatmul.mubr.bf16.gmra.mrb[0].mxu0 %v1716
        %v2629 = vpop.f32.mrb[0].mxu0
        %v2630 = vadd.f32 %v2581, %v2629
        %v2631 = vpop.f32.mrb[0].mxu0
        %v2632 = vpop.f32.mrb[0].mxu0
        %v2633 = vadd.f32 %v2584, %v2632
        %v2634 = vpop.f32.mrb[0].mxu0
        %2635 = vmatprep.mubr.bf16.mxu0 %v1733
        %2636 = vmatmul.mubr.bf16.gmra.mrb[0].mxu0 %v1732
        %v2637 = vpop.f32.mrb[0].mxu0
        %v2638 = vadd.f32 %v2589, %v2637
        %v2639 = vpop.f32.mrb[0].mxu0
        %v2640 = vpop.f32.mrb[0].mxu0
        %v2641 = vadd.f32 %v2592, %v2640
        %v2642 = vpop.f32.mrb[0].mxu0
        %2643 = vdwg.mxu0
        %2644 = vmatprep.subr.bf16.mxu0 0
        %2645 = vmatpush1.bf16.msra.mxu0 %v2322
        %2646 = vmatprep.subr.bf16.mxu0 0
        %2647 = vmatpush1.bf16.msra.mxu0 %v2323
        %2648 = vmatprep.subr.bf16.mxu0 0
        %2649 = vmatpush1.bf16.msra.mxu0 %v2324
        %2650 = vmatprep.subr.bf16.mxu0 0
        %2651 = vmatpush1.bf16.msra.mxu0 %v2325
        %2652 = vmatprep.subr.bf16.mxu0 0
        %2653 = vmatpush1.bf16.msra.mxu0 %v2326
        %2654 = vmatprep.subr.bf16.mxu0 0
        %2655 = vmatpush1.bf16.msra.mxu0 %v2327
        %2656 = vmatprep.subr.bf16.mxu0 0
        %2657 = vmatpush1.bf16.msra.mxu0 %v2328
        %2658 = vmatprep.subr.bf16.mxu0 0
        %2659 = vmatpush1.bf16.msra.mxu0 %v2329
        %2660 = vmatprep.subr.bf16.mxu0 0
        %2661 = vmatpush1.bf16.msra.mxu0 %v2330
        %2662 = vmatprep.subr.bf16.mxu0 0
        %2663 = vmatpush1.bf16.msra.mxu0 %v2331
        %2664 = vmatprep.subr.bf16.mxu0 0
        %2665 = vmatpush1.bf16.msra.mxu0 %v2332
        %2666 = vmatprep.subr.bf16.mxu0 0
        %2667 = vmatpush1.bf16.msra.mxu0 %v2333
        %2668 = vmatprep.subr.bf16.mxu0 0
        %2669 = vmatpush1.bf16.msra.mxu0 %v2334
        %2670 = vmatprep.subr.bf16.mxu0 0
        %2671 = vmatpush1.bf16.msra.mxu0 %v2335
        %2672 = vmatprep.subr.bf16.mxu0 0
        %2673 = vmatpush1.bf16.msra.mxu0 %v2336
        %2674 = vmatprep.subr.bf16.mxu0 0
        %2675 = vmatpush1.bf16.msra.mxu0 %v2337
        %2676 = vmatprep.mubr.bf16.mxu0 %v1719
        %2677 = vmatmul.mubr.bf16.gmra.mrb[0].mxu0 %v1718
        %v2678 = vpop.f32.mrb[0].mxu0
        %v2679 = vadd.f32 %v2630, %v2678
        %v2680 = vpop.f32.mrb[0].mxu0
        %v2681 = vpop.f32.mrb[0].mxu0
        %v2682 = vadd.f32 %v2633, %v2681
        %v2683 = vpop.f32.mrb[0].mxu0
        %2684 = vmatprep.mubr.bf16.mxu0 %v1735
        %2685 = vmatmul.mubr.bf16.gmra.mrb[0].mxu0 %v1734
        %v2686 = vpop.f32.mrb[0].mxu0
        %v2687 = vadd.f32 %v2638, %v2686
        %v2688 = vpop.f32.mrb[0].mxu0
        %v2689 = vpop.f32.mrb[0].mxu0
        %v2690 = vadd.f32 %v2641, %v2689
        %v2691 = vpop.f32.mrb[0].mxu0
        %2692 = vdwg.mxu0
        %2693 = vmatprep.subr.bf16.mxu0 0
        %2694 = vmatpush1.bf16.msra.mxu0 %v2338
        %2695 = vmatprep.subr.bf16.mxu0 0
        %2696 = vmatpush1.bf16.msra.mxu0 %v2339
        %2697 = vmatprep.subr.bf16.mxu0 0
        %2698 = vmatpush1.bf16.msra.mxu0 %v2340
        %2699 = vmatprep.subr.bf16.mxu0 0
        %2700 = vmatpush1.bf16.msra.mxu0 %v2341
        %2701 = vmatprep.subr.bf16.mxu0 0
        %2702 = vmatpush1.bf16.msra.mxu0 %v2342
        %2703 = vmatprep.subr.bf16.mxu0 0
        %2704 = vmatpush1.bf16.msra.mxu0 %v2343
        %2705 = vmatprep.subr.bf16.mxu0 0
        %2706 = vmatpush1.bf16.msra.mxu0 %v2344
        %2707 = vmatprep.subr.bf16.mxu0 0
        %2708 = vmatpush1.bf16.msra.mxu0 %v2345
        %2709 = vmatprep.subr.bf16.mxu0 0
        %2710 = vmatpush1.bf16.msra.mxu0 %v2346
        %2711 = vmatprep.subr.bf16.mxu0 0
        %2712 = vmatpush1.bf16.msra.mxu0 %v2347
        %2713 = vmatprep.subr.bf16.mxu0 0
        %2714 = vmatpush1.bf16.msra.mxu0 %v2348
        %2715 = vmatprep.subr.bf16.mxu0 0
        %2716 = vmatpush1.bf16.msra.mxu0 %v2349
        %2717 = vmatprep.subr.bf16.mxu0 0
        %2718 = vmatpush1.bf16.msra.mxu0 %v2350
        %2719 = vmatprep.subr.bf16.mxu0 0
        %2720 = vmatpush1.bf16.msra.mxu0 %v2351
        %2721 = vmatprep.subr.bf16.mxu0 0
        %2722 = vmatpush1.bf16.msra.mxu0 %v2352
        %2723 = vmatprep.subr.bf16.mxu0 0
        %2724 = vmatpush1.bf16.msra.mxu0 %v2353
        %2725 = vmatprep.mubr.bf16.mxu0 %v1721
        %2726 = vmatmul.mubr.bf16.gmra.mrb[0].mxu0 %v1720
        %v2727 = vpop.f32.mrb[0].mxu0
        %v2728 = vadd.f32 %v2679, %v2727
        %v2729 = vpop.f32.mrb[0].mxu0
        %v2730 = vpop.f32.mrb[0].mxu0
        %v2731 = vadd.f32 %v2682, %v2730
        %v2732 = vpop.f32.mrb[0].mxu0
        %2733 = vmatprep.mubr.bf16.mxu0 %v1737
        %2734 = vmatmul.mubr.bf16.gmra.mrb[0].mxu0 %v1736
        %v2735 = vpop.f32.mrb[0].mxu0
        %v2736 = vadd.f32 %v2687, %v2735
        %v2737 = vpop.f32.mrb[0].mxu0
        %v2738 = vpop.f32.mrb[0].mxu0
        %v2739 = vadd.f32 %v2690, %v2738
        %v2740 = vpop.f32.mrb[0].mxu0
        %2741 = vdwg.mxu0
        %2742 = vmatprep.subr.bf16.mxu0 0
        %2743 = vmatpush1.bf16.msra.mxu0 %v2354
        %2744 = vmatprep.subr.bf16.mxu0 0
        %2745 = vmatpush1.bf16.msra.mxu0 %v2355
        %2746 = vmatprep.subr.bf16.mxu0 0
        %2747 = vmatpush1.bf16.msra.mxu0 %v2356
        %2748 = vmatprep.subr.bf16.mxu0 0
        %2749 = vmatpush1.bf16.msra.mxu0 %v2357
        %2750 = vmatprep.subr.bf16.mxu0 0
        %2751 = vmatpush1.bf16.msra.mxu0 %v2358
        %2752 = vmatprep.subr.bf16.mxu0 0
        %2753 = vmatpush1.bf16.msra.mxu0 %v2359
        %2754 = vmatprep.subr.bf16.mxu0 0
        %2755 = vmatpush1.bf16.msra.mxu0 %v2360
        %2756 = vmatprep.subr.bf16.mxu0 0
        %2757 = vmatpush1.bf16.msra.mxu0 %v2361
        %2758 = vmatprep.subr.bf16.mxu0 0
        %2759 = vmatpush1.bf16.msra.mxu0 %v2362
        %2760 = vmatprep.subr.bf16.mxu0 0
        %2761 = vmatpush1.bf16.msra.mxu0 %v2363
        %2762 = vmatprep.subr.bf16.mxu0 0
        %2763 = vmatpush1.bf16.msra.mxu0 %v2364
        %2764 = vmatprep.subr.bf16.mxu0 0
        %2765 = vmatpush1.bf16.msra.mxu0 %v2365
        %2766 = vmatprep.subr.bf16.mxu0 0
        %2767 = vmatpush1.bf16.msra.mxu0 %v2366
        %2768 = vmatprep.subr.bf16.mxu0 0
        %2769 = vmatpush1.bf16.msra.mxu0 %v2367
        %2770 = vmatprep.subr.bf16.mxu0 0
        %2771 = vmatpush1.bf16.msra.mxu0 %v2368
        %2772 = vmatprep.subr.bf16.mxu0 0
        %2773 = vmatpush1.bf16.msra.mxu0 %v2369
        %2774 = vmatprep.mubr.bf16.mxu0 %v1723
        %2775 = vmatmul.mubr.bf16.gmra.mrb[0].mxu0 %v1722
        %v2776 = vpop.f32.mrb[0].mxu0
        %v2777 = vadd.f32 %v2728, %v2776
        %v2778 = vpop.f32.mrb[0].mxu0
        %v2779 = vpop.f32.mrb[0].mxu0
        %v2780 = vadd.f32 %v2731, %v2779
        %v2781 = vpop.f32.mrb[0].mxu0
        %2782 = vmatprep.mubr.bf16.mxu0 %v1739
        %2783 = vmatmul.mubr.bf16.gmra.mrb[0].mxu0 %v1738
        %v2784 = vpop.f32.mrb[0].mxu0
        %v2785 = vadd.f32 %v2736, %v2784
        %v2786 = vpop.f32.mrb[0].mxu0
        %v2787 = vpop.f32.mrb[0].mxu0
        %v2788 = vadd.f32 %v2739, %v2787
        %v2789 = vpop.f32.mrb[0].mxu0
        %2790 = vdwg.mxu0
        %2791 = vmatprep.subr.bf16.mxu0 0
        %2792 = vmatpush1.bf16.msra.mxu0 %v2370
        %2793 = vmatprep.subr.bf16.mxu0 0
        %2794 = vmatpush1.bf16.msra.mxu0 %v2371
        %2795 = vmatprep.subr.bf16.mxu0 0
        %2796 = vmatpush1.bf16.msra.mxu0 %v2372
        %2797 = vmatprep.subr.bf16.mxu0 0
        %2798 = vmatpush1.bf16.msra.mxu0 %v2373
        %2799 = vmatprep.subr.bf16.mxu0 0
        %2800 = vmatpush1.bf16.msra.mxu0 %v2374
        %2801 = vmatprep.subr.bf16.mxu0 0
        %2802 = vmatpush1.bf16.msra.mxu0 %v2375
        %2803 = vmatprep.subr.bf16.mxu0 0
        %2804 = vmatpush1.bf16.msra.mxu0 %v2376
        %2805 = vmatprep.subr.bf16.mxu0 0
        %2806 = vmatpush1.bf16.msra.mxu0 %v2377
        %2807 = vmatprep.subr.bf16.mxu0 0
        %2808 = vmatpush1.bf16.msra.mxu0 %v2378
        %2809 = vmatprep.subr.bf16.mxu0 0
        %2810 = vmatpush1.bf16.msra.mxu0 %v2379
        %2811 = vmatprep.subr.bf16.mxu0 0
        %2812 = vmatpush1.bf16.msra.mxu0 %v2380
        %2813 = vmatprep.subr.bf16.mxu0 0
        %2814 = vmatpush1.bf16.msra.mxu0 %v2381
        %2815 = vmatprep.subr.bf16.mxu0 0
        %2816 = vmatpush1.bf16.msra.mxu0 %v2382
        %2817 = vmatprep.subr.bf16.mxu0 0
        %2818 = vmatpush1.bf16.msra.mxu0 %v2383
        %2819 = vmatprep.subr.bf16.mxu0 0
        %2820 = vmatpush1.bf16.msra.mxu0 %v2384
        %2821 = vmatprep.subr.bf16.mxu0 0
        %2822 = vmatpush1.bf16.msra.mxu0 %v2385
        %2823 = vmatprep.mubr.bf16.mxu0 %v1725
        %2824 = vmatmul.mubr.bf16.gmra.mrb[0].mxu0 %v1724
        %v2825 = vpop.f32.mrb[0].mxu0
        %v2826 = vadd.f32 %v2777, %v2825
        %v2827 = vpop.f32.mrb[0].mxu0
        %v2828 = vpop.f32.mrb[0].mxu0
        %v2829 = vadd.f32 %v2780, %v2828
        %v2830 = vpop.f32.mrb[0].mxu0
        %2831 = vmatprep.mubr.bf16.mxu0 %v1741
        %2832 = vmatmul.mubr.bf16.gmra.mrb[0].mxu0 %v1740
        %v2833 = vpop.f32.mrb[0].mxu0
        %v2834 = vadd.f32 %v2785, %v2833
        %v2835 = vpop.f32.mrb[0].mxu0
        %v2836 = vpop.f32.mrb[0].mxu0
        %v2837 = vadd.f32 %v2788, %v2836
        %v2838 = vpop.f32.mrb[0].mxu0
        %2839 = vdwg.mxu0
        %2840 = vmatprep.subr.bf16.mxu0 0
        %2841 = vmatpush1.bf16.msra.mxu0 %v2386
        %2842 = vmatprep.subr.bf16.mxu0 0
        %2843 = vmatpush1.bf16.msra.mxu0 %v2387
        %2844 = vmatprep.subr.bf16.mxu0 0
        %2845 = vmatpush1.bf16.msra.mxu0 %v2388
        %2846 = vmatprep.subr.bf16.mxu0 0
        %2847 = vmatpush1.bf16.msra.mxu0 %v2389
        %2848 = vmatprep.subr.bf16.mxu0 0
        %2849 = vmatpush1.bf16.msra.mxu0 %v2390
        %2850 = vmatprep.subr.bf16.mxu0 0
        %2851 = vmatpush1.bf16.msra.mxu0 %v2391
        %2852 = vmatprep.subr.bf16.mxu0 0
        %2853 = vmatpush1.bf16.msra.mxu0 %v2392
        %2854 = vmatprep.subr.bf16.mxu0 0
        %2855 = vmatpush1.bf16.msra.mxu0 %v2393
        %2856 = vmatprep.subr.bf16.mxu0 0
        %2857 = vmatpush1.bf16.msra.mxu0 %v2394
        %2858 = vmatprep.subr.bf16.mxu0 0
        %2859 = vmatpush1.bf16.msra.mxu0 %v2395
        %2860 = vmatprep.subr.bf16.mxu0 0
        %2861 = vmatpush1.bf16.msra.mxu0 %v2396
        %2862 = vmatprep.subr.bf16.mxu0 0
        %2863 = vmatpush1.bf16.msra.mxu0 %v2397
        %2864 = vmatprep.subr.bf16.mxu0 0
        %2865 = vmatpush1.bf16.msra.mxu0 %v2398
        %2866 = vmatprep.subr.bf16.mxu0 0
        %2867 = vmatpush1.bf16.msra.mxu0 %v2399
        %2868 = vmatprep.subr.bf16.mxu0 0
        %2869 = vmatpush1.bf16.msra.mxu0 %v2400
        %2870 = vmatprep.subr.bf16.mxu0 0
        %2871 = vmatpush1.bf16.msra.mxu0 %v2401
        %2872 = vmatprep.mubr.bf16.mxu0 %v1727
        %2873 = vmatmul.mubr.bf16.gmra.mrb[0].mxu0 %v1726
        %v2874 = vpop.f32.mrb[0].mxu0
        %v2875 = vadd.f32 %v2826, %v2874
        %v2876 = vpop.f32.mrb[0].mxu0
        %v2877 = vpop.f32.mrb[0].mxu0
        %v2878 = vadd.f32 %v2829, %v2877
        %v2879 = vpop.f32.mrb[0].mxu0
        %2880 = vmatprep.mubr.bf16.mxu0 %v1743
        %2881 = vmatmul.mubr.bf16.gmra.mrb[0].mxu0 %v1742
        %v2882 = vpop.f32.mrb[0].mxu0
        %v2883 = vadd.f32 %v2834, %v2882
        %v2884 = vpop.f32.mrb[0].mxu0
        %v2885 = vpop.f32.mrb[0].mxu0
        %v2886 = vadd.f32 %v2837, %v2885
        %v2887 = vpop.f32.mrb[0].mxu0
        %2888 = vdwg.mxu0
        %2889 = vmatprep.subr.bf16.mxu0 0
        %2890 = vmatpush1.bf16.msra.mxu0 %v2402
        %2891 = vmatprep.subr.bf16.mxu0 0
        %2892 = vmatpush1.bf16.msra.mxu0 %v2403
        %2893 = vmatprep.subr.bf16.mxu0 0
        %2894 = vmatpush1.bf16.msra.mxu0 %v2404
        %2895 = vmatprep.subr.bf16.mxu0 0
        %2896 = vmatpush1.bf16.msra.mxu0 %v2405
        %2897 = vmatprep.subr.bf16.mxu0 0
        %2898 = vmatpush1.bf16.msra.mxu0 %v2406
        %2899 = vmatprep.subr.bf16.mxu0 0
        %2900 = vmatpush1.bf16.msra.mxu0 %v2407
        %2901 = vmatprep.subr.bf16.mxu0 0
        %2902 = vmatpush1.bf16.msra.mxu0 %v2408
        %2903 = vmatprep.subr.bf16.mxu0 0
        %2904 = vmatpush1.bf16.msra.mxu0 %v2409
        %2905 = vmatprep.subr.bf16.mxu0 0
        %2906 = vmatpush1.bf16.msra.mxu0 %v2410
        %2907 = vmatprep.subr.bf16.mxu0 0
        %2908 = vmatpush1.bf16.msra.mxu0 %v2411
        %2909 = vmatprep.subr.bf16.mxu0 0
        %2910 = vmatpush1.bf16.msra.mxu0 %v2412
        %2911 = vmatprep.subr.bf16.mxu0 0
        %2912 = vmatpush1.bf16.msra.mxu0 %v2413
        %2913 = vmatprep.subr.bf16.mxu0 0
        %2914 = vmatpush1.bf16.msra.mxu0 %v2414
        %2915 = vmatprep.subr.bf16.mxu0 0
        %2916 = vmatpush1.bf16.msra.mxu0 %v2415
        %2917 = vmatprep.subr.bf16.mxu0 0
        %2918 = vmatpush1.bf16.msra.mxu0 %v2416
        %2919 = vmatprep.subr.bf16.mxu0 0
        %2920 = vmatpush1.bf16.msra.mxu0 %v2417
        %2921 = vmatprep.mubr.bf16.mxu0 %v1729
        %2922 = vmatmul.mubr.bf16.gmra.mrb[0].mxu0 %v1728
        %v2923 = vpop.f32.mrb[0].mxu0
        %v2924 = vadd.f32 %v2875, %v2923
        %v2925 = vpop.f32.mrb[0].mxu0
        %v2926 = vpop.f32.mrb[0].mxu0
        %v2927 = vadd.f32 %v2878, %v2926
        %v2928 = vpop.f32.mrb[0].mxu0
        %2929 = vmatprep.mubr.bf16.mxu0 %v1745
        %2930 = vmatmul.mubr.bf16.gmra.mrb[0].mxu0 %v1744
        %v2931 = vpop.f32.mrb[0].mxu0
        %v2932 = vadd.f32 %v2883, %v2931
        %v2933 = vpop.f32.mrb[0].mxu0
        %v2934 = vpop.f32.mrb[0].mxu0
        %v2935 = vadd.f32 %v2886, %v2934
        %v2936 = vpop.f32.mrb[0].mxu0
        %2937 = vdwg.mxu0
        %v2938 = vadd.f32 %v2924, %v2927
        %v2939 = vadd.f32 %v2938, %v2932
        %v2940 = vadd.f32 %v2939, %v2935
        %v2941 = vrot.slane %v2940, 4
        %v2942 = vadd.f32 %v2940, %v2941
        %v2943 = vrot.slane %v2942, 2
        %v2944 = vadd.f32 %v2942, %v2943
        %v2945 = vrot.slane %v2944, 1
        %v2946 = vadd.f32 %v2944, %v2945
        %v2947 = vmul.f32 %v2946, 0.03125
        %v2948 = vsub.f32 %v2924, %v2947
        %v2949 = vsub.f32 %v2927, %v2947
        %v2950 = vsub.f32 %v2932, %v2947
        %v2951 = vsub.f32 %v2935, %v2947
        %v2952 = vmul.f32 %v2948, %v2948
        %v2953 = vmul.f32 %v2949, %v2949
        %v2954 = vmul.f32 %v2950, %v2950
        %v2955 = vmul.f32 %v2951, %v2951
        %v2956 = vadd.f32 %v2952, %v2953
        %v2957 = vadd.f32 %v2956, %v2954
        %v2958 = vadd.f32 %v2957, %v2955
        %v2959 = vrot.slane %v2958, 4
        %v2960 = vadd.f32 %v2958, %v2959
        %v2961 = vrot.slane %v2960, 2
        %v2962 = vadd.f32 %v2960, %v2961
        %v2963 = vrot.slane %v2962, 1
        %v2964 = vadd.f32 %v2962, %v2963
        %v2965 = vmul.f32 %v2964, 0.03125
        %v2966 = vld [vmem:[%s1318] sm:$0x1]
        %v2967 = vadd.f32 %v2965, 1e-05
        %v2968 = vrsqrt.pop %v2967
        %v2969 = vmul.f32 %v2966, %v2968
        %v2971 = vlaneseq
        %v2972 = vshrl.u32 %v2971, 7
        %v2973 = vsub.s32 0, %v2972
        %v2974 = vrot.slane %v2969, %v2973
        %v2976 = vmul.f32 %v2948, %v2974
        %v2977 = vmul.f32 %v2949, %v2974
        %v2978 = vmul.f32 %v2950, %v2974
        %v2979 = vmul.f32 %v2951, %v2974
        %v2980 = vld [vmem:[%s1321] sm:$0x1]
        %v2982 = vlaneseq
        %v2983 = vshrl.u32 %v2982, 7
        %v2984 = vsub.s32 0, %v2983
        %v2985 = vrot.slane %v2980, %v2984
        %v2987 = vadd.f32 %v2976, %v2985
        %v2988 = vadd.f32 %v2977, %v2985
        %v2989 = vadd.f32 %v2978, %v2985
        %v2990 = vadd.f32 %v2979, %v2985
        %vm2991 = vcmp.ge.f32.partialorder %v2987, 0.0
        %vm2992 = vcmp.ge.f32.partialorder %v2988, 0.0
        %vm2993 = vcmp.ge.f32.partialorder %v2989, 0.0
        %vm2994 = vcmp.ge.f32.partialorder %v2990, 0.0
        %v2995 = vmul.f32 %v2987, 0.2
        %v2996 = vmul.f32 %v2988, 0.2
        %v2997 = vmul.f32 %v2989, 0.2
        %v2998 = vmul.f32 %v2990, 0.2
        %v2999 = vsel %vm2991, %v2987, %v2995
        %v3000 = vsel %vm2992, %v2988, %v2996
        %v3001 = vsel %vm2993, %v2989, %v2997
        %v3002 = vsel %vm2994, %v2990, %v2998
        %v3003 = vpack.c.bf16 %v3000, %v2999
        %v3004 = vpack.c.bf16 %v3002, %v3001
        %v3007 = vunpack.c.l.b16 %v3003
        %v3008 = vunpack.c.h.b16 %v3003
        %v3009 = vunpack.c.l.b16 %v3004
        %v3010 = vunpack.c.h.b16 %v3004
        %v3011 = vpack.c.b16 %v3007, %v3007
        %v3012 = vpack.c.b16 %v3008, %v3008
        %v3013 = vpack.c.b16 %v3009, %v3009
        %v3014 = vpack.c.b16 %v3010, %v3010
        %3019 = vst [vmem:[%s1312] sm:$0xf] %v3011
        %3020 = vst [vmem:[%s1312 + $0x4] sm:$0xf] %v3012
        %3021 = vst [vmem:[%s1312 + $0x8] sm:$0xf] %v3013
        %3022 = vst [vmem:[%s1312 + $0xc] sm:$0xf] %v3014
        %s3023 = sand.u32 %s149, 1
        %s3024 = sand.u32 %s149, 1
        %s3025 = smul.addr %s3024, 16
        %s3026 = scalar_lea.vmem [#allocation3], %s3025
        // Predicated region
        $region82: #{conditional_discriminator.5} parent=76 // pred_check
          %p3027 = pneg %p159
        $region83: #{conditional_discriminator.5} parent=76 // pred_check_branch
          %3029 = sbr.rel (%p3027) target = $region85
        $region84: #{conditional_discriminator.5} parent=76 // pred_region
          %s3030 = smul.addr %s16, 4
          %s3031 = scalar_lea.vmem %s5, %s3030
          // Predicated region
          $region86: #{conditional_discriminator.5} parent=84 // pred_check
            _
          $region87: #{conditional_discriminator.5} parent=84 // pred_check_branch
            %3033 = sbr.rel (0) target = $region89
          $region88: #{conditional_discriminator.5} parent=84 // pred_region
            // Predicated region
            $region90: #{conditional_discriminator.5} parent=88 // pred_check
              _
            $region91: #{conditional_discriminator.5} parent=88 // pred_check_branch
              %3035 = sbr.rel target = $region93
            $region92: #{conditional_discriminator.5} parent=88 // pred_region
              // Predicated region
              $region105: #{conditional_discriminator.5} parent=92 // pred_check
                _
              $region106: #{conditional_discriminator.5} parent=92 // pred_check_branch
                %3056 = sbr.rel (0) target = $region108
              $region107: #{conditional_discriminator.5} parent=92 // pred_region
                loop: start=0, step=1, limit=1
                $region109: #{conditional_discriminator.5} parent=107 // loop_pre_header
                  _
                $region110: #{conditional_discriminator.5} parent=107 // loop_header
                  %s3058 = sphi 0, %s3062
                  %p3059 = scmp.ge.s32.totalorder %s3058, 1
                  %s3063 = sphi %s3026, %s3026
                  %s3064 = sphi %s3031, %s3031
                $region111: #{conditional_discriminator.5} parent=107 // loop_header_branch
                  %3061 = sbr.rel (%p3059) target = $region115
                $region112: #{conditional_discriminator.5} parent=107 // loop_body
                  _
                $region113: #{conditional_discriminator.5} parent=107 // loop_footer
                  %s3062 = sadd.s32 1, %s3058
                $region114: #{conditional_discriminator.5} parent=107 // loop_footer_branch
                  %3057 = sbr.rel target = $region110
                $region115: #{conditional_discriminator.5} parent=107 // loop_exit
                  _
                loop: start=0, step=1, limit=1
                $region116: #{conditional_discriminator.5} parent=107 // loop_pre_header
                  _
                $region117: #{conditional_discriminator.5} parent=107 // loop_header
                  %s3067 = sphi 0, %s3071
                  %p3068 = scmp.ge.s32.totalorder %s3067, 1
                  %s3072 = sphi %s3026, %s3026
                  %s3073 = sphi %s3031, %s3031
                $region118: #{conditional_discriminator.5} parent=107 // loop_header_branch
                  %3070 = sbr.rel (%p3068) target = $region122
                $region119: #{conditional_discriminator.5} parent=107 // loop_body
                  %v3074 = vld [vmem:[%s3072] sm:$0xf]
                  %3075 = vst [vmem:[%s3073] sm:$0xf] %v3074
                  %v3076 = vld [vmem:[%s3072 + $0x4] sm:$0xf]
                  %3077 = vst [vmem:[%s3073 + $0x8] sm:$0xf] %v3076
                  %v3078 = vld [vmem:[%s3072 + $0x8] sm:$0xf]
                  %3079 = vst [vmem:[%s3073 + $0x10] sm:$0xf] %v3078
                  %v3080 = vld [vmem:[%s3072 + $0xc] sm:$0xf]
                  %3081 = vst [vmem:[%s3073 + $0x18] sm:$0xf] %v3080
                $region120: #{conditional_discriminator.5} parent=107 // loop_footer
                  %s3071 = sadd.s32 1, %s3067
                $region121: #{conditional_discriminator.5} parent=107 // loop_footer_branch
                  %3066 = sbr.rel target = $region117
                $region122: #{conditional_discriminator.5} parent=107 // loop_exit
                  _
              $region108: #{conditional_discriminator.5} parent=92 // pred_fallthru
                _
            $region93: #{conditional_discriminator.5} parent=88 // pred_fallthru
              _
            // Predicated region
            $region94: #{conditional_discriminator.5} parent=88 // pred_check
              _
            $region95: #{conditional_discriminator.5} parent=88 // pred_check_branch
              %3037 = sbr.rel (0) target = $region97
            $region96: #{conditional_discriminator.5} parent=88 // pred_region
              loop: start=0, step=1, limit=1
              $region98: #{conditional_discriminator.5} parent=96 // loop_pre_header
                _
              $region99: #{conditional_discriminator.5} parent=96 // loop_header
                %s3040 = sphi 0, %s3044
                %p3041 = scmp.ge.s32.totalorder %s3040, 1
                %s3045 = sphi %s3026, %s3026
                %s3046 = sphi %s3031, %s3031
              $region100: #{conditional_discriminator.5} parent=96 // loop_header_branch
                %3043 = sbr.rel (%p3041) target = $region104
              $region101: #{conditional_discriminator.5} parent=96 // loop_body
                %v3047 = vld [vmem:[%s3045] sm:$0xf]
                %3048 = vst [vmem:[%s3046] sm:$0xf] %v3047
                %v3049 = vld [vmem:[%s3045 + $0x4] sm:$0xf]
                %3050 = vst [vmem:[%s3046 + $0x8] sm:$0xf] %v3049
                %v3051 = vld [vmem:[%s3045 + $0x8] sm:$0xf]
                %3052 = vst [vmem:[%s3046 + $0x10] sm:$0xf] %v3051
                %v3053 = vld [vmem:[%s3045 + $0xc] sm:$0xf]
                %3054 = vst [vmem:[%s3046 + $0x18] sm:$0xf] %v3053
              $region102: #{conditional_discriminator.5} parent=96 // loop_footer
                %s3044 = sadd.s32 1, %s3040
              $region103: #{conditional_discriminator.5} parent=96 // loop_footer_branch
                %3039 = sbr.rel target = $region99
              $region104: #{conditional_discriminator.5} parent=96 // loop_exit
                _
            $region97: #{conditional_discriminator.5} parent=88 // pred_fallthru
              _
          $region89: #{conditional_discriminator.5} parent=84 // pred_fallthru
            _
          %3082 = vnop
        $region85: #{conditional_discriminator.5} parent=76 // pred_fallthru
          _
      $region77: #{conditional_discriminator.5} parent=5 // pred_fallthru
        _
      %p3083 = scmp.le.s32.totalorder 2, %s11
      // Predicated region
      $region123: #{conditional_discriminator.5} parent=5 // pred_check
        %p3084 = pneg %p3083
      $region124: #{conditional_discriminator.5} parent=5 // pred_check_branch
        %3086 = sbr.rel (%p3084) target = $region126
      $region125: #{conditional_discriminator.5} parent=5 // pred_region
        %s3087 = ssub.s32 %s11, 2
        // Predicated region
        $region127: #{conditional_discriminator.5} parent=125 // pred_check
          %p3088 = pneg %p165
        $region128: #{conditional_discriminator.5} parent=125 // pred_check_branch
          %3090 = sbr.rel (%p3088) target = $region130
        $region129: #{conditional_discriminator.5} parent=125 // pred_region
          %s3091 = sand.u32 %s150, 1
          %s3092 = sand.u32 %s150, 1
          %s3093 = smul.addr %s3092, 16
          %s3094 = scalar_lea.vmem [#allocation3], %s3093
        $region130: #{conditional_discriminator.5} parent=125 // pred_fallthru
          _
      $region126: #{conditional_discriminator.5} parent=5 // pred_fallthru
        _
    $region6: #{conditional_discriminator.5} parent=1 // loop_footer
      %s15 = sadd.s32 1, %s11
    $region7: #{conditional_discriminator.5} parent=1 // loop_footer_branch
      %10 = sbr.rel target = $region3
    $region8: #{conditional_discriminator.5} parent=1 // loop_exit
      _

</llo_original>
